<compile_context>
chip_gen: v7x
topology: tpu7x:2x2x1
jax: 0.10.0
libtpu: 0.0.40
codegen_flags: <defaults>
</compile_context>

<pallas_src>
import jax
import jax.numpy as jnp
from jax.experimental import pallas as pl
from jax.experimental.pallas import tpu as pltpu


_LPAD = 8      # left halo width: keeps the interior stores / aligned taps sublane-aligned
_LANES = 128   # lane-dense output width (logits in lanes [0:K), per-example loss in lane K)


def _build_fused_forward(N, H, W, C0, hidden, K):
    """Builds the single fused pallas_call for the whole forward pass."""
    n_conv = len(hidden)
    chans = [C0] + list(hidden)
    Hs, Ws = [H], [W]
    for _ in range(n_conv - 1):          # MaxPool2d(2) between consecutive conv layers
        Hs.append(Hs[-1] // 2)
        Ws.append(Ws[-1] // 2)
    C_last = chans[-1]

    def kernel(*refs):
        x_ref = refs[0]                              # (N, H, W, C0) image batch
        conv_refs = refs[1:1 + 2 * n_conv]           # w_i (9*cin, cout) bf16, b_i (1, cout) f32
        fcw_ref = refs[1 + 2 * n_conv]               # (C_last, 128) f32 (zero-padded cols >= K)
        fcb_ref = refs[2 + 2 * n_conv]               # (1, 128) f32
        oh_ref = refs[3 + 2 * n_conv]                # (N, 128) f32 one-hot labels
        out_ref = refs[4 + 2 * n_conv]               # (N, 128) f32: logits | per-example loss
        scratch = refs[5 + 2 * n_conv:]
        pads = scratch[:n_conv]                      # per-layer halo scratches (f32)
        pbufs = scratch[n_conv:2 * n_conv]           # per-layer im2col scratches (bf16)

        def zero_halo(pad, h, w, c):
            # Zero only the halo border read by the 3x3 taps; interior is overwritten below.
            wp = w + 2 * _LPAD
            pad[:, 0:1, :, :] = jnp.zeros((N, 1, wp, c), jnp.float32)          # top row
            pad[:, h + 1:h + 2, :, :] = jnp.zeros((N, 1, wp, c), jnp.float32)  # bottom row
            pad[:, 1:1 + h, 0:_LPAD, :] = jnp.zeros((N, h, _LPAD, c), jnp.float32)        # left
            pad[:, 1:1 + h, _LPAD + w:wp, :] = jnp.zeros((N, h, _LPAD, c), jnp.float32)   # right

        # ---- stage 0: place the whole batch into layer 0's halo scratch (one aligned store) --
        zero_halo(pads[0], H, W, C0)
        pads[0][:, 1:1 + H, _LPAD:_LPAD + W, :] = x_ref[...]

        y = None
        for li in range(n_conv):
            h, w = Hs[li], Ws[li]
            cin, cout = chans[li], chans[li + 1]
            w_ref = conv_refs[2 * li]
            b_ref = conv_refs[2 * li + 1]
            pad = pads[li]
            pbuf = pbufs[li]

            # ---- im2col: 9 shifted copies -> (N*h*w, 9*cin) bf16, then ONE MXU matmul ----
            for kh in range(3):
                for kw in range(3):
                    tap = kh * 3 + kw
                    c0 = _LPAD - 1 + kw
                    patch = pad[:, kh:kh + h, c0:c0 + w, :]            # (N, h, w, cin)
                    pbuf[:, tap * cin:(tap + 1) * cin] = (
                        patch.reshape(N * h * w, cin).astype(jnp.bfloat16))

            y = jnp.dot(pbuf[...], w_ref[...],
                        preferred_element_type=jnp.float32) + b_ref[...]
            y = jnp.maximum(y, 0.0)                                    # bias + ReLU, (N*h*w, cout)

            if li < n_conv - 1:
                # ---- fused MaxPool2d(2), fully vectorized, single aligned store ----
                h2, w2 = h // 2, w // 2
                y4 = y.reshape(N * h2, 2, w, cout)                     # leading split (layout no-op)
                rowmax = jnp.maximum(y4[:, 0], y4[:, 1])               # vertical pairs, (N*h2, w, cout)
                rm = rowmax.reshape(N * h2 * w, cout)
                # Horizontal pairs: even/odd column extraction done as 0/1 selection matmuls
                # on the idle MXU (avoids strided sublane slices / per-column masked stores).
                mo, mi = N * h2 * w2, N * h2 * w
                ri = jax.lax.broadcasted_iota(jnp.int32, (mo, mi), 0)
                ci = jax.lax.broadcasted_iota(jnp.int32, (mo, mi), 1)
                s_even = jnp.where(ci == 2 * ri, 1.0, 0.0)
                s_odd = jnp.where(ci == 2 * ri + 1, 1.0, 0.0)
                colmax = jnp.maximum(
                    jnp.dot(s_even, rm, preferred_element_type=jnp.float32),
                    jnp.dot(s_odd, rm, preferred_element_type=jnp.float32))   # (N*h2*w2, cout)
                nxt = pads[li + 1]
                zero_halo(nxt, h2, w2, cout)
                nxt[:, 1:1 + h2, _LPAD:_LPAD + w2, :] = colmax.reshape(N, h2, w2, cout)

        # ---- head: AdaptiveAvgPool2d(1) + Flatten + Linear (lane-padded) + cross-entropy ----
        hw = Hs[-1] * Ws[-1]
        pooled = jnp.sum(y.reshape(N, hw, C_last), axis=1) * (1.0 / float(hw))   # (N, C_last)
        logits = jnp.dot(pooled, fcw_ref[...],
                         preferred_element_type=jnp.float32) + fcb_ref[...]      # (N, 128)
        lg = logits[:, :K]                                                        # real logits
        mx = jnp.max(lg, axis=1, keepdims=True)
        lse = jnp.log(jnp.sum(jnp.exp(lg - mx), axis=1, keepdims=True)) + mx
        tgt = jnp.sum(lg * oh_ref[:, :K], axis=1, keepdims=True)
        loss_pe = lse - tgt                                                       # (N, 1) per-example CE
        col = jax.lax.broadcasted_iota(jnp.int32, (N, _LANES), 1)
        # lanes [0:K) = logits, lane K = per-example loss, lanes > K stay exactly 0.
        out_ref[...] = logits + jnp.where(col == K, loss_pe, 0.0)

    # -------- specs (grid=(1,): batch folded into the matmul M dimension) --------
    index2 = lambda i: (0, 0)
    in_specs = [pl.BlockSpec((N, H, W, C0), lambda i: (0, 0, 0, 0))]
    for li in range(n_conv):
        cin, cout = chans[li], chans[li + 1]
        in_specs.append(pl.BlockSpec((9 * cin, cout), index2))
        in_specs.append(pl.BlockSpec((1, cout), index2))
    in_specs.append(pl.BlockSpec((C_last, _LANES), index2))
    in_specs.append(pl.BlockSpec((1, _LANES), index2))
    in_specs.append(pl.BlockSpec((N, _LANES), index2))

    out_specs = pl.BlockSpec((N, _LANES), index2)
    out_shape = jax.ShapeDtypeStruct((N, _LANES), jnp.float32)

    scratch_shapes = []
    for li in range(n_conv):   # halo scratches
        scratch_shapes.append(
            pltpu.VMEM((N, Hs[li] + 2, Ws[li] + 2 * _LPAD, chans[li]), jnp.float32))
    for li in range(n_conv):   # im2col scratches (bf16 MXU inputs)
        scratch_shapes.append(
            pltpu.VMEM((N * Hs[li] * Ws[li], 9 * chans[li]), jnp.bfloat16))

    grid_spec = pltpu.PrefetchScalarGridSpec(
        num_scalar_prefetch=0,
        grid=(1,),
        in_specs=in_specs,
        out_specs=out_specs,
        scratch_shapes=scratch_shapes)

    return pl.pallas_call(
        kernel,
        grid_spec=grid_spec,
        out_shape=out_shape,
        compiler_params=pltpu.CompilerParams(
            dimension_semantics=("arbitrary",)))


# --------------------------------- module wrapper ---------------------------------------
def _pack_params(params, K):
    conv_packed = []
    for w, b in params["convs"]:
        cout, cin = w.shape[0], w.shape[1]
        # K index of the im2col matmul = (kh*3 + kw)*cin + c  -> (9*cin, cout), bf16.
        wk = jnp.transpose(w, (2, 3, 1, 0)).reshape(9 * cin, cout).astype(jnp.bfloat16)
        conv_packed.extend([wk, b.reshape(1, cout).astype(jnp.float32)])
    c_last = params["convs"][-1][0].shape[0]
    fcw = jnp.zeros((c_last, _LANES), jnp.float32).at[:, :K].set(
        jnp.transpose(params["fc_w"], (1, 0)).astype(jnp.float32))
    fcb = jnp.zeros((1, _LANES), jnp.float32).at[0, :K].set(
        params["fc_b"].astype(jnp.float32))
    return conv_packed, fcw, fcb


def conv_forward(params, img_nchw, label):
    # img_nchw: (N, C, H, W) as PyTorch would supply it.
    N, C0, H, W = img_nchw.shape
    hidden = [w.shape[0] for w, _ in params["convs"]]
    K = params["fc_w"].shape[0]
    assert K < _LANES  # logits + per-example loss are packed into one 128-lane output row

    x = jnp.transpose(img_nchw, (0, 2, 3, 1)).astype(jnp.float32)     # -> NHWC (tiny)
    conv_packed, fcw, fcb = _pack_params(params, K)
    onehot = jax.nn.one_hot(label, _LANES, dtype=jnp.float32)         # CE target selector

    fused = _build_fused_forward(N, H, W, C0, hidden, K)
    out = fused(x, *conv_packed, fcw, fcb, onehot)                    # (N, 128)

    score = out[:, :K]
    loss = jnp.mean(out[:, K])     # reduction=True -> mean CE over the batch
    return {"score": score, "loss": loss}


def init_params(key, data_shape, hidden_size, classes_size):
    # Deterministic init mimicking torch default (uniform +/- 1/sqrt(fan_in)).
    chans = [data_shape[0]] + list(hidden_size)
    keys = jax.random.split(key, 2 * len(hidden_size) + 2)
    convs = []
    for i in range(len(hidden_size)):
        bound = 1.0 / jnp.sqrt(jnp.float32(chans[i] * 9))
        w = jax.random.uniform(keys[2 * i], (chans[i + 1], chans[i], 3, 3),
                               jnp.float32, -bound, bound)
        b = jax.random.uniform(keys[2 * i + 1], (chans[i + 1],),
                               jnp.float32, -bound, bound)
        convs.append((w, b))
    bound = 1.0 / jnp.sqrt(jnp.float32(hidden_size[-1]))
    fc_w = jax.random.uniform(keys[-2], (classes_size, hidden_size[-1]),
                              jnp.float32, -bound, bound)
    fc_b = jax.random.uniform(keys[-1], (classes_size,), jnp.float32, -bound, bound)
    return {"convs": convs, "fc_w": fc_w, "fc_b": fc_b}


# -------------------------------- pure-JAX reference ------------------------------------
def _ref_forward(params, img_nchw, label):
    x = jnp.transpose(img_nchw, (0, 2, 3, 1)).astype(jnp.float32)
    n_layers = len(params["convs"])
    for i, (w, b) in enumerate(params["convs"]):
        N, H, W, _ = x.shape
        Cout = w.shape[0]
        xp = jnp.pad(x, ((0, 0), (1, 1), (1, 1), (0, 0)))
        wk = jnp.transpose(w, (2, 3, 1, 0))                           # (3,3,Cin,Cout)
        y = jnp.zeros((N, H, W, Cout), jnp.float32)
        for kh in range(3):
            for kw in range(3):
                y = y + jnp.einsum("nhwc,cd->nhwd",
                                   xp[:, kh:kh + H, kw:kw + W, :], wk[kh, kw])
        x = jax.nn.relu(y + b)
        if i < n_layers - 1:
            N, H, W, C = x.shape
            x = x.reshape(N, H // 2, 2, W // 2, 2, C).max(axis=(2, 4))
    pooled = x.mean(axis=(1, 2))
    logits = pooled @ params["fc_w"].T + params["fc_b"]
    logp = jax.nn.log_softmax(logits, axis=-1)
    loss = -jnp.mean(logp[jnp.arange(label.shape[0]), label])
    return logits, loss


if __name__ == "__main__":
    data_shape = (3, 16, 16)      # (C, H, W)
    hidden_size = [8, 16]
    classes_size = 10
    N = 2

    key = jax.random.PRNGKey(0)
    k_param, k_img, k_lbl = jax.random.split(key, 3)
    params = init_params(k_param, data_shape, hidden_size, classes_size)
    img = jax.random.normal(k_img, (N,) + data_shape, jnp.float32)     # NCHW like input['img']
    label = jax.random.randint(k_lbl, (N,), 0, classes_size, jnp.int32)

    fwd = jax.jit(conv_forward)
    out = fwd(params, img, label)
    jax.block_until_ready(out)

    ref_score, ref_loss = _ref_forward(params, img, label)
    assert out["score"].shape == (N, classes_size)
    # bf16 conv matmul inputs (f32 accumulation) -> compare against the f32 reference with
    # a tolerance comfortably above the expected ~1e-3 rounding error.
    assert jnp.allclose(out["score"], ref_score, atol=2e-2, rtol=2e-2), "score mismatch"
    assert jnp.allclose(out["loss"], ref_loss, atol=2e-2, rtol=2e-2), "loss mismatch"
    print("KERNEL_OK")
</pallas_src>

<mosaic_0001>
module attributes {stable_mosaic.version = 11 : i64} {
  func.func @kernel(%arg0: i32, %arg1: memref<2x16x16x3xf32, #tpu.memory_space<vmem>>, %arg2: memref<27x8xbf16, #tpu.memory_space<vmem>>, %arg3: memref<1x8xf32, #tpu.memory_space<vmem>>, %arg4: memref<72x16xbf16, #tpu.memory_space<vmem>>, %arg5: memref<1x16xf32, #tpu.memory_space<vmem>>, %arg6: memref<16x128xf32, #tpu.memory_space<vmem>>, %arg7: memref<1x128xf32, #tpu.memory_space<vmem>>, %arg8: memref<2x128xf32, #tpu.memory_space<vmem>>, %arg9: memref<2x128xf32, #tpu.memory_space<vmem>>, %arg10: memref<2x18x32x3xf32, #tpu.memory_space<vmem>>, %arg11: memref<2x10x24x8xf32, #tpu.memory_space<vmem>>, %arg12: memref<512x27xbf16, #tpu.memory_space<vmem>>, %arg13: memref<128x72xbf16, #tpu.memory_space<vmem>>) attributes {dimension_semantics = [#tpu.dimension_semantics<arbitrary>], iteration_bounds = array<i64: 1>, scalar_prefetch = 0 : i64, scratch_operands = 4 : i64, tpu.core_type = #tpu.core_type<tc>, window_params = [{pipeline_mode = #tpu.pipeline_mode<synchronous>, transform_indices = @transform_0, window_bounds = array<i64: 2, 16, 16, 3>}, {pipeline_mode = #tpu.pipeline_mode<synchronous>, transform_indices = @transform_1, window_bounds = array<i64: 27, 8>}, {pipeline_mode = #tpu.pipeline_mode<synchronous>, transform_indices = @transform_2, window_bounds = array<i64: 1, 8>}, {pipeline_mode = #tpu.pipeline_mode<synchronous>, transform_indices = @transform_3, window_bounds = array<i64: 72, 16>}, {pipeline_mode = #tpu.pipeline_mode<synchronous>, transform_indices = @transform_4, window_bounds = array<i64: 1, 16>}, {pipeline_mode = #tpu.pipeline_mode<synchronous>, transform_indices = @transform_5, window_bounds = array<i64: 16, 128>}, {pipeline_mode = #tpu.pipeline_mode<synchronous>, transform_indices = @transform_6, window_bounds = array<i64: 1, 128>}, {pipeline_mode = #tpu.pipeline_mode<synchronous>, transform_indices = @transform_7, window_bounds = array<i64: 2, 128>}, {pipeline_mode = #tpu.pipeline_mode<synchronous>, transform_indices = @transform_8, window_bounds = array<i64: 2, 128>}]} {
    %cst = arith.constant 0.000000e+00 : f32
    %0 = vector.broadcast %cst : f32 to vector<2x1x32x3xf32>
    %c0 = arith.constant 0 : index
    %c0_0 = arith.constant 0 : index
    %c0_1 = arith.constant 0 : index
    %c0_2 = arith.constant 0 : index
    %1 = vector.load %arg10[%c0, %c0_0, %c0_1, %c0_2] : memref<2x18x32x3xf32, #tpu.memory_space<vmem>>, vector<2x1x32x3xf32>
    tpu.vector_store %arg10[%c0, %c0_0, %c0_1, %c0_2], %0 {strides = array<i32>} : memref<2x18x32x3xf32, #tpu.memory_space<vmem>>, vector<2x1x32x3xf32>,
    %cst_3 = arith.constant 0.000000e+00 : f32
    %2 = vector.broadcast %cst_3 : f32 to vector<2x1x32x3xf32>
    %c0_4 = arith.constant 0 : index
    %c17 = arith.constant 17 : index
    %c0_5 = arith.constant 0 : index
    %c0_6 = arith.constant 0 : index
    %3 = vector.load %arg10[%c0_4, %c17, %c0_5, %c0_6] : memref<2x18x32x3xf32, #tpu.memory_space<vmem>>, vector<2x1x32x3xf32>
    tpu.vector_store %arg10[%c0_4, %c17, %c0_5, %c0_6], %2 {strides = array<i32>} : memref<2x18x32x3xf32, #tpu.memory_space<vmem>>, vector<2x1x32x3xf32>,
    %cst_7 = arith.constant 0.000000e+00 : f32
    %4 = vector.broadcast %cst_7 : f32 to vector<2x16x8x3xf32>
    %c0_8 = arith.constant 0 : index
    %c1 = arith.constant 1 : index
    %c0_9 = arith.constant 0 : index
    %c0_10 = arith.constant 0 : index
    %5 = vector.load %arg10[%c0_8, %c1, %c0_9, %c0_10] : memref<2x18x32x3xf32, #tpu.memory_space<vmem>>, vector<2x16x8x3xf32>
    tpu.vector_store %arg10[%c0_8, %c1, %c0_9, %c0_10], %4 {strides = array<i32>} : memref<2x18x32x3xf32, #tpu.memory_space<vmem>>, vector<2x16x8x3xf32>,
    %cst_11 = arith.constant 0.000000e+00 : f32
    %6 = vector.broadcast %cst_11 : f32 to vector<2x16x8x3xf32>
    %c0_12 = arith.constant 0 : index
    %c1_13 = arith.constant 1 : index
    %c24 = arith.constant 24 : index
    %c0_14 = arith.constant 0 : index
    %7 = vector.load %arg10[%c0_12, %c1_13, %c24, %c0_14] : memref<2x18x32x3xf32, #tpu.memory_space<vmem>>, vector<2x16x8x3xf32>
    tpu.vector_store %arg10[%c0_12, %c1_13, %c24, %c0_14], %6 {strides = array<i32>} : memref<2x18x32x3xf32, #tpu.memory_space<vmem>>, vector<2x16x8x3xf32>,
    %c0_15 = arith.constant 0 : index
    %c0_16 = arith.constant 0 : index
    %c0_17 = arith.constant 0 : index
    %c0_18 = arith.constant 0 : index
    %8 = vector.load %arg1[%c0_15, %c0_16, %c0_17, %c0_18] : memref<2x16x16x3xf32, #tpu.memory_space<vmem>>, vector<2x16x16x3xf32>
    %c0_19 = arith.constant 0 : index
    %c1_20 = arith.constant 1 : index
    %c8 = arith.constant 8 : index
    %c0_21 = arith.constant 0 : index
    %9 = vector.load %arg10[%c0_19, %c1_20, %c8, %c0_21] : memref<2x18x32x3xf32, #tpu.memory_space<vmem>>, vector<2x16x16x3xf32>
    tpu.vector_store %arg10[%c0_19, %c1_20, %c8, %c0_21], %8 {strides = array<i32>} : memref<2x18x32x3xf32, #tpu.memory_space<vmem>>, vector<2x16x16x3xf32>,
    %c0_22 = arith.constant 0 : index
    %c0_23 = arith.constant 0 : index
    %c7 = arith.constant 7 : index
    %c0_24 = arith.constant 0 : index
    %10 = vector.load %arg10[%c0_22, %c0_23, %c7, %c0_24] : memref<2x18x32x3xf32, #tpu.memory_space<vmem>>, vector<2x16x16x3xf32>
    %11 = vector.shape_cast %10 : vector<2x16x16x3xf32> to vector<512x3xf32>
    %12 = arith.truncf %11 : vector<512x3xf32> to vector<512x3xbf16>
    %c0_25 = arith.constant 0 : index
    %c0_26 = arith.constant 0 : index
    %13 = vector.load %arg12[%c0_25, %c0_26] : memref<512x27xbf16, #tpu.memory_space<vmem>>, vector<512x3xbf16>
    tpu.vector_store %arg12[%c0_25, %c0_26], %12 {strides = array<i32>} : memref<512x27xbf16, #tpu.memory_space<vmem>>, vector<512x3xbf16>,
    %c0_27 = arith.constant 0 : index
    %c0_28 = arith.constant 0 : index
    %c8_29 = arith.constant 8 : index
    %c0_30 = arith.constant 0 : index
    %14 = vector.load %arg10[%c0_27, %c0_28, %c8_29, %c0_30] : memref<2x18x32x3xf32, #tpu.memory_space<vmem>>, vector<2x16x16x3xf32>
    %15 = vector.shape_cast %14 : vector<2x16x16x3xf32> to vector<512x3xf32>
    %16 = arith.truncf %15 : vector<512x3xf32> to vector<512x3xbf16>
    %c0_31 = arith.constant 0 : index
    %c3 = arith.constant 3 : index
    %17 = vector.load %arg12[%c0_31, %c3] : memref<512x27xbf16, #tpu.memory_space<vmem>>, vector<512x3xbf16>
    tpu.vector_store %arg12[%c0_31, %c3], %16 {strides = array<i32>} : memref<512x27xbf16, #tpu.memory_space<vmem>>, vector<512x3xbf16>,
    %c0_32 = arith.constant 0 : index
    %c0_33 = arith.constant 0 : index
    %c9 = arith.constant 9 : index
    %c0_34 = arith.constant 0 : index
    %18 = vector.load %arg10[%c0_32, %c0_33, %c9, %c0_34] : memref<2x18x32x3xf32, #tpu.memory_space<vmem>>, vector<2x16x16x3xf32>
    %19 = vector.shape_cast %18 : vector<2x16x16x3xf32> to vector<512x3xf32>
    %20 = arith.truncf %19 : vector<512x3xf32> to vector<512x3xbf16>
    %c0_35 = arith.constant 0 : index
    %c6 = arith.constant 6 : index
    %21 = vector.load %arg12[%c0_35, %c6] : memref<512x27xbf16, #tpu.memory_space<vmem>>, vector<512x3xbf16>
    tpu.vector_store %arg12[%c0_35, %c6], %20 {strides = array<i32>} : memref<512x27xbf16, #tpu.memory_space<vmem>>, vector<512x3xbf16>,
    %c0_36 = arith.constant 0 : index
    %c1_37 = arith.constant 1 : index
    %c7_38 = arith.constant 7 : index
    %c0_39 = arith.constant 0 : index
    %22 = vector.load %arg10[%c0_36, %c1_37, %c7_38, %c0_39] : memref<2x18x32x3xf32, #tpu.memory_space<vmem>>, vector<2x16x16x3xf32>
    %23 = vector.shape_cast %22 : vector<2x16x16x3xf32> to vector<512x3xf32>
    %24 = arith.truncf %23 : vector<512x3xf32> to vector<512x3xbf16>
    %c0_40 = arith.constant 0 : index
    %c9_41 = arith.constant 9 : index
    %25 = vector.load %arg12[%c0_40, %c9_41] : memref<512x27xbf16, #tpu.memory_space<vmem>>, vector<512x3xbf16>
    tpu.vector_store %arg12[%c0_40, %c9_41], %24 {strides = array<i32>} : memref<512x27xbf16, #tpu.memory_space<vmem>>, vector<512x3xbf16>,
    %c0_42 = arith.constant 0 : index
    %c1_43 = arith.constant 1 : index
    %c8_44 = arith.constant 8 : index
    %c0_45 = arith.constant 0 : index
    %26 = vector.load %arg10[%c0_42, %c1_43, %c8_44, %c0_45] : memref<2x18x32x3xf32, #tpu.memory_space<vmem>>, vector<2x16x16x3xf32>
    %27 = vector.shape_cast %26 : vector<2x16x16x3xf32> to vector<512x3xf32>
    %28 = arith.truncf %27 : vector<512x3xf32> to vector<512x3xbf16>
    %c0_46 = arith.constant 0 : index
    %c12 = arith.constant 12 : index
    %29 = vector.load %arg12[%c0_46, %c12] : memref<512x27xbf16, #tpu.memory_space<vmem>>, vector<512x3xbf16>
    tpu.vector_store %arg12[%c0_46, %c12], %28 {strides = array<i32>} : memref<512x27xbf16, #tpu.memory_space<vmem>>, vector<512x3xbf16>,
    %c0_47 = arith.constant 0 : index
    %c1_48 = arith.constant 1 : index
    %c9_49 = arith.constant 9 : index
    %c0_50 = arith.constant 0 : index
    %30 = vector.load %arg10[%c0_47, %c1_48, %c9_49, %c0_50] : memref<2x18x32x3xf32, #tpu.memory_space<vmem>>, vector<2x16x16x3xf32>
    %31 = vector.shape_cast %30 : vector<2x16x16x3xf32> to vector<512x3xf32>
    %32 = arith.truncf %31 : vector<512x3xf32> to vector<512x3xbf16>
    %c0_51 = arith.constant 0 : index
    %c15 = arith.constant 15 : index
    %33 = vector.load %arg12[%c0_51, %c15] : memref<512x27xbf16, #tpu.memory_space<vmem>>, vector<512x3xbf16>
    tpu.vector_store %arg12[%c0_51, %c15], %32 {strides = array<i32>} : memref<512x27xbf16, #tpu.memory_space<vmem>>, vector<512x3xbf16>,
    %c0_52 = arith.constant 0 : index
    %c2 = arith.constant 2 : index
    %c7_53 = arith.constant 7 : index
    %c0_54 = arith.constant 0 : index
    %34 = vector.load %arg10[%c0_52, %c2, %c7_53, %c0_54] : memref<2x18x32x3xf32, #tpu.memory_space<vmem>>, vector<2x16x16x3xf32>
    %35 = vector.shape_cast %34 : vector<2x16x16x3xf32> to vector<512x3xf32>
    %36 = arith.truncf %35 : vector<512x3xf32> to vector<512x3xbf16>
    %c0_55 = arith.constant 0 : index
    %c18 = arith.constant 18 : index
    %37 = vector.load %arg12[%c0_55, %c18] : memref<512x27xbf16, #tpu.memory_space<vmem>>, vector<512x3xbf16>
    tpu.vector_store %arg12[%c0_55, %c18], %36 {strides = array<i32>} : memref<512x27xbf16, #tpu.memory_space<vmem>>, vector<512x3xbf16>,
    %c0_56 = arith.constant 0 : index
    %c2_57 = arith.constant 2 : index
    %c8_58 = arith.constant 8 : index
    %c0_59 = arith.constant 0 : index
    %38 = vector.load %arg10[%c0_56, %c2_57, %c8_58, %c0_59] : memref<2x18x32x3xf32, #tpu.memory_space<vmem>>, vector<2x16x16x3xf32>
    %39 = vector.shape_cast %38 : vector<2x16x16x3xf32> to vector<512x3xf32>
    %40 = arith.truncf %39 : vector<512x3xf32> to vector<512x3xbf16>
    %c0_60 = arith.constant 0 : index
    %c21 = arith.constant 21 : index
    %41 = vector.load %arg12[%c0_60, %c21] : memref<512x27xbf16, #tpu.memory_space<vmem>>, vector<512x3xbf16>
    tpu.vector_store %arg12[%c0_60, %c21], %40 {strides = array<i32>} : memref<512x27xbf16, #tpu.memory_space<vmem>>, vector<512x3xbf16>,
    %c0_61 = arith.constant 0 : index
    %c2_62 = arith.constant 2 : index
    %c9_63 = arith.constant 9 : index
    %c0_64 = arith.constant 0 : index
    %42 = vector.load %arg10[%c0_61, %c2_62, %c9_63, %c0_64] : memref<2x18x32x3xf32, #tpu.memory_space<vmem>>, vector<2x16x16x3xf32>
    %43 = vector.shape_cast %42 : vector<2x16x16x3xf32> to vector<512x3xf32>
    %44 = arith.truncf %43 : vector<512x3xf32> to vector<512x3xbf16>
    %c0_65 = arith.constant 0 : index
    %c24_66 = arith.constant 24 : index
    %45 = vector.load %arg12[%c0_65, %c24_66] : memref<512x27xbf16, #tpu.memory_space<vmem>>, vector<512x3xbf16>
    tpu.vector_store %arg12[%c0_65, %c24_66], %44 {strides = array<i32>} : memref<512x27xbf16, #tpu.memory_space<vmem>>, vector<512x3xbf16>,
    %c0_67 = arith.constant 0 : index
    %c0_68 = arith.constant 0 : index
    %46 = vector.load %arg12[%c0_67, %c0_68] : memref<512x27xbf16, #tpu.memory_space<vmem>>, vector<512x27xbf16>
    %c0_69 = arith.constant 0 : index
    %c0_70 = arith.constant 0 : index
    %47 = vector.load %arg2[%c0_69, %c0_70] : memref<27x8xbf16, #tpu.memory_space<vmem>>, vector<27x8xbf16>
    %cst_71 = arith.constant dense<0.000000e+00> : vector<512x8xf32>
    %48 = tpu.matmul %46, %47, %cst_71 {dimension_numbers = #tpu.dot_dimension_numbers<[1], [0], [0], [1], [0, 0, 1, 1], [], []>} : vector<512x27xbf16>, vector<27x8xbf16>, vector<512x8xf32> -> vector<512x8xf32>
    %c0_72 = arith.constant 0 : index
    %c0_73 = arith.constant 0 : index
    %49 = vector.load %arg3[%c0_72, %c0_73] : memref<1x8xf32, #tpu.memory_space<vmem>>, vector<1x8xf32>
    %50 = vector.broadcast %49 : vector<1x8xf32> to vector<512x8xf32>
    %51 = arith.addf %48, %50 : vector<512x8xf32>
    %cst_74 = arith.constant 0.000000e+00 : f32
    %52 = vector.broadcast %cst_74 : f32 to vector<512x8xf32>
    %53 = arith.maximumf %51, %52 : vector<512x8xf32>
    %54 = vector.shape_cast %53 : vector<512x8xf32> to vector<16x2x16x8xf32>
    %55 = vector.extract_strided_slice %54 {offsets = [0, 0, 0, 0], sizes = [16, 1, 16, 8], strides = [1, 1, 1, 1]} : vector<16x2x16x8xf32> to vector<16x1x16x8xf32>
    %56 = vector.shape_cast %55 : vector<16x1x16x8xf32> to vector<16x16x8xf32>
    %57 = vector.extract_strided_slice %54 {offsets = [0, 1, 0, 0], sizes = [16, 1, 16, 8], strides = [1, 1, 1, 1]} : vector<16x2x16x8xf32> to vector<16x1x16x8xf32>
    %58 = vector.shape_cast %57 : vector<16x1x16x8xf32> to vector<16x16x8xf32>
    %59 = arith.maximumf %56, %58 : vector<16x16x8xf32>
    %60 = vector.shape_cast %59 : vector<16x16x8xf32> to vector<256x8xf32>
    %61 = tpu.iota {dimensions = array<i32: 0>} : vector<128x256xi32>
    %62 = tpu.iota {dimensions = array<i32: 1>} : vector<128x256xi32>
    %c2_i32 = arith.constant 2 : i32
    %63 = vector.broadcast %c2_i32 : i32 to vector<128x256xi32>
    %64 = arith.muli %63, %61 : vector<128x256xi32>
    %65 = arith.cmpi eq, %62, %64 : vector<128x256xi32>
    %cst_75 = arith.constant 1.000000e+00 : f32
    %cst_76 = arith.constant 0.000000e+00 : f32
    %66 = vector.broadcast %cst_75 : f32 to vector<128x256xf32>
    %67 = vector.broadcast %cst_76 : f32 to vector<128x256xf32>
    %68 = arith.select %65, %66, %67 : vector<128x256xi1>, vector<128x256xf32>
    %c2_i32_77 = arith.constant 2 : i32
    %69 = vector.broadcast %c2_i32_77 : i32 to vector<128x256xi32>
    %70 = arith.muli %69, %61 : vector<128x256xi32>
    %c1_i32 = arith.constant 1 : i32
    %71 = vector.broadcast %c1_i32 : i32 to vector<128x256xi32>
    %72 = arith.addi %70, %71 : vector<128x256xi32>
    %73 = arith.cmpi eq, %62, %72 : vector<128x256xi32>
    %cst_78 = arith.constant 1.000000e+00 : f32
    %cst_79 = arith.constant 0.000000e+00 : f32
    %74 = vector.broadcast %cst_78 : f32 to vector<128x256xf32>
    %75 = vector.broadcast %cst_79 : f32 to vector<128x256xf32>
    %76 = arith.select %73, %74, %75 : vector<128x256xi1>, vector<128x256xf32>
    %cst_80 = arith.constant dense<0.000000e+00> : vector<128x8xf32>
    %77 = tpu.matmul %68, %60, %cst_80 {dimension_numbers = #tpu.dot_dimension_numbers<[1], [0], [0], [1], [0, 0, 1, 1], [], []>} : vector<128x256xf32>, vector<256x8xf32>, vector<128x8xf32> -> vector<128x8xf32>
    %cst_81 = arith.constant dense<0.000000e+00> : vector<128x8xf32>
    %78 = tpu.matmul %76, %60, %cst_81 {dimension_numbers = #tpu.dot_dimension_numbers<[1], [0], [0], [1], [0, 0, 1, 1], [], []>} : vector<128x256xf32>, vector<256x8xf32>, vector<128x8xf32> -> vector<128x8xf32>
    %79 = arith.maximumf %77, %78 : vector<128x8xf32>
    %cst_82 = arith.constant 0.000000e+00 : f32
    %80 = vector.broadcast %cst_82 : f32 to vector<2x1x24x8xf32>
    %c0_83 = arith.constant 0 : index
    %c0_84 = arith.constant 0 : index
    %c0_85 = arith.constant 0 : index
    %c0_86 = arith.constant 0 : index
    %81 = vector.load %arg11[%c0_83, %c0_84, %c0_85, %c0_86] : memref<2x10x24x8xf32, #tpu.memory_space<vmem>>, vector<2x1x24x8xf32>
    tpu.vector_store %arg11[%c0_83, %c0_84, %c0_85, %c0_86], %80 {strides = array<i32>} : memref<2x10x24x8xf32, #tpu.memory_space<vmem>>, vector<2x1x24x8xf32>,
    %cst_87 = arith.constant 0.000000e+00 : f32
    %82 = vector.broadcast %cst_87 : f32 to vector<2x1x24x8xf32>
    %c0_88 = arith.constant 0 : index
    %c9_89 = arith.constant 9 : index
    %c0_90 = arith.constant 0 : index
    %c0_91 = arith.constant 0 : index
    %83 = vector.load %arg11[%c0_88, %c9_89, %c0_90, %c0_91] : memref<2x10x24x8xf32, #tpu.memory_space<vmem>>, vector<2x1x24x8xf32>
    tpu.vector_store %arg11[%c0_88, %c9_89, %c0_90, %c0_91], %82 {strides = array<i32>} : memref<2x10x24x8xf32, #tpu.memory_space<vmem>>, vector<2x1x24x8xf32>,
    %cst_92 = arith.constant 0.000000e+00 : f32
    %84 = vector.broadcast %cst_92 : f32 to vector<2x8x8x8xf32>
    %c0_93 = arith.constant 0 : index
    %c1_94 = arith.constant 1 : index
    %c0_95 = arith.constant 0 : index
    %c0_96 = arith.constant 0 : index
    %85 = vector.load %arg11[%c0_93, %c1_94, %c0_95, %c0_96] : memref<2x10x24x8xf32, #tpu.memory_space<vmem>>, vector<2x8x8x8xf32>
    tpu.vector_store %arg11[%c0_93, %c1_94, %c0_95, %c0_96], %84 {strides = array<i32>} : memref<2x10x24x8xf32, #tpu.memory_space<vmem>>, vector<2x8x8x8xf32>,
    %cst_97 = arith.constant 0.000000e+00 : f32
    %86 = vector.broadcast %cst_97 : f32 to vector<2x8x8x8xf32>
    %c0_98 = arith.constant 0 : index
    %c1_99 = arith.constant 1 : index
    %c16 = arith.constant 16 : index
    %c0_100 = arith.constant 0 : index
    %87 = vector.load %arg11[%c0_98, %c1_99, %c16, %c0_100] : memref<2x10x24x8xf32, #tpu.memory_space<vmem>>, vector<2x8x8x8xf32>
    tpu.vector_store %arg11[%c0_98, %c1_99, %c16, %c0_100], %86 {strides = array<i32>} : memref<2x10x24x8xf32, #tpu.memory_space<vmem>>, vector<2x8x8x8xf32>,
    %88 = vector.shape_cast %79 : vector<128x8xf32> to vector<2x8x8x8xf32>
    %c0_101 = arith.constant 0 : index
    %c1_102 = arith.constant 1 : index
    %c8_103 = arith.constant 8 : index
    %c0_104 = arith.constant 0 : index
    %89 = vector.load %arg11[%c0_101, %c1_102, %c8_103, %c0_104] : memref<2x10x24x8xf32, #tpu.memory_space<vmem>>, vector<2x8x8x8xf32>
    tpu.vector_store %arg11[%c0_101, %c1_102, %c8_103, %c0_104], %88 {strides = array<i32>} : memref<2x10x24x8xf32, #tpu.memory_space<vmem>>, vector<2x8x8x8xf32>,
    %c0_105 = arith.constant 0 : index
    %c0_106 = arith.constant 0 : index
    %c7_107 = arith.constant 7 : index
    %c0_108 = arith.constant 0 : index
    %90 = vector.load %arg11[%c0_105, %c0_106, %c7_107, %c0_108] : memref<2x10x24x8xf32, #tpu.memory_space<vmem>>, vector<2x8x8x8xf32>
    %91 = vector.shape_cast %90 : vector<2x8x8x8xf32> to vector<128x8xf32>
    %92 = arith.truncf %91 : vector<128x8xf32> to vector<128x8xbf16>
    %c0_109 = arith.constant 0 : index
    %c0_110 = arith.constant 0 : index
    %93 = vector.load %arg13[%c0_109, %c0_110] : memref<128x72xbf16, #tpu.memory_space<vmem>>, vector<128x8xbf16>
    tpu.vector_store %arg13[%c0_109, %c0_110], %92 {strides = array<i32>} : memref<128x72xbf16, #tpu.memory_space<vmem>>, vector<128x8xbf16>,
    %c0_111 = arith.constant 0 : index
    %c0_112 = arith.constant 0 : index
    %c8_113 = arith.constant 8 : index
    %c0_114 = arith.constant 0 : index
    %94 = vector.load %arg11[%c0_111, %c0_112, %c8_113, %c0_114] : memref<2x10x24x8xf32, #tpu.memory_space<vmem>>, vector<2x8x8x8xf32>
    %95 = vector.shape_cast %94 : vector<2x8x8x8xf32> to vector<128x8xf32>
    %96 = arith.truncf %95 : vector<128x8xf32> to vector<128x8xbf16>
    %c0_115 = arith.constant 0 : index
    %c8_116 = arith.constant 8 : index
    %97 = vector.load %arg13[%c0_115, %c8_116] : memref<128x72xbf16, #tpu.memory_space<vmem>>, vector<128x8xbf16>
    tpu.vector_store %arg13[%c0_115, %c8_116], %96 {strides = array<i32>} : memref<128x72xbf16, #tpu.memory_space<vmem>>, vector<128x8xbf16>,
    %c0_117 = arith.constant 0 : index
    %c0_118 = arith.constant 0 : index
    %c9_119 = arith.constant 9 : index
    %c0_120 = arith.constant 0 : index
    %98 = vector.load %arg11[%c0_117, %c0_118, %c9_119, %c0_120] : memref<2x10x24x8xf32, #tpu.memory_space<vmem>>, vector<2x8x8x8xf32>
    %99 = vector.shape_cast %98 : vector<2x8x8x8xf32> to vector<128x8xf32>
    %100 = arith.truncf %99 : vector<128x8xf32> to vector<128x8xbf16>
    %c0_121 = arith.constant 0 : index
    %c16_122 = arith.constant 16 : index
    %101 = vector.load %arg13[%c0_121, %c16_122] : memref<128x72xbf16, #tpu.memory_space<vmem>>, vector<128x8xbf16>
    tpu.vector_store %arg13[%c0_121, %c16_122], %100 {strides = array<i32>} : memref<128x72xbf16, #tpu.memory_space<vmem>>, vector<128x8xbf16>,
    %c0_123 = arith.constant 0 : index
    %c1_124 = arith.constant 1 : index
    %c7_125 = arith.constant 7 : index
    %c0_126 = arith.constant 0 : index
    %102 = vector.load %arg11[%c0_123, %c1_124, %c7_125, %c0_126] : memref<2x10x24x8xf32, #tpu.memory_space<vmem>>, vector<2x8x8x8xf32>
    %103 = vector.shape_cast %102 : vector<2x8x8x8xf32> to vector<128x8xf32>
    %104 = arith.truncf %103 : vector<128x8xf32> to vector<128x8xbf16>
    %c0_127 = arith.constant 0 : index
    %c24_128 = arith.constant 24 : index
    %105 = vector.load %arg13[%c0_127, %c24_128] : memref<128x72xbf16, #tpu.memory_space<vmem>>, vector<128x8xbf16>
    tpu.vector_store %arg13[%c0_127, %c24_128], %104 {strides = array<i32>} : memref<128x72xbf16, #tpu.memory_space<vmem>>, vector<128x8xbf16>,
    %c0_129 = arith.constant 0 : index
    %c1_130 = arith.constant 1 : index
    %c8_131 = arith.constant 8 : index
    %c0_132 = arith.constant 0 : index
    %106 = vector.load %arg11[%c0_129, %c1_130, %c8_131, %c0_132] : memref<2x10x24x8xf32, #tpu.memory_space<vmem>>, vector<2x8x8x8xf32>
    %107 = vector.shape_cast %106 : vector<2x8x8x8xf32> to vector<128x8xf32>
    %108 = arith.truncf %107 : vector<128x8xf32> to vector<128x8xbf16>
    %c0_133 = arith.constant 0 : index
    %c32 = arith.constant 32 : index
    %109 = vector.load %arg13[%c0_133, %c32] : memref<128x72xbf16, #tpu.memory_space<vmem>>, vector<128x8xbf16>
    tpu.vector_store %arg13[%c0_133, %c32], %108 {strides = array<i32>} : memref<128x72xbf16, #tpu.memory_space<vmem>>, vector<128x8xbf16>,
    %c0_134 = arith.constant 0 : index
    %c1_135 = arith.constant 1 : index
    %c9_136 = arith.constant 9 : index
    %c0_137 = arith.constant 0 : index
    %110 = vector.load %arg11[%c0_134, %c1_135, %c9_136, %c0_137] : memref<2x10x24x8xf32, #tpu.memory_space<vmem>>, vector<2x8x8x8xf32>
    %111 = vector.shape_cast %110 : vector<2x8x8x8xf32> to vector<128x8xf32>
    %112 = arith.truncf %111 : vector<128x8xf32> to vector<128x8xbf16>
    %c0_138 = arith.constant 0 : index
    %c40 = arith.constant 40 : index
    %113 = vector.load %arg13[%c0_138, %c40] : memref<128x72xbf16, #tpu.memory_space<vmem>>, vector<128x8xbf16>
    tpu.vector_store %arg13[%c0_138, %c40], %112 {strides = array<i32>} : memref<128x72xbf16, #tpu.memory_space<vmem>>, vector<128x8xbf16>,
    %c0_139 = arith.constant 0 : index
    %c2_140 = arith.constant 2 : index
    %c7_141 = arith.constant 7 : index
    %c0_142 = arith.constant 0 : index
    %114 = vector.load %arg11[%c0_139, %c2_140, %c7_141, %c0_142] : memref<2x10x24x8xf32, #tpu.memory_space<vmem>>, vector<2x8x8x8xf32>
    %115 = vector.shape_cast %114 : vector<2x8x8x8xf32> to vector<128x8xf32>
    %116 = arith.truncf %115 : vector<128x8xf32> to vector<128x8xbf16>
    %c0_143 = arith.constant 0 : index
    %c48 = arith.constant 48 : index
    %117 = vector.load %arg13[%c0_143, %c48] : memref<128x72xbf16, #tpu.memory_space<vmem>>, vector<128x8xbf16>
    tpu.vector_store %arg13[%c0_143, %c48], %116 {strides = array<i32>} : memref<128x72xbf16, #tpu.memory_space<vmem>>, vector<128x8xbf16>,
    %c0_144 = arith.constant 0 : index
    %c2_145 = arith.constant 2 : index
    %c8_146 = arith.constant 8 : index
    %c0_147 = arith.constant 0 : index
    %118 = vector.load %arg11[%c0_144, %c2_145, %c8_146, %c0_147] : memref<2x10x24x8xf32, #tpu.memory_space<vmem>>, vector<2x8x8x8xf32>
    %119 = vector.shape_cast %118 : vector<2x8x8x8xf32> to vector<128x8xf32>
    %120 = arith.truncf %119 : vector<128x8xf32> to vector<128x8xbf16>
    %c0_148 = arith.constant 0 : index
    %c56 = arith.constant 56 : index
    %121 = vector.load %arg13[%c0_148, %c56] : memref<128x72xbf16, #tpu.memory_space<vmem>>, vector<128x8xbf16>
    tpu.vector_store %arg13[%c0_148, %c56], %120 {strides = array<i32>} : memref<128x72xbf16, #tpu.memory_space<vmem>>, vector<128x8xbf16>,
    %c0_149 = arith.constant 0 : index
    %c2_150 = arith.constant 2 : index
    %c9_151 = arith.constant 9 : index
    %c0_152 = arith.constant 0 : index
    %122 = vector.load %arg11[%c0_149, %c2_150, %c9_151, %c0_152] : memref<2x10x24x8xf32, #tpu.memory_space<vmem>>, vector<2x8x8x8xf32>
    %123 = vector.shape_cast %122 : vector<2x8x8x8xf32> to vector<128x8xf32>
    %124 = arith.truncf %123 : vector<128x8xf32> to vector<128x8xbf16>
    %c0_153 = arith.constant 0 : index
    %c64 = arith.constant 64 : index
    %125 = vector.load %arg13[%c0_153, %c64] : memref<128x72xbf16, #tpu.memory_space<vmem>>, vector<128x8xbf16>
    tpu.vector_store %arg13[%c0_153, %c64], %124 {strides = array<i32>} : memref<128x72xbf16, #tpu.memory_space<vmem>>, vector<128x8xbf16>,
    %c0_154 = arith.constant 0 : index
    %c0_155 = arith.constant 0 : index
    %126 = vector.load %arg13[%c0_154, %c0_155] : memref<128x72xbf16, #tpu.memory_space<vmem>>, vector<128x72xbf16>
    %c0_156 = arith.constant 0 : index
    %c0_157 = arith.constant 0 : index
    %127 = vector.load %arg4[%c0_156, %c0_157] : memref<72x16xbf16, #tpu.memory_space<vmem>>, vector<72x16xbf16>
    %cst_158 = arith.constant dense<0.000000e+00> : vector<128x16xf32>
    %128 = tpu.matmul %126, %127, %cst_158 {dimension_numbers = #tpu.dot_dimension_numbers<[1], [0], [0], [1], [0, 0, 1, 1], [], []>} : vector<128x72xbf16>, vector<72x16xbf16>, vector<128x16xf32> -> vector<128x16xf32>
    %c0_159 = arith.constant 0 : index
    %c0_160 = arith.constant 0 : index
    %129 = vector.load %arg5[%c0_159, %c0_160] : memref<1x16xf32, #tpu.memory_space<vmem>>, vector<1x16xf32>
    %130 = vector.broadcast %129 : vector<1x16xf32> to vector<128x16xf32>
    %131 = arith.addf %128, %130 : vector<128x16xf32>
    %cst_161 = arith.constant 0.000000e+00 : f32
    %132 = vector.broadcast %cst_161 : f32 to vector<128x16xf32>
    %133 = arith.maximumf %131, %132 : vector<128x16xf32>
    %134 = vector.shape_cast %133 : vector<128x16xf32> to vector<2x64x16xf32>
    %cst_162 = arith.constant dense<0.000000e+00> : vector<2x16xf32>
    %135 = vector.multi_reduction <add>, %134, %cst_162 [1] : vector<2x64x16xf32> to vector<2x16xf32>
    %cst_163 = arith.constant 1.562500e-02 : f32
    %136 = vector.broadcast %cst_163 : f32 to vector<2x16xf32>
    %137 = arith.mulf %135, %136 : vector<2x16xf32>
    %c0_164 = arith.constant 0 : index
    %c0_165 = arith.constant 0 : index
    %138 = vector.load %arg6[%c0_164, %c0_165] : memref<16x128xf32, #tpu.memory_space<vmem>>, vector<16x128xf32>
    %cst_166 = arith.constant dense<0.000000e+00> : vector<2x128xf32>
    %139 = tpu.matmul %137, %138, %cst_166 {dimension_numbers = #tpu.dot_dimension_numbers<[1], [0], [0], [1], [0, 0, 1, 1], [], []>} : vector<2x16xf32>, vector<16x128xf32>, vector<2x128xf32> -> vector<2x128xf32>
    %c0_167 = arith.constant 0 : index
    %c0_168 = arith.constant 0 : index
    %140 = vector.load %arg7[%c0_167, %c0_168] : memref<1x128xf32, #tpu.memory_space<vmem>>, vector<1x128xf32>
    %141 = vector.broadcast %140 : vector<1x128xf32> to vector<2x128xf32>
    %142 = arith.addf %139, %141 : vector<2x128xf32>
    %143 = vector.extract_strided_slice %142 {offsets = [0, 0], sizes = [2, 10], strides = [1, 1]} : vector<2x128xf32> to vector<2x10xf32>
    %cst_169 = arith.constant dense<0xFF800000> : vector<2xf32>
    %144 = vector.multi_reduction <maximumf>, %143, %cst_169 [1] : vector<2x10xf32> to vector<2xf32>
    %145 = vector.shape_cast %144 : vector<2xf32> to vector<2x1xf32>
    %146 = vector.broadcast %145 : vector<2x1xf32> to vector<2x10xf32>
    %147 = arith.subf %143, %146 : vector<2x10xf32>
    %148 = math.exp %147 : vector<2x10xf32>
    %cst_170 = arith.constant dense<0.000000e+00> : vector<2xf32>
    %149 = vector.multi_reduction <add>, %148, %cst_170 [1] : vector<2x10xf32> to vector<2xf32>
    %150 = vector.shape_cast %149 : vector<2xf32> to vector<2x1xf32>
    %151 = math.log %150 : vector<2x1xf32>
    %152 = arith.addf %151, %145 : vector<2x1xf32>
    %c0_171 = arith.constant 0 : index
    %c0_172 = arith.constant 0 : index
    %153 = vector.load %arg8[%c0_171, %c0_172] : memref<2x128xf32, #tpu.memory_space<vmem>>, vector<2x10xf32>
    %154 = arith.mulf %143, %153 : vector<2x10xf32>
    %cst_173 = arith.constant dense<0.000000e+00> : vector<2xf32>
    %155 = vector.multi_reduction <add>, %154, %cst_173 [1] : vector<2x10xf32> to vector<2xf32>
    %156 = vector.shape_cast %155 : vector<2xf32> to vector<2x1xf32>
    %157 = arith.subf %152, %156 : vector<2x1xf32>
    %158 = tpu.iota {dimensions = array<i32: 1>} : vector<2x128xi32>
    %c10_i32 = arith.constant 10 : i32
    %159 = vector.broadcast %c10_i32 : i32 to vector<2x128xi32>
    %160 = arith.cmpi eq, %158, %159 : vector<2x128xi32>
    %cst_174 = arith.constant 0.000000e+00 : f32
    %161 = vector.shape_cast %157 : vector<2x1xf32> to vector<2x1xf32>
    %162 = vector.broadcast %161 : vector<2x1xf32> to vector<2x128xf32>
    %163 = vector.broadcast %cst_174 : f32 to vector<2x128xf32>
    %164 = arith.select %160, %162, %163 : vector<2x128xi1>, vector<2x128xf32>
    %165 = arith.addf %142, %164 : vector<2x128xf32>
    %c0_175 = arith.constant 0 : index
    %c0_176 = arith.constant 0 : index
    %166 = vector.load %arg9[%c0_175, %c0_176] : memref<2x128xf32, #tpu.memory_space<vmem>>, vector<2x128xf32>
    tpu.vector_store %arg9[%c0_175, %c0_176], %165 {strides = array<i32>} : memref<2x128xf32, #tpu.memory_space<vmem>>, vector<2x128xf32>,
    return
  }
  func.func @transform_0(%arg0: i32) -> (i32, i32, i32, i32) {
    %c0_i32 = arith.constant 0 : i32
    %c0_i32_0 = arith.constant 0 : i32
    %c0_i32_1 = arith.constant 0 : i32
    %c0_i32_2 = arith.constant 0 : i32
    %c0_i32_3 = arith.constant 0 : i32
    return %c0_i32, %c0_i32_0, %c0_i32_1, %c0_i32_2 : i32, i32, i32, i32
  }
  func.func @transform_1(%arg0: i32) -> (i32, i32) {
    %c0_i32 = arith.constant 0 : i32
    %c0_i32_0 = arith.constant 0 : i32
    %c0_i32_1 = arith.constant 0 : i32
    return %c0_i32, %c0_i32_0 : i32, i32
  }
  func.func @transform_2(%arg0: i32) -> (i32, i32) {
    %c0_i32 = arith.constant 0 : i32
    %c0_i32_0 = arith.constant 0 : i32
    %c0_i32_1 = arith.constant 0 : i32
    return %c0_i32, %c0_i32_0 : i32, i32
  }
  func.func @transform_3(%arg0: i32) -> (i32, i32) {
    %c0_i32 = arith.constant 0 : i32
    %c0_i32_0 = arith.constant 0 : i32
    %c0_i32_1 = arith.constant 0 : i32
    return %c0_i32, %c0_i32_0 : i32, i32
  }
  func.func @transform_4(%arg0: i32) -> (i32, i32) {
    %c0_i32 = arith.constant 0 : i32
    %c0_i32_0 = arith.constant 0 : i32
    %c0_i32_1 = arith.constant 0 : i32
    return %c0_i32, %c0_i32_0 : i32, i32
  }
  func.func @transform_5(%arg0: i32) -> (i32, i32) {
    %c0_i32 = arith.constant 0 : i32
    %c0_i32_0 = arith.constant 0 : i32
    %c0_i32_1 = arith.constant 0 : i32
    return %c0_i32, %c0_i32_0 : i32, i32
  }
  func.func @transform_6(%arg0: i32) -> (i32, i32) {
    %c0_i32 = arith.constant 0 : i32
    %c0_i32_0 = arith.constant 0 : i32
    %c0_i32_1 = arith.constant 0 : i32
    return %c0_i32, %c0_i32_0 : i32, i32
  }
  func.func @transform_7(%arg0: i32) -> (i32, i32) {
    %c0_i32 = arith.constant 0 : i32
    %c0_i32_0 = arith.constant 0 : i32
    %c0_i32_1 = arith.constant 0 : i32
    return %c0_i32, %c0_i32_0 : i32, i32
  }
  func.func @transform_8(%arg0: i32) -> (i32, i32) {
    %c0_i32 = arith.constant 0 : i32
    %c0_i32_0 = arith.constant 0 : i32
    %c0_i32_1 = arith.constant 0 : i32
    return %c0_i32, %c0_i32_0 : i32, i32
  }
}

</mosaic_0001>

<llo_original>
// kernel: conv_forward.1
$region0: #{conv_forward.1}
  #allocation0 [shape = 'u32[]', space=smem, size = 0x4, offset = 0x4, fixed_abs, tag = 'smem constant byte address 0x4 - core index']
  #allocation1 [shape = 'u32[144,128]{1,0:T(1,128)}', space=vmem, size = 0x12000, scoped, tag = 'internal scratch']
  #allocation2 [shape = 'f32[2,18,32,3]{3,2,1,0:T(8,128)}', space=vmem, size = 0x90000, scoped, tag = 'scratch operand']
  #allocation3 [shape = 'f32[2,10,24,8]{3,2,1,0:T(8,128)}', space=vmem, size = 0x3c000, scoped, tag = 'scratch operand']
  #allocation4 [shape = 'bf16[512,27]{1,0:T(16,128)(2,1)}', space=vmem, size = 0x20000, scoped, tag = 'scratch operand']
  #allocation5 [shape = 'bf16[128,72]{1,0:T(16,128)(2,1)}', space=vmem, size = 0x8000, scoped, tag = 'scratch operand']
  %s0 = inlined_call_operand.vmem [shape: f32[2,16,16,3], index: 0, kind: input, shape index: {}]
  %s1 = inlined_call_operand.vmem [shape: bf16[27,8], index: 1, kind: input, shape index: {}]
  %s2 = inlined_call_operand.vmem [shape: f32[1,8], index: 2, kind: input, shape index: {}]
  %s3 = inlined_call_operand.vmem [shape: bf16[72,16], index: 3, kind: input, shape index: {}]
  %s4 = inlined_call_operand.vmem [shape: f32[1,16], index: 4, kind: input, shape index: {}]
  %s5 = inlined_call_operand.vmem [shape: f32[16,128], index: 5, kind: input, shape index: {}]
  %s6 = inlined_call_operand.vmem [shape: f32[1,128], index: 6, kind: input, shape index: {}]
  %s7 = inlined_call_operand.vmem [shape: f32[2,128], index: 7, kind: input, shape index: {}]
  %s8 = inlined_call_operand.vmem [shape: f32[2,128], index: 8, kind: output, shape index: {}]
  %s9 = sld [smem:[#allocation0]]
  $region42: #{conv_forward.1} parent=0
    _
  %s11 = ssub.s32 1, %s9
  %s12 = scalar_select 0, %s11, %s9
  // Predicated region
  $region2: #{conv_forward.1} parent=0 // pred_check
    _
  $region3: #{conv_forward.1} parent=0 // pred_check_branch
    %14 = sbr.rel (0) target = $region5
  $region4: #{conv_forward.1} parent=0 // pred_region
    _
  $region5: #{conv_forward.1} parent=0 // pred_fallthru
    _
  // Predicated region
  $region6: #{conv_forward.1} parent=0 // pred_check
    _
  $region7: #{conv_forward.1} parent=0 // pred_check_branch
    %16 = sbr.rel (0) target = $region9
  $region8: #{conv_forward.1} parent=0 // pred_region
    _
  $region9: #{conv_forward.1} parent=0 // pred_fallthru
    _
  // Predicated region
  $region10: #{conv_forward.1} parent=0 // pred_check
    _
  $region11: #{conv_forward.1} parent=0 // pred_check_branch
    %18 = sbr.rel (0) target = $region13
  $region12: #{conv_forward.1} parent=0 // pred_region
    _
  $region13: #{conv_forward.1} parent=0 // pred_fallthru
    _
  // Predicated region
  $region14: #{conv_forward.1} parent=0 // pred_check
    _
  $region15: #{conv_forward.1} parent=0 // pred_check_branch
    %20 = sbr.rel (0) target = $region17
  $region16: #{conv_forward.1} parent=0 // pred_region
    _
  $region17: #{conv_forward.1} parent=0 // pred_fallthru
    _
  // Predicated region
  $region18: #{conv_forward.1} parent=0 // pred_check
    _
  $region19: #{conv_forward.1} parent=0 // pred_check_branch
    %22 = sbr.rel (0) target = $region21
  $region20: #{conv_forward.1} parent=0 // pred_region
    _
  $region21: #{conv_forward.1} parent=0 // pred_fallthru
    _
  // Predicated region
  $region22: #{conv_forward.1} parent=0 // pred_check
    _
  $region23: #{conv_forward.1} parent=0 // pred_check_branch
    %24 = sbr.rel (0) target = $region25
  $region24: #{conv_forward.1} parent=0 // pred_region
    _
  $region25: #{conv_forward.1} parent=0 // pred_fallthru
    _
  // Predicated region
  $region26: #{conv_forward.1} parent=0 // pred_check
    _
  $region27: #{conv_forward.1} parent=0 // pred_check_branch
    %26 = sbr.rel (0) target = $region29
  $region28: #{conv_forward.1} parent=0 // pred_region
    _
  $region29: #{conv_forward.1} parent=0 // pred_fallthru
    _
  // Predicated region
  $region30: #{conv_forward.1} parent=0 // pred_check
    _
  $region31: #{conv_forward.1} parent=0 // pred_check_branch
    %28 = sbr.rel (0) target = $region33
  $region32: #{conv_forward.1} parent=0 // pred_region
    _
  $region33: #{conv_forward.1} parent=0 // pred_fallthru
    _
  %vm30 = vcmask 23552
  %31 = vst.msk [vmem:[#allocation2] sm:$0xff] %vm30, 0.0
  %32 = vst.msk [vmem:[#allocation2 + $0x8] sm:$0xff] %vm30, 0.0
  %33 = vst.msk [vmem:[#allocation2 + $0x10] sm:$0xff] %vm30, 0.0
  %34 = vst.msk [vmem:[#allocation2 + $0x18] sm:$0xff] %vm30, 0.0
  %35 = vst.msk [vmem:[#allocation2 + $0x240] sm:$0xff] %vm30, 0.0
  %36 = vst.msk [vmem:[#allocation2 + $0x248] sm:$0xff] %vm30, 0.0
  %37 = vst.msk [vmem:[#allocation2 + $0x250] sm:$0xff] %vm30, 0.0
  %38 = vst.msk [vmem:[#allocation2 + $0x258] sm:$0xff] %vm30, 0.0
  %s39 = scalar_lea.vmem [#allocation2], 544
  %40 = vst.msk [vmem:[%s39] sm:$0xff] %vm30, 0.0
  %41 = vst.msk [vmem:[%s39 + $0x8] sm:$0xff] %vm30, 0.0
  %42 = vst.msk [vmem:[%s39 + $0x10] sm:$0xff] %vm30, 0.0
  %43 = vst.msk [vmem:[%s39 + $0x18] sm:$0xff] %vm30, 0.0
  %44 = vst.msk [vmem:[%s39 + $0x240] sm:$0xff] %vm30, 0.0
  %45 = vst.msk [vmem:[%s39 + $0x248] sm:$0xff] %vm30, 0.0
  %46 = vst.msk [vmem:[%s39 + $0x250] sm:$0xff] %vm30, 0.0
  %47 = vst.msk [vmem:[%s39 + $0x258] sm:$0xff] %vm30, 0.0
  %s48 = scalar_lea.vmem [#allocation2], 32
  %49 = vst.msk [vmem:[%s48] sm:$0xff] %vm30, 0.0
  %50 = vst.msk [vmem:[%s48 + $0x20] sm:$0xff] %vm30, 0.0
  %51 = vst.msk [vmem:[%s48 + $0x40] sm:$0xff] %vm30, 0.0
  %52 = vst.msk [vmem:[%s48 + $0x60] sm:$0xff] %vm30, 0.0
  %53 = vst.msk [vmem:[%s48 + $0x80] sm:$0xff] %vm30, 0.0
  %54 = vst.msk [vmem:[%s48 + $0xa0] sm:$0xff] %vm30, 0.0
  %55 = vst.msk [vmem:[%s48 + $0xc0] sm:$0xff] %vm30, 0.0
  %56 = vst.msk [vmem:[%s48 + $0xe0] sm:$0xff] %vm30, 0.0
  %57 = vst.msk [vmem:[%s48 + $0x100] sm:$0xff] %vm30, 0.0
  %58 = vst.msk [vmem:[%s48 + $0x120] sm:$0xff] %vm30, 0.0
  %59 = vst.msk [vmem:[%s48 + $0x140] sm:$0xff] %vm30, 0.0
  %60 = vst.msk [vmem:[%s48 + $0x160] sm:$0xff] %vm30, 0.0
  %61 = vst.msk [vmem:[%s48 + $0x180] sm:$0xff] %vm30, 0.0
  %62 = vst.msk [vmem:[%s48 + $0x1a0] sm:$0xff] %vm30, 0.0
  %63 = vst.msk [vmem:[%s48 + $0x1c0] sm:$0xff] %vm30, 0.0
  %64 = vst.msk [vmem:[%s48 + $0x1e0] sm:$0xff] %vm30, 0.0
  %65 = vst.msk [vmem:[%s48 + $0x240] sm:$0xff] %vm30, 0.0
  %66 = vst.msk [vmem:[%s48 + $0x260] sm:$0xff] %vm30, 0.0
  %67 = vst.msk [vmem:[%s48 + $0x280] sm:$0xff] %vm30, 0.0
  %68 = vst.msk [vmem:[%s48 + $0x2a0] sm:$0xff] %vm30, 0.0
  %69 = vst.msk [vmem:[%s48 + $0x2c0] sm:$0xff] %vm30, 0.0
  %70 = vst.msk [vmem:[%s48 + $0x2e0] sm:$0xff] %vm30, 0.0
  %71 = vst.msk [vmem:[%s48 + $0x300] sm:$0xff] %vm30, 0.0
  %72 = vst.msk [vmem:[%s48 + $0x320] sm:$0xff] %vm30, 0.0
  %73 = vst.msk [vmem:[%s48 + $0x340] sm:$0xff] %vm30, 0.0
  %74 = vst.msk [vmem:[%s48 + $0x360] sm:$0xff] %vm30, 0.0
  %75 = vst.msk [vmem:[%s48 + $0x380] sm:$0xff] %vm30, 0.0
  %76 = vst.msk [vmem:[%s48 + $0x3a0] sm:$0xff] %vm30, 0.0
  %77 = vst.msk [vmem:[%s48 + $0x3c0] sm:$0xff] %vm30, 0.0
  %78 = vst.msk [vmem:[%s48 + $0x3e0] sm:$0xff] %vm30, 0.0
  %79 = vst.msk [vmem:[%s48 + $0x400] sm:$0xff] %vm30, 0.0
  %80 = vst.msk [vmem:[%s48 + $0x420] sm:$0xff] %vm30, 0.0
  %81 = vst.msk [vmem:[%s48 + $0x18] sm:$0xff] %vm30, 0.0
  %82 = vst.msk [vmem:[%s48 + $0x38] sm:$0xff] %vm30, 0.0
  %83 = vst.msk [vmem:[%s48 + $0x58] sm:$0xff] %vm30, 0.0
  %84 = vst.msk [vmem:[%s48 + $0x78] sm:$0xff] %vm30, 0.0
  %85 = vst.msk [vmem:[%s48 + $0x98] sm:$0xff] %vm30, 0.0
  %86 = vst.msk [vmem:[%s48 + $0xb8] sm:$0xff] %vm30, 0.0
  %87 = vst.msk [vmem:[%s48 + $0xd8] sm:$0xff] %vm30, 0.0
  %88 = vst.msk [vmem:[%s48 + $0xf8] sm:$0xff] %vm30, 0.0
  %89 = vst.msk [vmem:[%s48 + $0x118] sm:$0xff] %vm30, 0.0
  %90 = vst.msk [vmem:[%s48 + $0x138] sm:$0xff] %vm30, 0.0
  %91 = vst.msk [vmem:[%s48 + $0x158] sm:$0xff] %vm30, 0.0
  %92 = vst.msk [vmem:[%s48 + $0x178] sm:$0xff] %vm30, 0.0
  %93 = vst.msk [vmem:[%s48 + $0x198] sm:$0xff] %vm30, 0.0
  %94 = vst.msk [vmem:[%s48 + $0x1b8] sm:$0xff] %vm30, 0.0
  %95 = vst.msk [vmem:[%s48 + $0x1d8] sm:$0xff] %vm30, 0.0
  %96 = vst.msk [vmem:[%s48 + $0x1f8] sm:$0xff] %vm30, 0.0
  %97 = vst.msk [vmem:[%s48 + $0x258] sm:$0xff] %vm30, 0.0
  %98 = vst.msk [vmem:[%s48 + $0x278] sm:$0xff] %vm30, 0.0
  %99 = vst.msk [vmem:[%s48 + $0x298] sm:$0xff] %vm30, 0.0
  %100 = vst.msk [vmem:[%s48 + $0x2b8] sm:$0xff] %vm30, 0.0
  %101 = vst.msk [vmem:[%s48 + $0x2d8] sm:$0xff] %vm30, 0.0
  %102 = vst.msk [vmem:[%s48 + $0x2f8] sm:$0xff] %vm30, 0.0
  %103 = vst.msk [vmem:[%s48 + $0x318] sm:$0xff] %vm30, 0.0
  %104 = vst.msk [vmem:[%s48 + $0x338] sm:$0xff] %vm30, 0.0
  %105 = vst.msk [vmem:[%s48 + $0x358] sm:$0xff] %vm30, 0.0
  %106 = vst.msk [vmem:[%s48 + $0x378] sm:$0xff] %vm30, 0.0
  %107 = vst.msk [vmem:[%s48 + $0x398] sm:$0xff] %vm30, 0.0
  %108 = vst.msk [vmem:[%s48 + $0x3b8] sm:$0xff] %vm30, 0.0
  %109 = vst.msk [vmem:[%s48 + $0x3d8] sm:$0xff] %vm30, 0.0
  %110 = vst.msk [vmem:[%s48 + $0x3f8] sm:$0xff] %vm30, 0.0
  %111 = vst.msk [vmem:[%s48 + $0x418] sm:$0xff] %vm30, 0.0
  %112 = vst.msk [vmem:[%s48 + $0x438] sm:$0xff] %vm30, 0.0
  %v113 = vld [vmem:[%s0] sm:$0xff]
  %v114 = vld [vmem:[%s0 + $0x8] sm:$0xff]
  %v115 = vld [vmem:[%s0 + $0x10] sm:$0xff]
  %v116 = vld [vmem:[%s0 + $0x18] sm:$0xff]
  %v117 = vld [vmem:[%s0 + $0x20] sm:$0xff]
  %v118 = vld [vmem:[%s0 + $0x28] sm:$0xff]
  %v119 = vld [vmem:[%s0 + $0x30] sm:$0xff]
  %v120 = vld [vmem:[%s0 + $0x38] sm:$0xff]
  %v121 = vld [vmem:[%s0 + $0x40] sm:$0xff]
  %v122 = vld [vmem:[%s0 + $0x48] sm:$0xff]
  %v123 = vld [vmem:[%s0 + $0x50] sm:$0xff]
  %v124 = vld [vmem:[%s0 + $0x58] sm:$0xff]
  %v125 = vld [vmem:[%s0 + $0x60] sm:$0xff]
  %v126 = vld [vmem:[%s0 + $0x68] sm:$0xff]
  %v127 = vld [vmem:[%s0 + $0x70] sm:$0xff]
  %v128 = vld [vmem:[%s0 + $0x78] sm:$0xff]
  %v129 = vld [vmem:[%s0 + $0x80] sm:$0xff]
  %v130 = vld [vmem:[%s0 + $0x88] sm:$0xff]
  %v131 = vld [vmem:[%s0 + $0x90] sm:$0xff]
  %v132 = vld [vmem:[%s0 + $0x98] sm:$0xff]
  %v133 = vld [vmem:[%s0 + $0xa0] sm:$0xff]
  %v134 = vld [vmem:[%s0 + $0xa8] sm:$0xff]
  %v135 = vld [vmem:[%s0 + $0xb0] sm:$0xff]
  %v136 = vld [vmem:[%s0 + $0xb8] sm:$0xff]
  %v137 = vld [vmem:[%s0 + $0xc0] sm:$0xff]
  %v138 = vld [vmem:[%s0 + $0xc8] sm:$0xff]
  %v139 = vld [vmem:[%s0 + $0xd0] sm:$0xff]
  %v140 = vld [vmem:[%s0 + $0xd8] sm:$0xff]
  %v141 = vld [vmem:[%s0 + $0xe0] sm:$0xff]
  %v142 = vld [vmem:[%s0 + $0xe8] sm:$0xff]
  %v143 = vld [vmem:[%s0 + $0xf0] sm:$0xff]
  %v144 = vld [vmem:[%s0 + $0xf8] sm:$0xff]
  %v145 = vld [vmem:[%s0 + $0x100] sm:$0xff]
  %v146 = vld [vmem:[%s0 + $0x108] sm:$0xff]
  %v147 = vld [vmem:[%s0 + $0x110] sm:$0xff]
  %v148 = vld [vmem:[%s0 + $0x118] sm:$0xff]
  %v149 = vld [vmem:[%s0 + $0x120] sm:$0xff]
  %v150 = vld [vmem:[%s0 + $0x128] sm:$0xff]
  %v151 = vld [vmem:[%s0 + $0x130] sm:$0xff]
  %v152 = vld [vmem:[%s0 + $0x138] sm:$0xff]
  %v153 = vld [vmem:[%s0 + $0x140] sm:$0xff]
  %v154 = vld [vmem:[%s0 + $0x148] sm:$0xff]
  %v155 = vld [vmem:[%s0 + $0x150] sm:$0xff]
  %v156 = vld [vmem:[%s0 + $0x158] sm:$0xff]
  %v157 = vld [vmem:[%s0 + $0x160] sm:$0xff]
  %v158 = vld [vmem:[%s0 + $0x168] sm:$0xff]
  %v159 = vld [vmem:[%s0 + $0x170] sm:$0xff]
  %v160 = vld [vmem:[%s0 + $0x178] sm:$0xff]
  %v161 = vld [vmem:[%s0 + $0x180] sm:$0xff]
  %v162 = vld [vmem:[%s0 + $0x188] sm:$0xff]
  %v163 = vld [vmem:[%s0 + $0x190] sm:$0xff]
  %v164 = vld [vmem:[%s0 + $0x198] sm:$0xff]
  %v165 = vld [vmem:[%s0 + $0x1a0] sm:$0xff]
  %v166 = vld [vmem:[%s0 + $0x1a8] sm:$0xff]
  %v167 = vld [vmem:[%s0 + $0x1b0] sm:$0xff]
  %v168 = vld [vmem:[%s0 + $0x1b8] sm:$0xff]
  %v169 = vld [vmem:[%s0 + $0x1c0] sm:$0xff]
  %v170 = vld [vmem:[%s0 + $0x1c8] sm:$0xff]
  %v171 = vld [vmem:[%s0 + $0x1d0] sm:$0xff]
  %v172 = vld [vmem:[%s0 + $0x1d8] sm:$0xff]
  %v173 = vld [vmem:[%s0 + $0x1e0] sm:$0xff]
  %v174 = vld [vmem:[%s0 + $0x1e8] sm:$0xff]
  %v175 = vld [vmem:[%s0 + $0x1f0] sm:$0xff]
  %v176 = vld [vmem:[%s0 + $0x1f8] sm:$0xff]
  %177 = vst.msk [vmem:[%s48 + $0x8] sm:$0xff] %vm30, %v113
  %178 = vst.msk [vmem:[%s48 + $0x10] sm:$0xff] %vm30, %v114
  %179 = vst.msk [vmem:[%s48 + $0x28] sm:$0xff] %vm30, %v115
  %180 = vst.msk [vmem:[%s48 + $0x30] sm:$0xff] %vm30, %v116
  %181 = vst.msk [vmem:[%s48 + $0x48] sm:$0xff] %vm30, %v117
  %182 = vst.msk [vmem:[%s48 + $0x50] sm:$0xff] %vm30, %v118
  %183 = vst.msk [vmem:[%s48 + $0x68] sm:$0xff] %vm30, %v119
  %184 = vst.msk [vmem:[%s48 + $0x70] sm:$0xff] %vm30, %v120
  %185 = vst.msk [vmem:[%s48 + $0x88] sm:$0xff] %vm30, %v121
  %186 = vst.msk [vmem:[%s48 + $0x90] sm:$0xff] %vm30, %v122
  %187 = vst.msk [vmem:[%s48 + $0xa8] sm:$0xff] %vm30, %v123
  %188 = vst.msk [vmem:[%s48 + $0xb0] sm:$0xff] %vm30, %v124
  %189 = vst.msk [vmem:[%s48 + $0xc8] sm:$0xff] %vm30, %v125
  %190 = vst.msk [vmem:[%s48 + $0xd0] sm:$0xff] %vm30, %v126
  %191 = vst.msk [vmem:[%s48 + $0xe8] sm:$0xff] %vm30, %v127
  %192 = vst.msk [vmem:[%s48 + $0xf0] sm:$0xff] %vm30, %v128
  %193 = vst.msk [vmem:[%s48 + $0x108] sm:$0xff] %vm30, %v129
  %194 = vst.msk [vmem:[%s48 + $0x110] sm:$0xff] %vm30, %v130
  %195 = vst.msk [vmem:[%s48 + $0x128] sm:$0xff] %vm30, %v131
  %196 = vst.msk [vmem:[%s48 + $0x130] sm:$0xff] %vm30, %v132
  %197 = vst.msk [vmem:[%s48 + $0x148] sm:$0xff] %vm30, %v133
  %198 = vst.msk [vmem:[%s48 + $0x150] sm:$0xff] %vm30, %v134
  %199 = vst.msk [vmem:[%s48 + $0x168] sm:$0xff] %vm30, %v135
  %200 = vst.msk [vmem:[%s48 + $0x170] sm:$0xff] %vm30, %v136
  %201 = vst.msk [vmem:[%s48 + $0x188] sm:$0xff] %vm30, %v137
  %202 = vst.msk [vmem:[%s48 + $0x190] sm:$0xff] %vm30, %v138
  %203 = vst.msk [vmem:[%s48 + $0x1a8] sm:$0xff] %vm30, %v139
  %204 = vst.msk [vmem:[%s48 + $0x1b0] sm:$0xff] %vm30, %v140
  %205 = vst.msk [vmem:[%s48 + $0x1c8] sm:$0xff] %vm30, %v141
  %206 = vst.msk [vmem:[%s48 + $0x1d0] sm:$0xff] %vm30, %v142
  %207 = vst.msk [vmem:[%s48 + $0x1e8] sm:$0xff] %vm30, %v143
  %208 = vst.msk [vmem:[%s48 + $0x1f0] sm:$0xff] %vm30, %v144
  %209 = vst.msk [vmem:[%s48 + $0x248] sm:$0xff] %vm30, %v145
  %210 = vst.msk [vmem:[%s48 + $0x250] sm:$0xff] %vm30, %v146
  %211 = vst.msk [vmem:[%s48 + $0x268] sm:$0xff] %vm30, %v147
  %212 = vst.msk [vmem:[%s48 + $0x270] sm:$0xff] %vm30, %v148
  %213 = vst.msk [vmem:[%s48 + $0x288] sm:$0xff] %vm30, %v149
  %214 = vst.msk [vmem:[%s48 + $0x290] sm:$0xff] %vm30, %v150
  %215 = vst.msk [vmem:[%s48 + $0x2a8] sm:$0xff] %vm30, %v151
  %216 = vst.msk [vmem:[%s48 + $0x2b0] sm:$0xff] %vm30, %v152
  %217 = vst.msk [vmem:[%s48 + $0x2c8] sm:$0xff] %vm30, %v153
  %218 = vst.msk [vmem:[%s48 + $0x2d0] sm:$0xff] %vm30, %v154
  %219 = vst.msk [vmem:[%s48 + $0x2e8] sm:$0xff] %vm30, %v155
  %220 = vst.msk [vmem:[%s48 + $0x2f0] sm:$0xff] %vm30, %v156
  %221 = vst.msk [vmem:[%s48 + $0x308] sm:$0xff] %vm30, %v157
  %222 = vst.msk [vmem:[%s48 + $0x310] sm:$0xff] %vm30, %v158
  %223 = vst.msk [vmem:[%s48 + $0x328] sm:$0xff] %vm30, %v159
  %224 = vst.msk [vmem:[%s48 + $0x330] sm:$0xff] %vm30, %v160
  %225 = vst.msk [vmem:[%s48 + $0x348] sm:$0xff] %vm30, %v161
  %226 = vst.msk [vmem:[%s48 + $0x350] sm:$0xff] %vm30, %v162
  %227 = vst.msk [vmem:[%s48 + $0x368] sm:$0xff] %vm30, %v163
  %228 = vst.msk [vmem:[%s48 + $0x370] sm:$0xff] %vm30, %v164
  %229 = vst.msk [vmem:[%s48 + $0x388] sm:$0xff] %vm30, %v165
  %230 = vst.msk [vmem:[%s48 + $0x390] sm:$0xff] %vm30, %v166
  %231 = vst.msk [vmem:[%s48 + $0x3a8] sm:$0xff] %vm30, %v167
  %232 = vst.msk [vmem:[%s48 + $0x3b0] sm:$0xff] %vm30, %v168
  %233 = vst.msk [vmem:[%s48 + $0x3c8] sm:$0xff] %vm30, %v169
  %234 = vst.msk [vmem:[%s48 + $0x3d0] sm:$0xff] %vm30, %v170
  %235 = vst.msk [vmem:[%s48 + $0x3e8] sm:$0xff] %vm30, %v171
  %236 = vst.msk [vmem:[%s48 + $0x3f0] sm:$0xff] %vm30, %v172
  %237 = vst.msk [vmem:[%s48 + $0x408] sm:$0xff] %vm30, %v173
  %238 = vst.msk [vmem:[%s48 + $0x410] sm:$0xff] %vm30, %v174
  %239 = vst.msk [vmem:[%s48 + $0x428] sm:$0xff] %vm30, %v175
  %240 = vst.msk [vmem:[%s48 + $0x430] sm:$0xff] %vm30, %v176
  %v241 = vld [vmem:[#allocation2 + $0x7] sm:$0xff]
  %v242 = vld [vmem:[#allocation2 + $0xf] sm:$0xff]
  %v243 = vld [vmem:[#allocation2 + $0x27] sm:$0xff]
  %v244 = vld [vmem:[#allocation2 + $0x2f] sm:$0xff]
  %v245 = vld [vmem:[#allocation2 + $0x47] sm:$0xff]
  %v246 = vld [vmem:[#allocation2 + $0x4f] sm:$0xff]
  %v247 = vld [vmem:[#allocation2 + $0x67] sm:$0xff]
  %v248 = vld [vmem:[#allocation2 + $0x6f] sm:$0xff]
  %v249 = vld [vmem:[#allocation2 + $0x87] sm:$0xff]
  %v250 = vld [vmem:[#allocation2 + $0x8f] sm:$0xff]
  %v251 = vld [vmem:[#allocation2 + $0xa7] sm:$0xff]
  %v252 = vld [vmem:[#allocation2 + $0xaf] sm:$0xff]
  %v253 = vld [vmem:[#allocation2 + $0xc7] sm:$0xff]
  %v254 = vld [vmem:[#allocation2 + $0xcf] sm:$0xff]
  %v255 = vld [vmem:[#allocation2 + $0xe7] sm:$0xff]
  %v256 = vld [vmem:[#allocation2 + $0xef] sm:$0xff]
  %v257 = vld [vmem:[#allocation2 + $0x107] sm:$0xff]
  %v258 = vld [vmem:[#allocation2 + $0x10f] sm:$0xff]
  %v259 = vld [vmem:[#allocation2 + $0x127] sm:$0xff]
  %v260 = vld [vmem:[#allocation2 + $0x12f] sm:$0xff]
  %v261 = vld [vmem:[#allocation2 + $0x147] sm:$0xff]
  %v262 = vld [vmem:[#allocation2 + $0x14f] sm:$0xff]
  %v263 = vld [vmem:[#allocation2 + $0x167] sm:$0xff]
  %v264 = vld [vmem:[#allocation2 + $0x16f] sm:$0xff]
  %v265 = vld [vmem:[#allocation2 + $0x187] sm:$0xff]
  %v266 = vld [vmem:[#allocation2 + $0x18f] sm:$0xff]
  %v267 = vld [vmem:[#allocation2 + $0x1a7] sm:$0xff]
  %v268 = vld [vmem:[#allocation2 + $0x1af] sm:$0xff]
  %v269 = vld [vmem:[#allocation2 + $0x1c7] sm:$0xff]
  %v270 = vld [vmem:[#allocation2 + $0x1cf] sm:$0xff]
  %v271 = vld [vmem:[#allocation2 + $0x1e7] sm:$0xff]
  %v272 = vld [vmem:[#allocation2 + $0x1ef] sm:$0xff]
  %v273 = vld [vmem:[#allocation2 + $0x247] sm:$0xff]
  %v274 = vld [vmem:[#allocation2 + $0x24f] sm:$0xff]
  %v275 = vld [vmem:[#allocation2 + $0x267] sm:$0xff]
  %v276 = vld [vmem:[#allocation2 + $0x26f] sm:$0xff]
  %v277 = vld [vmem:[#allocation2 + $0x287] sm:$0xff]
  %v278 = vld [vmem:[#allocation2 + $0x28f] sm:$0xff]
  %v279 = vld [vmem:[#allocation2 + $0x2a7] sm:$0xff]
  %v280 = vld [vmem:[#allocation2 + $0x2af] sm:$0xff]
  %v281 = vld [vmem:[#allocation2 + $0x2c7] sm:$0xff]
  %v282 = vld [vmem:[#allocation2 + $0x2cf] sm:$0xff]
  %v283 = vld [vmem:[#allocation2 + $0x2e7] sm:$0xff]
  %v284 = vld [vmem:[#allocation2 + $0x2ef] sm:$0xff]
  %v285 = vld [vmem:[#allocation2 + $0x307] sm:$0xff]
  %v286 = vld [vmem:[#allocation2 + $0x30f] sm:$0xff]
  %v287 = vld [vmem:[#allocation2 + $0x327] sm:$0xff]
  %v288 = vld [vmem:[#allocation2 + $0x32f] sm:$0xff]
  %v289 = vld [vmem:[#allocation2 + $0x347] sm:$0xff]
  %v290 = vld [vmem:[#allocation2 + $0x34f] sm:$0xff]
  %v291 = vld [vmem:[#allocation2 + $0x367] sm:$0xff]
  %v292 = vld [vmem:[#allocation2 + $0x36f] sm:$0xff]
  %v293 = vld [vmem:[#allocation2 + $0x387] sm:$0xff]
  %v294 = vld [vmem:[#allocation2 + $0x38f] sm:$0xff]
  %v295 = vld [vmem:[#allocation2 + $0x3a7] sm:$0xff]
  %v296 = vld [vmem:[#allocation2 + $0x3af] sm:$0xff]
  %v297 = vld [vmem:[#allocation2 + $0x3c7] sm:$0xff]
  %v298 = vld [vmem:[#allocation2 + $0x3cf] sm:$0xff]
  %v299 = vld [vmem:[#allocation2 + $0x3e7] sm:$0xff]
  %v300 = vld [vmem:[#allocation2 + $0x3ef] sm:$0xff]
  %v301 = vld [vmem:[#allocation2 + $0x407] sm:$0xff]
  %v302 = vld [vmem:[#allocation2 + $0x40f] sm:$0xff]
  %v303 = vld [vmem:[#allocation2 + $0x427] sm:$0xff]
  %v304 = vld [vmem:[#allocation2 + $0x42f] sm:$0xff]
  %v305 = vpack.c.bf16 %v242, %v241
  %v306 = vpack.c.bf16 %v244, %v243
  %v307 = vpack.c.bf16 %v246, %v245
  %v308 = vpack.c.bf16 %v248, %v247
  %v309 = vpack.c.bf16 %v250, %v249
  %v310 = vpack.c.bf16 %v252, %v251
  %v311 = vpack.c.bf16 %v254, %v253
  %v312 = vpack.c.bf16 %v256, %v255
  %v313 = vpack.c.bf16 %v258, %v257
  %v314 = vpack.c.bf16 %v260, %v259
  %v315 = vpack.c.bf16 %v262, %v261
  %v316 = vpack.c.bf16 %v264, %v263
  %v317 = vpack.c.bf16 %v266, %v265
  %v318 = vpack.c.bf16 %v268, %v267
  %v319 = vpack.c.bf16 %v270, %v269
  %v320 = vpack.c.bf16 %v272, %v271
  %v321 = vpack.c.bf16 %v274, %v273
  %v322 = vpack.c.bf16 %v276, %v275
  %v323 = vpack.c.bf16 %v278, %v277
  %v324 = vpack.c.bf16 %v280, %v279
  %v325 = vpack.c.bf16 %v282, %v281
  %v326 = vpack.c.bf16 %v284, %v283
  %v327 = vpack.c.bf16 %v286, %v285
  %v328 = vpack.c.bf16 %v288, %v287
  %v329 = vpack.c.bf16 %v290, %v289
  %v330 = vpack.c.bf16 %v292, %v291
  %v331 = vpack.c.bf16 %v294, %v293
  %v332 = vpack.c.bf16 %v296, %v295
  %v333 = vpack.c.bf16 %v298, %v297
  %v334 = vpack.c.bf16 %v300, %v299
  %v335 = vpack.c.bf16 %v302, %v301
  %v336 = vpack.c.bf16 %v304, %v303
  %337 = vst.msk [vmem:[#allocation4] sm:$0xff] %vm30, %v305
  %338 = vst.msk [vmem:[#allocation4 + $0x8] sm:$0xff] %vm30, %v306
  %339 = vst.msk [vmem:[#allocation4 + $0x10] sm:$0xff] %vm30, %v307
  %340 = vst.msk [vmem:[#allocation4 + $0x18] sm:$0xff] %vm30, %v308
  %341 = vst.msk [vmem:[#allocation4 + $0x20] sm:$0xff] %vm30, %v309
  %342 = vst.msk [vmem:[#allocation4 + $0x28] sm:$0xff] %vm30, %v310
  %343 = vst.msk [vmem:[#allocation4 + $0x30] sm:$0xff] %vm30, %v311
  %344 = vst.msk [vmem:[#allocation4 + $0x38] sm:$0xff] %vm30, %v312
  %345 = vst.msk [vmem:[#allocation4 + $0x40] sm:$0xff] %vm30, %v313
  %346 = vst.msk [vmem:[#allocation4 + $0x48] sm:$0xff] %vm30, %v314
  %347 = vst.msk [vmem:[#allocation4 + $0x50] sm:$0xff] %vm30, %v315
  %348 = vst.msk [vmem:[#allocation4 + $0x58] sm:$0xff] %vm30, %v316
  %349 = vst.msk [vmem:[#allocation4 + $0x60] sm:$0xff] %vm30, %v317
  %350 = vst.msk [vmem:[#allocation4 + $0x68] sm:$0xff] %vm30, %v318
  %351 = vst.msk [vmem:[#allocation4 + $0x70] sm:$0xff] %vm30, %v319
  %352 = vst.msk [vmem:[#allocation4 + $0x78] sm:$0xff] %vm30, %v320
  %353 = vst.msk [vmem:[#allocation4 + $0x80] sm:$0xff] %vm30, %v321
  %354 = vst.msk [vmem:[#allocation4 + $0x88] sm:$0xff] %vm30, %v322
  %355 = vst.msk [vmem:[#allocation4 + $0x90] sm:$0xff] %vm30, %v323
  %356 = vst.msk [vmem:[#allocation4 + $0x98] sm:$0xff] %vm30, %v324
  %357 = vst.msk [vmem:[#allocation4 + $0xa0] sm:$0xff] %vm30, %v325
  %358 = vst.msk [vmem:[#allocation4 + $0xa8] sm:$0xff] %vm30, %v326
  %359 = vst.msk [vmem:[#allocation4 + $0xb0] sm:$0xff] %vm30, %v327
  %360 = vst.msk [vmem:[#allocation4 + $0xb8] sm:$0xff] %vm30, %v328
  %361 = vst.msk [vmem:[#allocation4 + $0xc0] sm:$0xff] %vm30, %v329
  %362 = vst.msk [vmem:[#allocation4 + $0xc8] sm:$0xff] %vm30, %v330
  %363 = vst.msk [vmem:[#allocation4 + $0xd0] sm:$0xff] %vm30, %v331
  %364 = vst.msk [vmem:[#allocation4 + $0xd8] sm:$0xff] %vm30, %v332
  %365 = vst.msk [vmem:[#allocation4 + $0xe0] sm:$0xff] %vm30, %v333
  %366 = vst.msk [vmem:[#allocation4 + $0xe8] sm:$0xff] %vm30, %v334
  %367 = vst.msk [vmem:[#allocation4 + $0xf0] sm:$0xff] %vm30, %v335
  %368 = vst.msk [vmem:[#allocation4 + $0xf8] sm:$0xff] %vm30, %v336
  %v369 = vld [vmem:[#allocation2 + $0x8] sm:$0xff]
  %v370 = vld [vmem:[#allocation2 + $0x10] sm:$0xff]
  %v371 = vld [vmem:[#allocation2 + $0x28] sm:$0xff]
  %v372 = vld [vmem:[#allocation2 + $0x30] sm:$0xff]
  %v373 = vld [vmem:[#allocation2 + $0x48] sm:$0xff]
  %v374 = vld [vmem:[#allocation2 + $0x50] sm:$0xff]
  %v375 = vld [vmem:[#allocation2 + $0x68] sm:$0xff]
  %v376 = vld [vmem:[#allocation2 + $0x70] sm:$0xff]
  %v377 = vld [vmem:[#allocation2 + $0x88] sm:$0xff]
  %v378 = vld [vmem:[#allocation2 + $0x90] sm:$0xff]
  %v379 = vld [vmem:[#allocation2 + $0xa8] sm:$0xff]
  %v380 = vld [vmem:[#allocation2 + $0xb0] sm:$0xff]
  %v381 = vld [vmem:[#allocation2 + $0xc8] sm:$0xff]
  %v382 = vld [vmem:[#allocation2 + $0xd0] sm:$0xff]
  %v383 = vld [vmem:[#allocation2 + $0xe8] sm:$0xff]
  %v384 = vld [vmem:[#allocation2 + $0xf0] sm:$0xff]
  %v385 = vld [vmem:[#allocation2 + $0x108] sm:$0xff]
  %v386 = vld [vmem:[#allocation2 + $0x110] sm:$0xff]
  %v387 = vld [vmem:[#allocation2 + $0x128] sm:$0xff]
  %v388 = vld [vmem:[#allocation2 + $0x130] sm:$0xff]
  %v389 = vld [vmem:[#allocation2 + $0x148] sm:$0xff]
  %v390 = vld [vmem:[#allocation2 + $0x150] sm:$0xff]
  %v391 = vld [vmem:[#allocation2 + $0x168] sm:$0xff]
  %v392 = vld [vmem:[#allocation2 + $0x170] sm:$0xff]
  %v393 = vld [vmem:[#allocation2 + $0x188] sm:$0xff]
  %v394 = vld [vmem:[#allocation2 + $0x190] sm:$0xff]
  %v395 = vld [vmem:[#allocation2 + $0x1a8] sm:$0xff]
  %v396 = vld [vmem:[#allocation2 + $0x1b0] sm:$0xff]
  %v397 = vld [vmem:[#allocation2 + $0x1c8] sm:$0xff]
  %v398 = vld [vmem:[#allocation2 + $0x1d0] sm:$0xff]
  %v399 = vld [vmem:[#allocation2 + $0x1e8] sm:$0xff]
  %v400 = vld [vmem:[#allocation2 + $0x1f0] sm:$0xff]
  %v401 = vld [vmem:[#allocation2 + $0x248] sm:$0xff]
  %v402 = vld [vmem:[#allocation2 + $0x250] sm:$0xff]
  %v403 = vld [vmem:[#allocation2 + $0x268] sm:$0xff]
  %v404 = vld [vmem:[#allocation2 + $0x270] sm:$0xff]
  %v405 = vld [vmem:[#allocation2 + $0x288] sm:$0xff]
  %v406 = vld [vmem:[#allocation2 + $0x290] sm:$0xff]
  %v407 = vld [vmem:[#allocation2 + $0x2a8] sm:$0xff]
  %v408 = vld [vmem:[#allocation2 + $0x2b0] sm:$0xff]
  %v409 = vld [vmem:[#allocation2 + $0x2c8] sm:$0xff]
  %v410 = vld [vmem:[#allocation2 + $0x2d0] sm:$0xff]
  %v411 = vld [vmem:[#allocation2 + $0x2e8] sm:$0xff]
  %v412 = vld [vmem:[#allocation2 + $0x2f0] sm:$0xff]
  %v413 = vld [vmem:[#allocation2 + $0x308] sm:$0xff]
  %v414 = vld [vmem:[#allocation2 + $0x310] sm:$0xff]
  %v415 = vld [vmem:[#allocation2 + $0x328] sm:$0xff]
  %v416 = vld [vmem:[#allocation2 + $0x330] sm:$0xff]
  %v417 = vld [vmem:[#allocation2 + $0x348] sm:$0xff]
  %v418 = vld [vmem:[#allocation2 + $0x350] sm:$0xff]
  %v419 = vld [vmem:[#allocation2 + $0x368] sm:$0xff]
  %v420 = vld [vmem:[#allocation2 + $0x370] sm:$0xff]
  %v421 = vld [vmem:[#allocation2 + $0x388] sm:$0xff]
  %v422 = vld [vmem:[#allocation2 + $0x390] sm:$0xff]
  %v423 = vld [vmem:[#allocation2 + $0x3a8] sm:$0xff]
  %v424 = vld [vmem:[#allocation2 + $0x3b0] sm:$0xff]
  %v425 = vld [vmem:[#allocation2 + $0x3c8] sm:$0xff]
  %v426 = vld [vmem:[#allocation2 + $0x3d0] sm:$0xff]
  %v427 = vld [vmem:[#allocation2 + $0x3e8] sm:$0xff]
  %v428 = vld [vmem:[#allocation2 + $0x3f0] sm:$0xff]
  %v429 = vld [vmem:[#allocation2 + $0x408] sm:$0xff]
  %v430 = vld [vmem:[#allocation2 + $0x410] sm:$0xff]
  %v431 = vld [vmem:[#allocation2 + $0x428] sm:$0xff]
  %v432 = vld [vmem:[#allocation2 + $0x430] sm:$0xff]
  %v433 = vpack.c.bf16 %v370, %v369
  %v434 = vpack.c.bf16 %v372, %v371
  %v435 = vpack.c.bf16 %v374, %v373
  %v436 = vpack.c.bf16 %v376, %v375
  %v437 = vpack.c.bf16 %v378, %v377
  %v438 = vpack.c.bf16 %v380, %v379
  %v439 = vpack.c.bf16 %v382, %v381
  %v440 = vpack.c.bf16 %v384, %v383
  %v441 = vpack.c.bf16 %v386, %v385
  %v442 = vpack.c.bf16 %v388, %v387
  %v443 = vpack.c.bf16 %v390, %v389
  %v444 = vpack.c.bf16 %v392, %v391
  %v445 = vpack.c.bf16 %v394, %v393
  %v446 = vpack.c.bf16 %v396, %v395
  %v447 = vpack.c.bf16 %v398, %v397
  %v448 = vpack.c.bf16 %v400, %v399
  %v449 = vpack.c.bf16 %v402, %v401
  %v450 = vpack.c.bf16 %v404, %v403
  %v451 = vpack.c.bf16 %v406, %v405
  %v452 = vpack.c.bf16 %v408, %v407
  %v453 = vpack.c.bf16 %v410, %v409
  %v454 = vpack.c.bf16 %v412, %v411
  %v455 = vpack.c.bf16 %v414, %v413
  %v456 = vpack.c.bf16 %v416, %v415
  %v457 = vpack.c.bf16 %v418, %v417
  %v458 = vpack.c.bf16 %v420, %v419
  %v459 = vpack.c.bf16 %v422, %v421
  %v460 = vpack.c.bf16 %v424, %v423
  %v461 = vpack.c.bf16 %v426, %v425
  %v462 = vpack.c.bf16 %v428, %v427
  %v463 = vpack.c.bf16 %v430, %v429
  %v464 = vpack.c.bf16 %v432, %v431
  %497 = vrot.lane.b32.xlu0 %v433, 3
  %v498 = vpop.permute.xlu0 %497
  %499 = vrot.lane.b32.xlu0 %v434, 3
  %v500 = vpop.permute.xlu0 %499
  %501 = vrot.lane.b32.xlu0 %v435, 3
  %v502 = vpop.permute.xlu0 %501
  %503 = vrot.lane.b32.xlu0 %v436, 3
  %v504 = vpop.permute.xlu0 %503
  %505 = vrot.lane.b32.xlu0 %v437, 3
  %v506 = vpop.permute.xlu0 %505
  %507 = vrot.lane.b32.xlu0 %v438, 3
  %v508 = vpop.permute.xlu0 %507
  %509 = vrot.lane.b32.xlu0 %v439, 3
  %v510 = vpop.permute.xlu0 %509
  %511 = vrot.lane.b32.xlu0 %v440, 3
  %v512 = vpop.permute.xlu0 %511
  %513 = vrot.lane.b32.xlu0 %v441, 3
  %v514 = vpop.permute.xlu0 %513
  %515 = vrot.lane.b32.xlu0 %v442, 3
  %v516 = vpop.permute.xlu0 %515
  %517 = vrot.lane.b32.xlu0 %v443, 3
  %v518 = vpop.permute.xlu0 %517
  %519 = vrot.lane.b32.xlu0 %v444, 3
  %v520 = vpop.permute.xlu0 %519
  %521 = vrot.lane.b32.xlu0 %v445, 3
  %v522 = vpop.permute.xlu0 %521
  %523 = vrot.lane.b32.xlu0 %v446, 3
  %v524 = vpop.permute.xlu0 %523
  %525 = vrot.lane.b32.xlu0 %v447, 3
  %v526 = vpop.permute.xlu0 %525
  %527 = vrot.lane.b32.xlu0 %v448, 3
  %v528 = vpop.permute.xlu0 %527
  %529 = vrot.lane.b32.xlu0 %v449, 3
  %v530 = vpop.permute.xlu0 %529
  %531 = vrot.lane.b32.xlu0 %v450, 3
  %v532 = vpop.permute.xlu0 %531
  %533 = vrot.lane.b32.xlu0 %v451, 3
  %v534 = vpop.permute.xlu0 %533
  %535 = vrot.lane.b32.xlu0 %v452, 3
  %v536 = vpop.permute.xlu0 %535
  %537 = vrot.lane.b32.xlu0 %v453, 3
  %v538 = vpop.permute.xlu0 %537
  %539 = vrot.lane.b32.xlu0 %v454, 3
  %v540 = vpop.permute.xlu0 %539
  %541 = vrot.lane.b32.xlu0 %v455, 3
  %v542 = vpop.permute.xlu0 %541
  %543 = vrot.lane.b32.xlu0 %v456, 3
  %v544 = vpop.permute.xlu0 %543
  %545 = vrot.lane.b32.xlu0 %v457, 3
  %v546 = vpop.permute.xlu0 %545
  %547 = vrot.lane.b32.xlu0 %v458, 3
  %v548 = vpop.permute.xlu0 %547
  %549 = vrot.lane.b32.xlu0 %v459, 3
  %v550 = vpop.permute.xlu0 %549
  %551 = vrot.lane.b32.xlu0 %v460, 3
  %v552 = vpop.permute.xlu0 %551
  %553 = vrot.lane.b32.xlu0 %v461, 3
  %v554 = vpop.permute.xlu0 %553
  %555 = vrot.lane.b32.xlu0 %v462, 3
  %v556 = vpop.permute.xlu0 %555
  %557 = vrot.lane.b32.xlu0 %v463, 3
  %v558 = vpop.permute.xlu0 %557
  %559 = vrot.lane.b32.xlu0 %v464, 3
  %v560 = vpop.permute.xlu0 %559
  %vm593 = vcmask 48152
  %594 = vst.msk [vmem:[#allocation4] sm:$0xff] %vm593, %v498
  %595 = vst.msk [vmem:[#allocation4 + $0x8] sm:$0xff] %vm593, %v500
  %596 = vst.msk [vmem:[#allocation4 + $0x10] sm:$0xff] %vm593, %v502
  %597 = vst.msk [vmem:[#allocation4 + $0x18] sm:$0xff] %vm593, %v504
  %598 = vst.msk [vmem:[#allocation4 + $0x20] sm:$0xff] %vm593, %v506
  %599 = vst.msk [vmem:[#allocation4 + $0x28] sm:$0xff] %vm593, %v508
  %600 = vst.msk [vmem:[#allocation4 + $0x30] sm:$0xff] %vm593, %v510
  %601 = vst.msk [vmem:[#allocation4 + $0x38] sm:$0xff] %vm593, %v512
  %602 = vst.msk [vmem:[#allocation4 + $0x40] sm:$0xff] %vm593, %v514
  %603 = vst.msk [vmem:[#allocation4 + $0x48] sm:$0xff] %vm593, %v516
  %604 = vst.msk [vmem:[#allocation4 + $0x50] sm:$0xff] %vm593, %v518
  %605 = vst.msk [vmem:[#allocation4 + $0x58] sm:$0xff] %vm593, %v520
  %606 = vst.msk [vmem:[#allocation4 + $0x60] sm:$0xff] %vm593, %v522
  %607 = vst.msk [vmem:[#allocation4 + $0x68] sm:$0xff] %vm593, %v524
  %608 = vst.msk [vmem:[#allocation4 + $0x70] sm:$0xff] %vm593, %v526
  %609 = vst.msk [vmem:[#allocation4 + $0x78] sm:$0xff] %vm593, %v528
  %610 = vst.msk [vmem:[#allocation4 + $0x80] sm:$0xff] %vm593, %v530
  %611 = vst.msk [vmem:[#allocation4 + $0x88] sm:$0xff] %vm593, %v532
  %612 = vst.msk [vmem:[#allocation4 + $0x90] sm:$0xff] %vm593, %v534
  %613 = vst.msk [vmem:[#allocation4 + $0x98] sm:$0xff] %vm593, %v536
  %614 = vst.msk [vmem:[#allocation4 + $0xa0] sm:$0xff] %vm593, %v538
  %615 = vst.msk [vmem:[#allocation4 + $0xa8] sm:$0xff] %vm593, %v540
  %616 = vst.msk [vmem:[#allocation4 + $0xb0] sm:$0xff] %vm593, %v542
  %617 = vst.msk [vmem:[#allocation4 + $0xb8] sm:$0xff] %vm593, %v544
  %618 = vst.msk [vmem:[#allocation4 + $0xc0] sm:$0xff] %vm593, %v546
  %619 = vst.msk [vmem:[#allocation4 + $0xc8] sm:$0xff] %vm593, %v548
  %620 = vst.msk [vmem:[#allocation4 + $0xd0] sm:$0xff] %vm593, %v550
  %621 = vst.msk [vmem:[#allocation4 + $0xd8] sm:$0xff] %vm593, %v552
  %622 = vst.msk [vmem:[#allocation4 + $0xe0] sm:$0xff] %vm593, %v554
  %623 = vst.msk [vmem:[#allocation4 + $0xe8] sm:$0xff] %vm593, %v556
  %624 = vst.msk [vmem:[#allocation4 + $0xf0] sm:$0xff] %vm593, %v558
  %625 = vst.msk [vmem:[#allocation4 + $0xf8] sm:$0xff] %vm593, %v560
  %v626 = vld [vmem:[#allocation2 + $0x9] sm:$0xff]
  %v627 = vld [vmem:[#allocation2 + $0x11] sm:$0xff]
  %v628 = vld [vmem:[#allocation2 + $0x29] sm:$0xff]
  %v629 = vld [vmem:[#allocation2 + $0x31] sm:$0xff]
  %v630 = vld [vmem:[#allocation2 + $0x49] sm:$0xff]
  %v631 = vld [vmem:[#allocation2 + $0x51] sm:$0xff]
  %v632 = vld [vmem:[#allocation2 + $0x69] sm:$0xff]
  %v633 = vld [vmem:[#allocation2 + $0x71] sm:$0xff]
  %v634 = vld [vmem:[#allocation2 + $0x89] sm:$0xff]
  %v635 = vld [vmem:[#allocation2 + $0x91] sm:$0xff]
  %v636 = vld [vmem:[#allocation2 + $0xa9] sm:$0xff]
  %v637 = vld [vmem:[#allocation2 + $0xb1] sm:$0xff]
  %v638 = vld [vmem:[#allocation2 + $0xc9] sm:$0xff]
  %v639 = vld [vmem:[#allocation2 + $0xd1] sm:$0xff]
  %v640 = vld [vmem:[#allocation2 + $0xe9] sm:$0xff]
  %v641 = vld [vmem:[#allocation2 + $0xf1] sm:$0xff]
  %v642 = vld [vmem:[#allocation2 + $0x109] sm:$0xff]
  %v643 = vld [vmem:[#allocation2 + $0x111] sm:$0xff]
  %v644 = vld [vmem:[#allocation2 + $0x129] sm:$0xff]
  %v645 = vld [vmem:[#allocation2 + $0x131] sm:$0xff]
  %v646 = vld [vmem:[#allocation2 + $0x149] sm:$0xff]
  %v647 = vld [vmem:[#allocation2 + $0x151] sm:$0xff]
  %v648 = vld [vmem:[#allocation2 + $0x169] sm:$0xff]
  %v649 = vld [vmem:[#allocation2 + $0x171] sm:$0xff]
  %v650 = vld [vmem:[#allocation2 + $0x189] sm:$0xff]
  %v651 = vld [vmem:[#allocation2 + $0x191] sm:$0xff]
  %v652 = vld [vmem:[#allocation2 + $0x1a9] sm:$0xff]
  %v653 = vld [vmem:[#allocation2 + $0x1b1] sm:$0xff]
  %v654 = vld [vmem:[#allocation2 + $0x1c9] sm:$0xff]
  %v655 = vld [vmem:[#allocation2 + $0x1d1] sm:$0xff]
  %v656 = vld [vmem:[#allocation2 + $0x1e9] sm:$0xff]
  %v657 = vld [vmem:[#allocation2 + $0x1f1] sm:$0xff]
  %v658 = vld [vmem:[#allocation2 + $0x249] sm:$0xff]
  %v659 = vld [vmem:[#allocation2 + $0x251] sm:$0xff]
  %v660 = vld [vmem:[#allocation2 + $0x269] sm:$0xff]
  %v661 = vld [vmem:[#allocation2 + $0x271] sm:$0xff]
  %v662 = vld [vmem:[#allocation2 + $0x289] sm:$0xff]
  %v663 = vld [vmem:[#allocation2 + $0x291] sm:$0xff]
  %v664 = vld [vmem:[#allocation2 + $0x2a9] sm:$0xff]
  %v665 = vld [vmem:[#allocation2 + $0x2b1] sm:$0xff]
  %v666 = vld [vmem:[#allocation2 + $0x2c9] sm:$0xff]
  %v667 = vld [vmem:[#allocation2 + $0x2d1] sm:$0xff]
  %v668 = vld [vmem:[#allocation2 + $0x2e9] sm:$0xff]
  %v669 = vld [vmem:[#allocation2 + $0x2f1] sm:$0xff]
  %v670 = vld [vmem:[#allocation2 + $0x309] sm:$0xff]
  %v671 = vld [vmem:[#allocation2 + $0x311] sm:$0xff]
  %v672 = vld [vmem:[#allocation2 + $0x329] sm:$0xff]
  %v673 = vld [vmem:[#allocation2 + $0x331] sm:$0xff]
  %v674 = vld [vmem:[#allocation2 + $0x349] sm:$0xff]
  %v675 = vld [vmem:[#allocation2 + $0x351] sm:$0xff]
  %v676 = vld [vmem:[#allocation2 + $0x369] sm:$0xff]
  %v677 = vld [vmem:[#allocation2 + $0x371] sm:$0xff]
  %v678 = vld [vmem:[#allocation2 + $0x389] sm:$0xff]
  %v679 = vld [vmem:[#allocation2 + $0x391] sm:$0xff]
  %v680 = vld [vmem:[#allocation2 + $0x3a9] sm:$0xff]
  %v681 = vld [vmem:[#allocation2 + $0x3b1] sm:$0xff]
  %v682 = vld [vmem:[#allocation2 + $0x3c9] sm:$0xff]
  %v683 = vld [vmem:[#allocation2 + $0x3d1] sm:$0xff]
  %v684 = vld [vmem:[#allocation2 + $0x3e9] sm:$0xff]
  %v685 = vld [vmem:[#allocation2 + $0x3f1] sm:$0xff]
  %v686 = vld [vmem:[#allocation2 + $0x409] sm:$0xff]
  %v687 = vld [vmem:[#allocation2 + $0x411] sm:$0xff]
  %v688 = vld [vmem:[#allocation2 + $0x429] sm:$0xff]
  %v689 = vld [vmem:[#allocation2 + $0x431] sm:$0xff]
  %v690 = vpack.c.bf16 %v627, %v626
  %v691 = vpack.c.bf16 %v629, %v628
  %v692 = vpack.c.bf16 %v631, %v630
  %v693 = vpack.c.bf16 %v633, %v632
  %v694 = vpack.c.bf16 %v635, %v634
  %v695 = vpack.c.bf16 %v637, %v636
  %v696 = vpack.c.bf16 %v639, %v638
  %v697 = vpack.c.bf16 %v641, %v640
  %v698 = vpack.c.bf16 %v643, %v642
  %v699 = vpack.c.bf16 %v645, %v644
  %v700 = vpack.c.bf16 %v647, %v646
  %v701 = vpack.c.bf16 %v649, %v648
  %v702 = vpack.c.bf16 %v651, %v650
  %v703 = vpack.c.bf16 %v653, %v652
  %v704 = vpack.c.bf16 %v655, %v654
  %v705 = vpack.c.bf16 %v657, %v656
  %v706 = vpack.c.bf16 %v659, %v658
  %v707 = vpack.c.bf16 %v661, %v660
  %v708 = vpack.c.bf16 %v663, %v662
  %v709 = vpack.c.bf16 %v665, %v664
  %v710 = vpack.c.bf16 %v667, %v666
  %v711 = vpack.c.bf16 %v669, %v668
  %v712 = vpack.c.bf16 %v671, %v670
  %v713 = vpack.c.bf16 %v673, %v672
  %v714 = vpack.c.bf16 %v675, %v674
  %v715 = vpack.c.bf16 %v677, %v676
  %v716 = vpack.c.bf16 %v679, %v678
  %v717 = vpack.c.bf16 %v681, %v680
  %v718 = vpack.c.bf16 %v683, %v682
  %v719 = vpack.c.bf16 %v685, %v684
  %v720 = vpack.c.bf16 %v687, %v686
  %v721 = vpack.c.bf16 %v689, %v688
  %754 = vrot.lane.b32.xlu0 %v690, 6
  %v755 = vpop.permute.xlu0 %754
  %756 = vrot.lane.b32.xlu0 %v691, 6
  %v757 = vpop.permute.xlu0 %756
  %758 = vrot.lane.b32.xlu0 %v692, 6
  %v759 = vpop.permute.xlu0 %758
  %760 = vrot.lane.b32.xlu0 %v693, 6
  %v761 = vpop.permute.xlu0 %760
  %762 = vrot.lane.b32.xlu0 %v694, 6
  %v763 = vpop.permute.xlu0 %762
  %764 = vrot.lane.b32.xlu0 %v695, 6
  %v765 = vpop.permute.xlu0 %764
  %766 = vrot.lane.b32.xlu0 %v696, 6
  %v767 = vpop.permute.xlu0 %766
  %768 = vrot.lane.b32.xlu0 %v697, 6
  %v769 = vpop.permute.xlu0 %768
  %770 = vrot.lane.b32.xlu0 %v698, 6
  %v771 = vpop.permute.xlu0 %770
  %772 = vrot.lane.b32.xlu0 %v699, 6
  %v773 = vpop.permute.xlu0 %772
  %774 = vrot.lane.b32.xlu0 %v700, 6
  %v775 = vpop.permute.xlu0 %774
  %776 = vrot.lane.b32.xlu0 %v701, 6
  %v777 = vpop.permute.xlu0 %776
  %778 = vrot.lane.b32.xlu0 %v702, 6
  %v779 = vpop.permute.xlu0 %778
  %780 = vrot.lane.b32.xlu0 %v703, 6
  %v781 = vpop.permute.xlu0 %780
  %782 = vrot.lane.b32.xlu0 %v704, 6
  %v783 = vpop.permute.xlu0 %782
  %784 = vrot.lane.b32.xlu0 %v705, 6
  %v785 = vpop.permute.xlu0 %784
  %786 = vrot.lane.b32.xlu0 %v706, 6
  %v787 = vpop.permute.xlu0 %786
  %788 = vrot.lane.b32.xlu0 %v707, 6
  %v789 = vpop.permute.xlu0 %788
  %790 = vrot.lane.b32.xlu0 %v708, 6
  %v791 = vpop.permute.xlu0 %790
  %792 = vrot.lane.b32.xlu0 %v709, 6
  %v793 = vpop.permute.xlu0 %792
  %794 = vrot.lane.b32.xlu0 %v710, 6
  %v795 = vpop.permute.xlu0 %794
  %796 = vrot.lane.b32.xlu0 %v711, 6
  %v797 = vpop.permute.xlu0 %796
  %798 = vrot.lane.b32.xlu0 %v712, 6
  %v799 = vpop.permute.xlu0 %798
  %800 = vrot.lane.b32.xlu0 %v713, 6
  %v801 = vpop.permute.xlu0 %800
  %802 = vrot.lane.b32.xlu0 %v714, 6
  %v803 = vpop.permute.xlu0 %802
  %804 = vrot.lane.b32.xlu0 %v715, 6
  %v805 = vpop.permute.xlu0 %804
  %806 = vrot.lane.b32.xlu0 %v716, 6
  %v807 = vpop.permute.xlu0 %806
  %808 = vrot.lane.b32.xlu0 %v717, 6
  %v809 = vpop.permute.xlu0 %808
  %810 = vrot.lane.b32.xlu0 %v718, 6
  %v811 = vpop.permute.xlu0 %810
  %812 = vrot.lane.b32.xlu0 %v719, 6
  %v813 = vpop.permute.xlu0 %812
  %814 = vrot.lane.b32.xlu0 %v720, 6
  %v815 = vpop.permute.xlu0 %814
  %816 = vrot.lane.b32.xlu0 %v721, 6
  %v817 = vpop.permute.xlu0 %816
  %vm850 = vcmask 72752
  %851 = vst.msk [vmem:[#allocation4] sm:$0xff] %vm850, %v755
  %852 = vst.msk [vmem:[#allocation4 + $0x8] sm:$0xff] %vm850, %v757
  %853 = vst.msk [vmem:[#allocation4 + $0x10] sm:$0xff] %vm850, %v759
  %854 = vst.msk [vmem:[#allocation4 + $0x18] sm:$0xff] %vm850, %v761
  %855 = vst.msk [vmem:[#allocation4 + $0x20] sm:$0xff] %vm850, %v763
  %856 = vst.msk [vmem:[#allocation4 + $0x28] sm:$0xff] %vm850, %v765
  %857 = vst.msk [vmem:[#allocation4 + $0x30] sm:$0xff] %vm850, %v767
  %858 = vst.msk [vmem:[#allocation4 + $0x38] sm:$0xff] %vm850, %v769
  %859 = vst.msk [vmem:[#allocation4 + $0x40] sm:$0xff] %vm850, %v771
  %860 = vst.msk [vmem:[#allocation4 + $0x48] sm:$0xff] %vm850, %v773
  %861 = vst.msk [vmem:[#allocation4 + $0x50] sm:$0xff] %vm850, %v775
  %862 = vst.msk [vmem:[#allocation4 + $0x58] sm:$0xff] %vm850, %v777
  %863 = vst.msk [vmem:[#allocation4 + $0x60] sm:$0xff] %vm850, %v779
  %864 = vst.msk [vmem:[#allocation4 + $0x68] sm:$0xff] %vm850, %v781
  %865 = vst.msk [vmem:[#allocation4 + $0x70] sm:$0xff] %vm850, %v783
  %866 = vst.msk [vmem:[#allocation4 + $0x78] sm:$0xff] %vm850, %v785
  %867 = vst.msk [vmem:[#allocation4 + $0x80] sm:$0xff] %vm850, %v787
  %868 = vst.msk [vmem:[#allocation4 + $0x88] sm:$0xff] %vm850, %v789
  %869 = vst.msk [vmem:[#allocation4 + $0x90] sm:$0xff] %vm850, %v791
  %870 = vst.msk [vmem:[#allocation4 + $0x98] sm:$0xff] %vm850, %v793
  %871 = vst.msk [vmem:[#allocation4 + $0xa0] sm:$0xff] %vm850, %v795
  %872 = vst.msk [vmem:[#allocation4 + $0xa8] sm:$0xff] %vm850, %v797
  %873 = vst.msk [vmem:[#allocation4 + $0xb0] sm:$0xff] %vm850, %v799
  %874 = vst.msk [vmem:[#allocation4 + $0xb8] sm:$0xff] %vm850, %v801
  %875 = vst.msk [vmem:[#allocation4 + $0xc0] sm:$0xff] %vm850, %v803
  %876 = vst.msk [vmem:[#allocation4 + $0xc8] sm:$0xff] %vm850, %v805
  %877 = vst.msk [vmem:[#allocation4 + $0xd0] sm:$0xff] %vm850, %v807
  %878 = vst.msk [vmem:[#allocation4 + $0xd8] sm:$0xff] %vm850, %v809
  %879 = vst.msk [vmem:[#allocation4 + $0xe0] sm:$0xff] %vm850, %v811
  %880 = vst.msk [vmem:[#allocation4 + $0xe8] sm:$0xff] %vm850, %v813
  %881 = vst.msk [vmem:[#allocation4 + $0xf0] sm:$0xff] %vm850, %v815
  %882 = vst.msk [vmem:[#allocation4 + $0xf8] sm:$0xff] %vm850, %v817
  %v883 = vld [vmem:[%s48 + $0x7] sm:$0xff]
  %v884 = vld [vmem:[%s48 + $0xf] sm:$0xff]
  %v885 = vld [vmem:[%s48 + $0x27] sm:$0xff]
  %v886 = vld [vmem:[%s48 + $0x2f] sm:$0xff]
  %v887 = vld [vmem:[%s48 + $0x47] sm:$0xff]
  %v888 = vld [vmem:[%s48 + $0x4f] sm:$0xff]
  %v889 = vld [vmem:[%s48 + $0x67] sm:$0xff]
  %v890 = vld [vmem:[%s48 + $0x6f] sm:$0xff]
  %v891 = vld [vmem:[%s48 + $0x87] sm:$0xff]
  %v892 = vld [vmem:[%s48 + $0x8f] sm:$0xff]
  %v893 = vld [vmem:[%s48 + $0xa7] sm:$0xff]
  %v894 = vld [vmem:[%s48 + $0xaf] sm:$0xff]
  %v895 = vld [vmem:[%s48 + $0xc7] sm:$0xff]
  %v896 = vld [vmem:[%s48 + $0xcf] sm:$0xff]
  %v897 = vld [vmem:[%s48 + $0xe7] sm:$0xff]
  %v898 = vld [vmem:[%s48 + $0xef] sm:$0xff]
  %v899 = vld [vmem:[%s48 + $0x107] sm:$0xff]
  %v900 = vld [vmem:[%s48 + $0x10f] sm:$0xff]
  %v901 = vld [vmem:[%s48 + $0x127] sm:$0xff]
  %v902 = vld [vmem:[%s48 + $0x12f] sm:$0xff]
  %v903 = vld [vmem:[%s48 + $0x147] sm:$0xff]
  %v904 = vld [vmem:[%s48 + $0x14f] sm:$0xff]
  %v905 = vld [vmem:[%s48 + $0x167] sm:$0xff]
  %v906 = vld [vmem:[%s48 + $0x16f] sm:$0xff]
  %v907 = vld [vmem:[%s48 + $0x187] sm:$0xff]
  %v908 = vld [vmem:[%s48 + $0x18f] sm:$0xff]
  %v909 = vld [vmem:[%s48 + $0x1a7] sm:$0xff]
  %v910 = vld [vmem:[%s48 + $0x1af] sm:$0xff]
  %v911 = vld [vmem:[%s48 + $0x1c7] sm:$0xff]
  %v912 = vld [vmem:[%s48 + $0x1cf] sm:$0xff]
  %v913 = vld [vmem:[%s48 + $0x1e7] sm:$0xff]
  %v914 = vld [vmem:[%s48 + $0x1ef] sm:$0xff]
  %v915 = vld [vmem:[%s48 + $0x247] sm:$0xff]
  %v916 = vld [vmem:[%s48 + $0x24f] sm:$0xff]
  %v917 = vld [vmem:[%s48 + $0x267] sm:$0xff]
  %v918 = vld [vmem:[%s48 + $0x26f] sm:$0xff]
  %v919 = vld [vmem:[%s48 + $0x287] sm:$0xff]
  %v920 = vld [vmem:[%s48 + $0x28f] sm:$0xff]
  %v921 = vld [vmem:[%s48 + $0x2a7] sm:$0xff]
  %v922 = vld [vmem:[%s48 + $0x2af] sm:$0xff]
  %v923 = vld [vmem:[%s48 + $0x2c7] sm:$0xff]
  %v924 = vld [vmem:[%s48 + $0x2cf] sm:$0xff]
  %v925 = vld [vmem:[%s48 + $0x2e7] sm:$0xff]
  %v926 = vld [vmem:[%s48 + $0x2ef] sm:$0xff]
  %v927 = vld [vmem:[%s48 + $0x307] sm:$0xff]
  %v928 = vld [vmem:[%s48 + $0x30f] sm:$0xff]
  %v929 = vld [vmem:[%s48 + $0x327] sm:$0xff]
  %v930 = vld [vmem:[%s48 + $0x32f] sm:$0xff]
  %v931 = vld [vmem:[%s48 + $0x347] sm:$0xff]
  %v932 = vld [vmem:[%s48 + $0x34f] sm:$0xff]
  %v933 = vld [vmem:[%s48 + $0x367] sm:$0xff]
  %v934 = vld [vmem:[%s48 + $0x36f] sm:$0xff]
  %v935 = vld [vmem:[%s48 + $0x387] sm:$0xff]
  %v936 = vld [vmem:[%s48 + $0x38f] sm:$0xff]
  %v937 = vld [vmem:[%s48 + $0x3a7] sm:$0xff]
  %v938 = vld [vmem:[%s48 + $0x3af] sm:$0xff]
  %v939 = vld [vmem:[%s48 + $0x3c7] sm:$0xff]
  %v940 = vld [vmem:[%s48 + $0x3cf] sm:$0xff]
  %v941 = vld [vmem:[%s48 + $0x3e7] sm:$0xff]
  %v942 = vld [vmem:[%s48 + $0x3ef] sm:$0xff]
  %v943 = vld [vmem:[%s48 + $0x407] sm:$0xff]
  %v944 = vld [vmem:[%s48 + $0x40f] sm:$0xff]
  %v945 = vld [vmem:[%s48 + $0x427] sm:$0xff]
  %v946 = vld [vmem:[%s48 + $0x42f] sm:$0xff]
  %v947 = vpack.c.bf16 %v884, %v883
  %v948 = vpack.c.bf16 %v886, %v885
  %v949 = vpack.c.bf16 %v888, %v887
  %v950 = vpack.c.bf16 %v890, %v889
  %v951 = vpack.c.bf16 %v892, %v891
  %v952 = vpack.c.bf16 %v894, %v893
  %v953 = vpack.c.bf16 %v896, %v895
  %v954 = vpack.c.bf16 %v898, %v897
  %v955 = vpack.c.bf16 %v900, %v899
  %v956 = vpack.c.bf16 %v902, %v901
  %v957 = vpack.c.bf16 %v904, %v903
  %v958 = vpack.c.bf16 %v906, %v905
  %v959 = vpack.c.bf16 %v908, %v907
  %v960 = vpack.c.bf16 %v910, %v909
  %v961 = vpack.c.bf16 %v912, %v911
  %v962 = vpack.c.bf16 %v914, %v913
  %v963 = vpack.c.bf16 %v916, %v915
  %v964 = vpack.c.bf16 %v918, %v917
  %v965 = vpack.c.bf16 %v920, %v919
  %v966 = vpack.c.bf16 %v922, %v921
  %v967 = vpack.c.bf16 %v924, %v923
  %v968 = vpack.c.bf16 %v926, %v925
  %v969 = vpack.c.bf16 %v928, %v927
  %v970 = vpack.c.bf16 %v930, %v929
  %v971 = vpack.c.bf16 %v932, %v931
  %v972 = vpack.c.bf16 %v934, %v933
  %v973 = vpack.c.bf16 %v936, %v935
  %v974 = vpack.c.bf16 %v938, %v937
  %v975 = vpack.c.bf16 %v940, %v939
  %v976 = vpack.c.bf16 %v942, %v941
  %v977 = vpack.c.bf16 %v944, %v943
  %v978 = vpack.c.bf16 %v946, %v945
  %1011 = vrot.lane.b32.xlu0 %v947, 9
  %v1012 = vpop.permute.xlu0 %1011
  %1013 = vrot.lane.b32.xlu0 %v948, 9
  %v1014 = vpop.permute.xlu0 %1013
  %1015 = vrot.lane.b32.xlu0 %v949, 9
  %v1016 = vpop.permute.xlu0 %1015
  %1017 = vrot.lane.b32.xlu0 %v950, 9
  %v1018 = vpop.permute.xlu0 %1017
  %1019 = vrot.lane.b32.xlu0 %v951, 9
  %v1020 = vpop.permute.xlu0 %1019
  %1021 = vrot.lane.b32.xlu0 %v952, 9
  %v1022 = vpop.permute.xlu0 %1021
  %1023 = vrot.lane.b32.xlu0 %v953, 9
  %v1024 = vpop.permute.xlu0 %1023
  %1025 = vrot.lane.b32.xlu0 %v954, 9
  %v1026 = vpop.permute.xlu0 %1025
  %1027 = vrot.lane.b32.xlu0 %v955, 9
  %v1028 = vpop.permute.xlu0 %1027
  %1029 = vrot.lane.b32.xlu0 %v956, 9
  %v1030 = vpop.permute.xlu0 %1029
  %1031 = vrot.lane.b32.xlu0 %v957, 9
  %v1032 = vpop.permute.xlu0 %1031
  %1033 = vrot.lane.b32.xlu0 %v958, 9
  %v1034 = vpop.permute.xlu0 %1033
  %1035 = vrot.lane.b32.xlu0 %v959, 9
  %v1036 = vpop.permute.xlu0 %1035
  %1037 = vrot.lane.b32.xlu0 %v960, 9
  %v1038 = vpop.permute.xlu0 %1037
  %1039 = vrot.lane.b32.xlu0 %v961, 9
  %v1040 = vpop.permute.xlu0 %1039
  %1041 = vrot.lane.b32.xlu0 %v962, 9
  %v1042 = vpop.permute.xlu0 %1041
  %1043 = vrot.lane.b32.xlu0 %v963, 9
  %v1044 = vpop.permute.xlu0 %1043
  %1045 = vrot.lane.b32.xlu0 %v964, 9
  %v1046 = vpop.permute.xlu0 %1045
  %1047 = vrot.lane.b32.xlu0 %v965, 9
  %v1048 = vpop.permute.xlu0 %1047
  %1049 = vrot.lane.b32.xlu0 %v966, 9
  %v1050 = vpop.permute.xlu0 %1049
  %1051 = vrot.lane.b32.xlu0 %v967, 9
  %v1052 = vpop.permute.xlu0 %1051
  %1053 = vrot.lane.b32.xlu0 %v968, 9
  %v1054 = vpop.permute.xlu0 %1053
  %1055 = vrot.lane.b32.xlu0 %v969, 9
  %v1056 = vpop.permute.xlu0 %1055
  %1057 = vrot.lane.b32.xlu0 %v970, 9
  %v1058 = vpop.permute.xlu0 %1057
  %1059 = vrot.lane.b32.xlu0 %v971, 9
  %v1060 = vpop.permute.xlu0 %1059
  %1061 = vrot.lane.b32.xlu0 %v972, 9
  %v1062 = vpop.permute.xlu0 %1061
  %1063 = vrot.lane.b32.xlu0 %v973, 9
  %v1064 = vpop.permute.xlu0 %1063
  %1065 = vrot.lane.b32.xlu0 %v974, 9
  %v1066 = vpop.permute.xlu0 %1065
  %1067 = vrot.lane.b32.xlu0 %v975, 9
  %v1068 = vpop.permute.xlu0 %1067
  %1069 = vrot.lane.b32.xlu0 %v976, 9
  %v1070 = vpop.permute.xlu0 %1069
  %1071 = vrot.lane.b32.xlu0 %v977, 9
  %v1072 = vpop.permute.xlu0 %1071
  %1073 = vrot.lane.b32.xlu0 %v978, 9
  %v1074 = vpop.permute.xlu0 %1073
  %vm1107 = vcmask 97352
  %1108 = vst.msk [vmem:[#allocation4] sm:$0xff] %vm1107, %v1012
  %1109 = vst.msk [vmem:[#allocation4 + $0x8] sm:$0xff] %vm1107, %v1014
  %1110 = vst.msk [vmem:[#allocation4 + $0x10] sm:$0xff] %vm1107, %v1016
  %1111 = vst.msk [vmem:[#allocation4 + $0x18] sm:$0xff] %vm1107, %v1018
  %1112 = vst.msk [vmem:[#allocation4 + $0x20] sm:$0xff] %vm1107, %v1020
  %1113 = vst.msk [vmem:[#allocation4 + $0x28] sm:$0xff] %vm1107, %v1022
  %1114 = vst.msk [vmem:[#allocation4 + $0x30] sm:$0xff] %vm1107, %v1024
  %1115 = vst.msk [vmem:[#allocation4 + $0x38] sm:$0xff] %vm1107, %v1026
  %1116 = vst.msk [vmem:[#allocation4 + $0x40] sm:$0xff] %vm1107, %v1028
  %1117 = vst.msk [vmem:[#allocation4 + $0x48] sm:$0xff] %vm1107, %v1030
  %1118 = vst.msk [vmem:[#allocation4 + $0x50] sm:$0xff] %vm1107, %v1032
  %1119 = vst.msk [vmem:[#allocation4 + $0x58] sm:$0xff] %vm1107, %v1034
  %1120 = vst.msk [vmem:[#allocation4 + $0x60] sm:$0xff] %vm1107, %v1036
  %1121 = vst.msk [vmem:[#allocation4 + $0x68] sm:$0xff] %vm1107, %v1038
  %1122 = vst.msk [vmem:[#allocation4 + $0x70] sm:$0xff] %vm1107, %v1040
  %1123 = vst.msk [vmem:[#allocation4 + $0x78] sm:$0xff] %vm1107, %v1042
  %1124 = vst.msk [vmem:[#allocation4 + $0x80] sm:$0xff] %vm1107, %v1044
  %1125 = vst.msk [vmem:[#allocation4 + $0x88] sm:$0xff] %vm1107, %v1046
  %1126 = vst.msk [vmem:[#allocation4 + $0x90] sm:$0xff] %vm1107, %v1048
  %1127 = vst.msk [vmem:[#allocation4 + $0x98] sm:$0xff] %vm1107, %v1050
  %1128 = vst.msk [vmem:[#allocation4 + $0xa0] sm:$0xff] %vm1107, %v1052
  %1129 = vst.msk [vmem:[#allocation4 + $0xa8] sm:$0xff] %vm1107, %v1054
  %1130 = vst.msk [vmem:[#allocation4 + $0xb0] sm:$0xff] %vm1107, %v1056
  %1131 = vst.msk [vmem:[#allocation4 + $0xb8] sm:$0xff] %vm1107, %v1058
  %1132 = vst.msk [vmem:[#allocation4 + $0xc0] sm:$0xff] %vm1107, %v1060
  %1133 = vst.msk [vmem:[#allocation4 + $0xc8] sm:$0xff] %vm1107, %v1062
  %1134 = vst.msk [vmem:[#allocation4 + $0xd0] sm:$0xff] %vm1107, %v1064
  %1135 = vst.msk [vmem:[#allocation4 + $0xd8] sm:$0xff] %vm1107, %v1066
  %1136 = vst.msk [vmem:[#allocation4 + $0xe0] sm:$0xff] %vm1107, %v1068
  %1137 = vst.msk [vmem:[#allocation4 + $0xe8] sm:$0xff] %vm1107, %v1070
  %1138 = vst.msk [vmem:[#allocation4 + $0xf0] sm:$0xff] %vm1107, %v1072
  %1139 = vst.msk [vmem:[#allocation4 + $0xf8] sm:$0xff] %vm1107, %v1074
  %v1140 = vld [vmem:[%s48 + $0x8] sm:$0xff]
  %v1141 = vld [vmem:[%s48 + $0x10] sm:$0xff]
  %v1142 = vld [vmem:[%s48 + $0x28] sm:$0xff]
  %v1143 = vld [vmem:[%s48 + $0x30] sm:$0xff]
  %v1144 = vld [vmem:[%s48 + $0x48] sm:$0xff]
  %v1145 = vld [vmem:[%s48 + $0x50] sm:$0xff]
  %v1146 = vld [vmem:[%s48 + $0x68] sm:$0xff]
  %v1147 = vld [vmem:[%s48 + $0x70] sm:$0xff]
  %v1148 = vld [vmem:[%s48 + $0x88] sm:$0xff]
  %v1149 = vld [vmem:[%s48 + $0x90] sm:$0xff]
  %v1150 = vld [vmem:[%s48 + $0xa8] sm:$0xff]
  %v1151 = vld [vmem:[%s48 + $0xb0] sm:$0xff]
  %v1152 = vld [vmem:[%s48 + $0xc8] sm:$0xff]
  %v1153 = vld [vmem:[%s48 + $0xd0] sm:$0xff]
  %v1154 = vld [vmem:[%s48 + $0xe8] sm:$0xff]
  %v1155 = vld [vmem:[%s48 + $0xf0] sm:$0xff]
  %v1156 = vld [vmem:[%s48 + $0x108] sm:$0xff]
  %v1157 = vld [vmem:[%s48 + $0x110] sm:$0xff]
  %v1158 = vld [vmem:[%s48 + $0x128] sm:$0xff]
  %v1159 = vld [vmem:[%s48 + $0x130] sm:$0xff]
  %v1160 = vld [vmem:[%s48 + $0x148] sm:$0xff]
  %v1161 = vld [vmem:[%s48 + $0x150] sm:$0xff]
  %v1162 = vld [vmem:[%s48 + $0x168] sm:$0xff]
  %v1163 = vld [vmem:[%s48 + $0x170] sm:$0xff]
  %v1164 = vld [vmem:[%s48 + $0x188] sm:$0xff]
  %v1165 = vld [vmem:[%s48 + $0x190] sm:$0xff]
  %v1166 = vld [vmem:[%s48 + $0x1a8] sm:$0xff]
  %v1167 = vld [vmem:[%s48 + $0x1b0] sm:$0xff]
  %v1168 = vld [vmem:[%s48 + $0x1c8] sm:$0xff]
  %v1169 = vld [vmem:[%s48 + $0x1d0] sm:$0xff]
  %v1170 = vld [vmem:[%s48 + $0x1e8] sm:$0xff]
  %v1171 = vld [vmem:[%s48 + $0x1f0] sm:$0xff]
  %v1172 = vld [vmem:[%s48 + $0x248] sm:$0xff]
  %v1173 = vld [vmem:[%s48 + $0x250] sm:$0xff]
  %v1174 = vld [vmem:[%s48 + $0x268] sm:$0xff]
  %v1175 = vld [vmem:[%s48 + $0x270] sm:$0xff]
  %v1176 = vld [vmem:[%s48 + $0x288] sm:$0xff]
  %v1177 = vld [vmem:[%s48 + $0x290] sm:$0xff]
  %v1178 = vld [vmem:[%s48 + $0x2a8] sm:$0xff]
  %v1179 = vld [vmem:[%s48 + $0x2b0] sm:$0xff]
  %v1180 = vld [vmem:[%s48 + $0x2c8] sm:$0xff]
  %v1181 = vld [vmem:[%s48 + $0x2d0] sm:$0xff]
  %v1182 = vld [vmem:[%s48 + $0x2e8] sm:$0xff]
  %v1183 = vld [vmem:[%s48 + $0x2f0] sm:$0xff]
  %v1184 = vld [vmem:[%s48 + $0x308] sm:$0xff]
  %v1185 = vld [vmem:[%s48 + $0x310] sm:$0xff]
  %v1186 = vld [vmem:[%s48 + $0x328] sm:$0xff]
  %v1187 = vld [vmem:[%s48 + $0x330] sm:$0xff]
  %v1188 = vld [vmem:[%s48 + $0x348] sm:$0xff]
  %v1189 = vld [vmem:[%s48 + $0x350] sm:$0xff]
  %v1190 = vld [vmem:[%s48 + $0x368] sm:$0xff]
  %v1191 = vld [vmem:[%s48 + $0x370] sm:$0xff]
  %v1192 = vld [vmem:[%s48 + $0x388] sm:$0xff]
  %v1193 = vld [vmem:[%s48 + $0x390] sm:$0xff]
  %v1194 = vld [vmem:[%s48 + $0x3a8] sm:$0xff]
  %v1195 = vld [vmem:[%s48 + $0x3b0] sm:$0xff]
  %v1196 = vld [vmem:[%s48 + $0x3c8] sm:$0xff]
  %v1197 = vld [vmem:[%s48 + $0x3d0] sm:$0xff]
  %v1198 = vld [vmem:[%s48 + $0x3e8] sm:$0xff]
  %v1199 = vld [vmem:[%s48 + $0x3f0] sm:$0xff]
  %v1200 = vld [vmem:[%s48 + $0x408] sm:$0xff]
  %v1201 = vld [vmem:[%s48 + $0x410] sm:$0xff]
  %v1202 = vld [vmem:[%s48 + $0x428] sm:$0xff]
  %v1203 = vld [vmem:[%s48 + $0x430] sm:$0xff]
  %v1204 = vpack.c.bf16 %v1141, %v1140
  %v1205 = vpack.c.bf16 %v1143, %v1142
  %v1206 = vpack.c.bf16 %v1145, %v1144
  %v1207 = vpack.c.bf16 %v1147, %v1146
  %v1208 = vpack.c.bf16 %v1149, %v1148
  %v1209 = vpack.c.bf16 %v1151, %v1150
  %v1210 = vpack.c.bf16 %v1153, %v1152
  %v1211 = vpack.c.bf16 %v1155, %v1154
  %v1212 = vpack.c.bf16 %v1157, %v1156
  %v1213 = vpack.c.bf16 %v1159, %v1158
  %v1214 = vpack.c.bf16 %v1161, %v1160
  %v1215 = vpack.c.bf16 %v1163, %v1162
  %v1216 = vpack.c.bf16 %v1165, %v1164
  %v1217 = vpack.c.bf16 %v1167, %v1166
  %v1218 = vpack.c.bf16 %v1169, %v1168
  %v1219 = vpack.c.bf16 %v1171, %v1170
  %v1220 = vpack.c.bf16 %v1173, %v1172
  %v1221 = vpack.c.bf16 %v1175, %v1174
  %v1222 = vpack.c.bf16 %v1177, %v1176
  %v1223 = vpack.c.bf16 %v1179, %v1178
  %v1224 = vpack.c.bf16 %v1181, %v1180
  %v1225 = vpack.c.bf16 %v1183, %v1182
  %v1226 = vpack.c.bf16 %v1185, %v1184
  %v1227 = vpack.c.bf16 %v1187, %v1186
  %v1228 = vpack.c.bf16 %v1189, %v1188
  %v1229 = vpack.c.bf16 %v1191, %v1190
  %v1230 = vpack.c.bf16 %v1193, %v1192
  %v1231 = vpack.c.bf16 %v1195, %v1194
  %v1232 = vpack.c.bf16 %v1197, %v1196
  %v1233 = vpack.c.bf16 %v1199, %v1198
  %v1234 = vpack.c.bf16 %v1201, %v1200
  %v1235 = vpack.c.bf16 %v1203, %v1202
  %1268 = vrot.lane.b32.xlu0 %v1204, 12
  %v1269 = vpop.permute.xlu0 %1268
  %1270 = vrot.lane.b32.xlu0 %v1205, 12
  %v1271 = vpop.permute.xlu0 %1270
  %1272 = vrot.lane.b32.xlu0 %v1206, 12
  %v1273 = vpop.permute.xlu0 %1272
  %1274 = vrot.lane.b32.xlu0 %v1207, 12
  %v1275 = vpop.permute.xlu0 %1274
  %1276 = vrot.lane.b32.xlu0 %v1208, 12
  %v1277 = vpop.permute.xlu0 %1276
  %1278 = vrot.lane.b32.xlu0 %v1209, 12
  %v1279 = vpop.permute.xlu0 %1278
  %1280 = vrot.lane.b32.xlu0 %v1210, 12
  %v1281 = vpop.permute.xlu0 %1280
  %1282 = vrot.lane.b32.xlu0 %v1211, 12
  %v1283 = vpop.permute.xlu0 %1282
  %1284 = vrot.lane.b32.xlu0 %v1212, 12
  %v1285 = vpop.permute.xlu0 %1284
  %1286 = vrot.lane.b32.xlu0 %v1213, 12
  %v1287 = vpop.permute.xlu0 %1286
  %1288 = vrot.lane.b32.xlu0 %v1214, 12
  %v1289 = vpop.permute.xlu0 %1288
  %1290 = vrot.lane.b32.xlu0 %v1215, 12
  %v1291 = vpop.permute.xlu0 %1290
  %1292 = vrot.lane.b32.xlu0 %v1216, 12
  %v1293 = vpop.permute.xlu0 %1292
  %1294 = vrot.lane.b32.xlu0 %v1217, 12
  %v1295 = vpop.permute.xlu0 %1294
  %1296 = vrot.lane.b32.xlu0 %v1218, 12
  %v1297 = vpop.permute.xlu0 %1296
  %1298 = vrot.lane.b32.xlu0 %v1219, 12
  %v1299 = vpop.permute.xlu0 %1298
  %1300 = vrot.lane.b32.xlu0 %v1220, 12
  %v1301 = vpop.permute.xlu0 %1300
  %1302 = vrot.lane.b32.xlu0 %v1221, 12
  %v1303 = vpop.permute.xlu0 %1302
  %1304 = vrot.lane.b32.xlu0 %v1222, 12
  %v1305 = vpop.permute.xlu0 %1304
  %1306 = vrot.lane.b32.xlu0 %v1223, 12
  %v1307 = vpop.permute.xlu0 %1306
  %1308 = vrot.lane.b32.xlu0 %v1224, 12
  %v1309 = vpop.permute.xlu0 %1308
  %1310 = vrot.lane.b32.xlu0 %v1225, 12
  %v1311 = vpop.permute.xlu0 %1310
  %1312 = vrot.lane.b32.xlu0 %v1226, 12
  %v1313 = vpop.permute.xlu0 %1312
  %1314 = vrot.lane.b32.xlu0 %v1227, 12
  %v1315 = vpop.permute.xlu0 %1314
  %1316 = vrot.lane.b32.xlu0 %v1228, 12
  %v1317 = vpop.permute.xlu0 %1316
  %1318 = vrot.lane.b32.xlu0 %v1229, 12
  %v1319 = vpop.permute.xlu0 %1318
  %1320 = vrot.lane.b32.xlu0 %v1230, 12
  %v1321 = vpop.permute.xlu0 %1320
  %1322 = vrot.lane.b32.xlu0 %v1231, 12
  %v1323 = vpop.permute.xlu0 %1322
  %1324 = vrot.lane.b32.xlu0 %v1232, 12
  %v1325 = vpop.permute.xlu0 %1324
  %1326 = vrot.lane.b32.xlu0 %v1233, 12
  %v1327 = vpop.permute.xlu0 %1326
  %1328 = vrot.lane.b32.xlu0 %v1234, 12
  %v1329 = vpop.permute.xlu0 %1328
  %1330 = vrot.lane.b32.xlu0 %v1235, 12
  %v1331 = vpop.permute.xlu0 %1330
  %vm1364 = vcmask 121952
  %1365 = vst.msk [vmem:[#allocation4] sm:$0xff] %vm1364, %v1269
  %1366 = vst.msk [vmem:[#allocation4 + $0x8] sm:$0xff] %vm1364, %v1271
  %1367 = vst.msk [vmem:[#allocation4 + $0x10] sm:$0xff] %vm1364, %v1273
  %1368 = vst.msk [vmem:[#allocation4 + $0x18] sm:$0xff] %vm1364, %v1275
  %1369 = vst.msk [vmem:[#allocation4 + $0x20] sm:$0xff] %vm1364, %v1277
  %1370 = vst.msk [vmem:[#allocation4 + $0x28] sm:$0xff] %vm1364, %v1279
  %1371 = vst.msk [vmem:[#allocation4 + $0x30] sm:$0xff] %vm1364, %v1281
  %1372 = vst.msk [vmem:[#allocation4 + $0x38] sm:$0xff] %vm1364, %v1283
  %1373 = vst.msk [vmem:[#allocation4 + $0x40] sm:$0xff] %vm1364, %v1285
  %1374 = vst.msk [vmem:[#allocation4 + $0x48] sm:$0xff] %vm1364, %v1287
  %1375 = vst.msk [vmem:[#allocation4 + $0x50] sm:$0xff] %vm1364, %v1289
  %1376 = vst.msk [vmem:[#allocation4 + $0x58] sm:$0xff] %vm1364, %v1291
  %1377 = vst.msk [vmem:[#allocation4 + $0x60] sm:$0xff] %vm1364, %v1293
  %1378 = vst.msk [vmem:[#allocation4 + $0x68] sm:$0xff] %vm1364, %v1295
  %1379 = vst.msk [vmem:[#allocation4 + $0x70] sm:$0xff] %vm1364, %v1297
  %1380 = vst.msk [vmem:[#allocation4 + $0x78] sm:$0xff] %vm1364, %v1299
  %1381 = vst.msk [vmem:[#allocation4 + $0x80] sm:$0xff] %vm1364, %v1301
  %1382 = vst.msk [vmem:[#allocation4 + $0x88] sm:$0xff] %vm1364, %v1303
  %1383 = vst.msk [vmem:[#allocation4 + $0x90] sm:$0xff] %vm1364, %v1305
  %1384 = vst.msk [vmem:[#allocation4 + $0x98] sm:$0xff] %vm1364, %v1307
  %1385 = vst.msk [vmem:[#allocation4 + $0xa0] sm:$0xff] %vm1364, %v1309
  %1386 = vst.msk [vmem:[#allocation4 + $0xa8] sm:$0xff] %vm1364, %v1311
  %1387 = vst.msk [vmem:[#allocation4 + $0xb0] sm:$0xff] %vm1364, %v1313
  %1388 = vst.msk [vmem:[#allocation4 + $0xb8] sm:$0xff] %vm1364, %v1315
  %1389 = vst.msk [vmem:[#allocation4 + $0xc0] sm:$0xff] %vm1364, %v1317
  %1390 = vst.msk [vmem:[#allocation4 + $0xc8] sm:$0xff] %vm1364, %v1319
  %1391 = vst.msk [vmem:[#allocation4 + $0xd0] sm:$0xff] %vm1364, %v1321
  %1392 = vst.msk [vmem:[#allocation4 + $0xd8] sm:$0xff] %vm1364, %v1323
  %1393 = vst.msk [vmem:[#allocation4 + $0xe0] sm:$0xff] %vm1364, %v1325
  %1394 = vst.msk [vmem:[#allocation4 + $0xe8] sm:$0xff] %vm1364, %v1327
  %1395 = vst.msk [vmem:[#allocation4 + $0xf0] sm:$0xff] %vm1364, %v1329
  %1396 = vst.msk [vmem:[#allocation4 + $0xf8] sm:$0xff] %vm1364, %v1331
  %v1397 = vld [vmem:[%s48 + $0x9] sm:$0xff]
  %v1398 = vld [vmem:[%s48 + $0x11] sm:$0xff]
  %v1399 = vld [vmem:[%s48 + $0x29] sm:$0xff]
  %v1400 = vld [vmem:[%s48 + $0x31] sm:$0xff]
  %v1401 = vld [vmem:[%s48 + $0x49] sm:$0xff]
  %v1402 = vld [vmem:[%s48 + $0x51] sm:$0xff]
  %v1403 = vld [vmem:[%s48 + $0x69] sm:$0xff]
  %v1404 = vld [vmem:[%s48 + $0x71] sm:$0xff]
  %v1405 = vld [vmem:[%s48 + $0x89] sm:$0xff]
  %v1406 = vld [vmem:[%s48 + $0x91] sm:$0xff]
  %v1407 = vld [vmem:[%s48 + $0xa9] sm:$0xff]
  %v1408 = vld [vmem:[%s48 + $0xb1] sm:$0xff]
  %v1409 = vld [vmem:[%s48 + $0xc9] sm:$0xff]
  %v1410 = vld [vmem:[%s48 + $0xd1] sm:$0xff]
  %v1411 = vld [vmem:[%s48 + $0xe9] sm:$0xff]
  %v1412 = vld [vmem:[%s48 + $0xf1] sm:$0xff]
  %v1413 = vld [vmem:[%s48 + $0x109] sm:$0xff]
  %v1414 = vld [vmem:[%s48 + $0x111] sm:$0xff]
  %v1415 = vld [vmem:[%s48 + $0x129] sm:$0xff]
  %v1416 = vld [vmem:[%s48 + $0x131] sm:$0xff]
  %v1417 = vld [vmem:[%s48 + $0x149] sm:$0xff]
  %v1418 = vld [vmem:[%s48 + $0x151] sm:$0xff]
  %v1419 = vld [vmem:[%s48 + $0x169] sm:$0xff]
  %v1420 = vld [vmem:[%s48 + $0x171] sm:$0xff]
  %v1421 = vld [vmem:[%s48 + $0x189] sm:$0xff]
  %v1422 = vld [vmem:[%s48 + $0x191] sm:$0xff]
  %v1423 = vld [vmem:[%s48 + $0x1a9] sm:$0xff]
  %v1424 = vld [vmem:[%s48 + $0x1b1] sm:$0xff]
  %v1425 = vld [vmem:[%s48 + $0x1c9] sm:$0xff]
  %v1426 = vld [vmem:[%s48 + $0x1d1] sm:$0xff]
  %v1427 = vld [vmem:[%s48 + $0x1e9] sm:$0xff]
  %v1428 = vld [vmem:[%s48 + $0x1f1] sm:$0xff]
  %v1429 = vld [vmem:[%s48 + $0x249] sm:$0xff]
  %v1430 = vld [vmem:[%s48 + $0x251] sm:$0xff]
  %v1431 = vld [vmem:[%s48 + $0x269] sm:$0xff]
  %v1432 = vld [vmem:[%s48 + $0x271] sm:$0xff]
  %v1433 = vld [vmem:[%s48 + $0x289] sm:$0xff]
  %v1434 = vld [vmem:[%s48 + $0x291] sm:$0xff]
  %v1435 = vld [vmem:[%s48 + $0x2a9] sm:$0xff]
  %v1436 = vld [vmem:[%s48 + $0x2b1] sm:$0xff]
  %v1437 = vld [vmem:[%s48 + $0x2c9] sm:$0xff]
  %v1438 = vld [vmem:[%s48 + $0x2d1] sm:$0xff]
  %v1439 = vld [vmem:[%s48 + $0x2e9] sm:$0xff]
  %v1440 = vld [vmem:[%s48 + $0x2f1] sm:$0xff]
  %v1441 = vld [vmem:[%s48 + $0x309] sm:$0xff]
  %v1442 = vld [vmem:[%s48 + $0x311] sm:$0xff]
  %v1443 = vld [vmem:[%s48 + $0x329] sm:$0xff]
  %v1444 = vld [vmem:[%s48 + $0x331] sm:$0xff]
  %v1445 = vld [vmem:[%s48 + $0x349] sm:$0xff]
  %v1446 = vld [vmem:[%s48 + $0x351] sm:$0xff]
  %v1447 = vld [vmem:[%s48 + $0x369] sm:$0xff]
  %v1448 = vld [vmem:[%s48 + $0x371] sm:$0xff]
  %v1449 = vld [vmem:[%s48 + $0x389] sm:$0xff]
  %v1450 = vld [vmem:[%s48 + $0x391] sm:$0xff]
  %v1451 = vld [vmem:[%s48 + $0x3a9] sm:$0xff]
  %v1452 = vld [vmem:[%s48 + $0x3b1] sm:$0xff]
  %v1453 = vld [vmem:[%s48 + $0x3c9] sm:$0xff]
  %v1454 = vld [vmem:[%s48 + $0x3d1] sm:$0xff]
  %v1455 = vld [vmem:[%s48 + $0x3e9] sm:$0xff]
  %v1456 = vld [vmem:[%s48 + $0x3f1] sm:$0xff]
  %v1457 = vld [vmem:[%s48 + $0x409] sm:$0xff]
  %v1458 = vld [vmem:[%s48 + $0x411] sm:$0xff]
  %v1459 = vld [vmem:[%s48 + $0x429] sm:$0xff]
  %v1460 = vld [vmem:[%s48 + $0x431] sm:$0xff]
  %v1461 = vpack.c.bf16 %v1398, %v1397
  %v1462 = vpack.c.bf16 %v1400, %v1399
  %v1463 = vpack.c.bf16 %v1402, %v1401
  %v1464 = vpack.c.bf16 %v1404, %v1403
  %v1465 = vpack.c.bf16 %v1406, %v1405
  %v1466 = vpack.c.bf16 %v1408, %v1407
  %v1467 = vpack.c.bf16 %v1410, %v1409
  %v1468 = vpack.c.bf16 %v1412, %v1411
  %v1469 = vpack.c.bf16 %v1414, %v1413
  %v1470 = vpack.c.bf16 %v1416, %v1415
  %v1471 = vpack.c.bf16 %v1418, %v1417
  %v1472 = vpack.c.bf16 %v1420, %v1419
  %v1473 = vpack.c.bf16 %v1422, %v1421
  %v1474 = vpack.c.bf16 %v1424, %v1423
  %v1475 = vpack.c.bf16 %v1426, %v1425
  %v1476 = vpack.c.bf16 %v1428, %v1427
  %v1477 = vpack.c.bf16 %v1430, %v1429
  %v1478 = vpack.c.bf16 %v1432, %v1431
  %v1479 = vpack.c.bf16 %v1434, %v1433
  %v1480 = vpack.c.bf16 %v1436, %v1435
  %v1481 = vpack.c.bf16 %v1438, %v1437
  %v1482 = vpack.c.bf16 %v1440, %v1439
  %v1483 = vpack.c.bf16 %v1442, %v1441
  %v1484 = vpack.c.bf16 %v1444, %v1443
  %v1485 = vpack.c.bf16 %v1446, %v1445
  %v1486 = vpack.c.bf16 %v1448, %v1447
  %v1487 = vpack.c.bf16 %v1450, %v1449
  %v1488 = vpack.c.bf16 %v1452, %v1451
  %v1489 = vpack.c.bf16 %v1454, %v1453
  %v1490 = vpack.c.bf16 %v1456, %v1455
  %v1491 = vpack.c.bf16 %v1458, %v1457
  %v1492 = vpack.c.bf16 %v1460, %v1459
  %1525 = vrot.lane.b32.xlu0 %v1461, 15
  %v1526 = vpop.permute.xlu0 %1525
  %1527 = vrot.lane.b32.xlu0 %v1462, 15
  %v1528 = vpop.permute.xlu0 %1527
  %1529 = vrot.lane.b32.xlu0 %v1463, 15
  %v1530 = vpop.permute.xlu0 %1529
  %1531 = vrot.lane.b32.xlu0 %v1464, 15
  %v1532 = vpop.permute.xlu0 %1531
  %1533 = vrot.lane.b32.xlu0 %v1465, 15
  %v1534 = vpop.permute.xlu0 %1533
  %1535 = vrot.lane.b32.xlu0 %v1466, 15
  %v1536 = vpop.permute.xlu0 %1535
  %1537 = vrot.lane.b32.xlu0 %v1467, 15
  %v1538 = vpop.permute.xlu0 %1537
  %1539 = vrot.lane.b32.xlu0 %v1468, 15
  %v1540 = vpop.permute.xlu0 %1539
  %1541 = vrot.lane.b32.xlu0 %v1469, 15
  %v1542 = vpop.permute.xlu0 %1541
  %1543 = vrot.lane.b32.xlu0 %v1470, 15
  %v1544 = vpop.permute.xlu0 %1543
  %1545 = vrot.lane.b32.xlu0 %v1471, 15
  %v1546 = vpop.permute.xlu0 %1545
  %1547 = vrot.lane.b32.xlu0 %v1472, 15
  %v1548 = vpop.permute.xlu0 %1547
  %1549 = vrot.lane.b32.xlu0 %v1473, 15
  %v1550 = vpop.permute.xlu0 %1549
  %1551 = vrot.lane.b32.xlu0 %v1474, 15
  %v1552 = vpop.permute.xlu0 %1551
  %1553 = vrot.lane.b32.xlu0 %v1475, 15
  %v1554 = vpop.permute.xlu0 %1553
  %1555 = vrot.lane.b32.xlu0 %v1476, 15
  %v1556 = vpop.permute.xlu0 %1555
  %1557 = vrot.lane.b32.xlu0 %v1477, 15
  %v1558 = vpop.permute.xlu0 %1557
  %1559 = vrot.lane.b32.xlu0 %v1478, 15
  %v1560 = vpop.permute.xlu0 %1559
  %1561 = vrot.lane.b32.xlu0 %v1479, 15
  %v1562 = vpop.permute.xlu0 %1561
  %1563 = vrot.lane.b32.xlu0 %v1480, 15
  %v1564 = vpop.permute.xlu0 %1563
  %1565 = vrot.lane.b32.xlu0 %v1481, 15
  %v1566 = vpop.permute.xlu0 %1565
  %1567 = vrot.lane.b32.xlu0 %v1482, 15
  %v1568 = vpop.permute.xlu0 %1567
  %1569 = vrot.lane.b32.xlu0 %v1483, 15
  %v1570 = vpop.permute.xlu0 %1569
  %1571 = vrot.lane.b32.xlu0 %v1484, 15
  %v1572 = vpop.permute.xlu0 %1571
  %1573 = vrot.lane.b32.xlu0 %v1485, 15
  %v1574 = vpop.permute.xlu0 %1573
  %1575 = vrot.lane.b32.xlu0 %v1486, 15
  %v1576 = vpop.permute.xlu0 %1575
  %1577 = vrot.lane.b32.xlu0 %v1487, 15
  %v1578 = vpop.permute.xlu0 %1577
  %1579 = vrot.lane.b32.xlu0 %v1488, 15
  %v1580 = vpop.permute.xlu0 %1579
  %1581 = vrot.lane.b32.xlu0 %v1489, 15
  %v1582 = vpop.permute.xlu0 %1581
  %1583 = vrot.lane.b32.xlu0 %v1490, 15
  %v1584 = vpop.permute.xlu0 %1583
  %1585 = vrot.lane.b32.xlu0 %v1491, 15
  %v1586 = vpop.permute.xlu0 %1585
  %1587 = vrot.lane.b32.xlu0 %v1492, 15
  %v1588 = vpop.permute.xlu0 %1587
  %vm1621 = vcmask 146552
  %1622 = vst.msk [vmem:[#allocation4] sm:$0xff] %vm1621, %v1526
  %1623 = vst.msk [vmem:[#allocation4 + $0x8] sm:$0xff] %vm1621, %v1528
  %1624 = vst.msk [vmem:[#allocation4 + $0x10] sm:$0xff] %vm1621, %v1530
  %1625 = vst.msk [vmem:[#allocation4 + $0x18] sm:$0xff] %vm1621, %v1532
  %1626 = vst.msk [vmem:[#allocation4 + $0x20] sm:$0xff] %vm1621, %v1534
  %1627 = vst.msk [vmem:[#allocation4 + $0x28] sm:$0xff] %vm1621, %v1536
  %1628 = vst.msk [vmem:[#allocation4 + $0x30] sm:$0xff] %vm1621, %v1538
  %1629 = vst.msk [vmem:[#allocation4 + $0x38] sm:$0xff] %vm1621, %v1540
  %1630 = vst.msk [vmem:[#allocation4 + $0x40] sm:$0xff] %vm1621, %v1542
  %1631 = vst.msk [vmem:[#allocation4 + $0x48] sm:$0xff] %vm1621, %v1544
  %1632 = vst.msk [vmem:[#allocation4 + $0x50] sm:$0xff] %vm1621, %v1546
  %1633 = vst.msk [vmem:[#allocation4 + $0x58] sm:$0xff] %vm1621, %v1548
  %1634 = vst.msk [vmem:[#allocation4 + $0x60] sm:$0xff] %vm1621, %v1550
  %1635 = vst.msk [vmem:[#allocation4 + $0x68] sm:$0xff] %vm1621, %v1552
  %1636 = vst.msk [vmem:[#allocation4 + $0x70] sm:$0xff] %vm1621, %v1554
  %1637 = vst.msk [vmem:[#allocation4 + $0x78] sm:$0xff] %vm1621, %v1556
  %1638 = vst.msk [vmem:[#allocation4 + $0x80] sm:$0xff] %vm1621, %v1558
  %1639 = vst.msk [vmem:[#allocation4 + $0x88] sm:$0xff] %vm1621, %v1560
  %1640 = vst.msk [vmem:[#allocation4 + $0x90] sm:$0xff] %vm1621, %v1562
  %1641 = vst.msk [vmem:[#allocation4 + $0x98] sm:$0xff] %vm1621, %v1564
  %1642 = vst.msk [vmem:[#allocation4 + $0xa0] sm:$0xff] %vm1621, %v1566
  %1643 = vst.msk [vmem:[#allocation4 + $0xa8] sm:$0xff] %vm1621, %v1568
  %1644 = vst.msk [vmem:[#allocation4 + $0xb0] sm:$0xff] %vm1621, %v1570
  %1645 = vst.msk [vmem:[#allocation4 + $0xb8] sm:$0xff] %vm1621, %v1572
  %1646 = vst.msk [vmem:[#allocation4 + $0xc0] sm:$0xff] %vm1621, %v1574
  %1647 = vst.msk [vmem:[#allocation4 + $0xc8] sm:$0xff] %vm1621, %v1576
  %1648 = vst.msk [vmem:[#allocation4 + $0xd0] sm:$0xff] %vm1621, %v1578
  %1649 = vst.msk [vmem:[#allocation4 + $0xd8] sm:$0xff] %vm1621, %v1580
  %1650 = vst.msk [vmem:[#allocation4 + $0xe0] sm:$0xff] %vm1621, %v1582
  %1651 = vst.msk [vmem:[#allocation4 + $0xe8] sm:$0xff] %vm1621, %v1584
  %1652 = vst.msk [vmem:[#allocation4 + $0xf0] sm:$0xff] %vm1621, %v1586
  %1653 = vst.msk [vmem:[#allocation4 + $0xf8] sm:$0xff] %vm1621, %v1588
  %s1654 = scalar_lea.vmem [#allocation2], 64
  %v1655 = vld [vmem:[%s1654 + $0x7] sm:$0xff]
  %v1656 = vld [vmem:[%s1654 + $0xf] sm:$0xff]
  %v1657 = vld [vmem:[%s1654 + $0x27] sm:$0xff]
  %v1658 = vld [vmem:[%s1654 + $0x2f] sm:$0xff]
  %v1659 = vld [vmem:[%s1654 + $0x47] sm:$0xff]
  %v1660 = vld [vmem:[%s1654 + $0x4f] sm:$0xff]
  %v1661 = vld [vmem:[%s1654 + $0x67] sm:$0xff]
  %v1662 = vld [vmem:[%s1654 + $0x6f] sm:$0xff]
  %v1663 = vld [vmem:[%s1654 + $0x87] sm:$0xff]
  %v1664 = vld [vmem:[%s1654 + $0x8f] sm:$0xff]
  %v1665 = vld [vmem:[%s1654 + $0xa7] sm:$0xff]
  %v1666 = vld [vmem:[%s1654 + $0xaf] sm:$0xff]
  %v1667 = vld [vmem:[%s1654 + $0xc7] sm:$0xff]
  %v1668 = vld [vmem:[%s1654 + $0xcf] sm:$0xff]
  %v1669 = vld [vmem:[%s1654 + $0xe7] sm:$0xff]
  %v1670 = vld [vmem:[%s1654 + $0xef] sm:$0xff]
  %v1671 = vld [vmem:[%s1654 + $0x107] sm:$0xff]
  %v1672 = vld [vmem:[%s1654 + $0x10f] sm:$0xff]
  %v1673 = vld [vmem:[%s1654 + $0x127] sm:$0xff]
  %v1674 = vld [vmem:[%s1654 + $0x12f] sm:$0xff]
  %v1675 = vld [vmem:[%s1654 + $0x147] sm:$0xff]
  %v1676 = vld [vmem:[%s1654 + $0x14f] sm:$0xff]
  %v1677 = vld [vmem:[%s1654 + $0x167] sm:$0xff]
  %v1678 = vld [vmem:[%s1654 + $0x16f] sm:$0xff]
  %v1679 = vld [vmem:[%s1654 + $0x187] sm:$0xff]
  %v1680 = vld [vmem:[%s1654 + $0x18f] sm:$0xff]
  %v1681 = vld [vmem:[%s1654 + $0x1a7] sm:$0xff]
  %v1682 = vld [vmem:[%s1654 + $0x1af] sm:$0xff]
  %v1683 = vld [vmem:[%s1654 + $0x1c7] sm:$0xff]
  %v1684 = vld [vmem:[%s1654 + $0x1cf] sm:$0xff]
  %v1685 = vld [vmem:[%s1654 + $0x1e7] sm:$0xff]
  %v1686 = vld [vmem:[%s1654 + $0x1ef] sm:$0xff]
  %v1687 = vld [vmem:[%s1654 + $0x247] sm:$0xff]
  %v1688 = vld [vmem:[%s1654 + $0x24f] sm:$0xff]
  %v1689 = vld [vmem:[%s1654 + $0x267] sm:$0xff]
  %v1690 = vld [vmem:[%s1654 + $0x26f] sm:$0xff]
  %v1691 = vld [vmem:[%s1654 + $0x287] sm:$0xff]
  %v1692 = vld [vmem:[%s1654 + $0x28f] sm:$0xff]
  %v1693 = vld [vmem:[%s1654 + $0x2a7] sm:$0xff]
  %v1694 = vld [vmem:[%s1654 + $0x2af] sm:$0xff]
  %v1695 = vld [vmem:[%s1654 + $0x2c7] sm:$0xff]
  %v1696 = vld [vmem:[%s1654 + $0x2cf] sm:$0xff]
  %v1697 = vld [vmem:[%s1654 + $0x2e7] sm:$0xff]
  %v1698 = vld [vmem:[%s1654 + $0x2ef] sm:$0xff]
  %v1699 = vld [vmem:[%s1654 + $0x307] sm:$0xff]
  %v1700 = vld [vmem:[%s1654 + $0x30f] sm:$0xff]
  %v1701 = vld [vmem:[%s1654 + $0x327] sm:$0xff]
  %v1702 = vld [vmem:[%s1654 + $0x32f] sm:$0xff]
  %v1703 = vld [vmem:[%s1654 + $0x347] sm:$0xff]
  %v1704 = vld [vmem:[%s1654 + $0x34f] sm:$0xff]
  %v1705 = vld [vmem:[%s1654 + $0x367] sm:$0xff]
  %v1706 = vld [vmem:[%s1654 + $0x36f] sm:$0xff]
  %v1707 = vld [vmem:[%s1654 + $0x387] sm:$0xff]
  %v1708 = vld [vmem:[%s1654 + $0x38f] sm:$0xff]
  %v1709 = vld [vmem:[%s1654 + $0x3a7] sm:$0xff]
  %v1710 = vld [vmem:[%s1654 + $0x3af] sm:$0xff]
  %v1711 = vld [vmem:[%s1654 + $0x3c7] sm:$0xff]
  %v1712 = vld [vmem:[%s1654 + $0x3cf] sm:$0xff]
  %v1713 = vld [vmem:[%s1654 + $0x3e7] sm:$0xff]
  %v1714 = vld [vmem:[%s1654 + $0x3ef] sm:$0xff]
  %v1715 = vld [vmem:[%s1654 + $0x407] sm:$0xff]
  %v1716 = vld [vmem:[%s1654 + $0x40f] sm:$0xff]
  %v1717 = vld [vmem:[%s1654 + $0x427] sm:$0xff]
  %v1718 = vld [vmem:[%s1654 + $0x42f] sm:$0xff]
  %v1719 = vpack.c.bf16 %v1656, %v1655
  %v1720 = vpack.c.bf16 %v1658, %v1657
  %v1721 = vpack.c.bf16 %v1660, %v1659
  %v1722 = vpack.c.bf16 %v1662, %v1661
  %v1723 = vpack.c.bf16 %v1664, %v1663
  %v1724 = vpack.c.bf16 %v1666, %v1665
  %v1725 = vpack.c.bf16 %v1668, %v1667
  %v1726 = vpack.c.bf16 %v1670, %v1669
  %v1727 = vpack.c.bf16 %v1672, %v1671
  %v1728 = vpack.c.bf16 %v1674, %v1673
  %v1729 = vpack.c.bf16 %v1676, %v1675
  %v1730 = vpack.c.bf16 %v1678, %v1677
  %v1731 = vpack.c.bf16 %v1680, %v1679
  %v1732 = vpack.c.bf16 %v1682, %v1681
  %v1733 = vpack.c.bf16 %v1684, %v1683
  %v1734 = vpack.c.bf16 %v1686, %v1685
  %v1735 = vpack.c.bf16 %v1688, %v1687
  %v1736 = vpack.c.bf16 %v1690, %v1689
  %v1737 = vpack.c.bf16 %v1692, %v1691
  %v1738 = vpack.c.bf16 %v1694, %v1693
  %v1739 = vpack.c.bf16 %v1696, %v1695
  %v1740 = vpack.c.bf16 %v1698, %v1697
  %v1741 = vpack.c.bf16 %v1700, %v1699
  %v1742 = vpack.c.bf16 %v1702, %v1701
  %v1743 = vpack.c.bf16 %v1704, %v1703
  %v1744 = vpack.c.bf16 %v1706, %v1705
  %v1745 = vpack.c.bf16 %v1708, %v1707
  %v1746 = vpack.c.bf16 %v1710, %v1709
  %v1747 = vpack.c.bf16 %v1712, %v1711
  %v1748 = vpack.c.bf16 %v1714, %v1713
  %v1749 = vpack.c.bf16 %v1716, %v1715
  %v1750 = vpack.c.bf16 %v1718, %v1717
  %1783 = vrot.lane.b32.xlu0 %v1719, 18
  %v1784 = vpop.permute.xlu0 %1783
  %1785 = vrot.lane.b32.xlu0 %v1720, 18
  %v1786 = vpop.permute.xlu0 %1785
  %1787 = vrot.lane.b32.xlu0 %v1721, 18
  %v1788 = vpop.permute.xlu0 %1787
  %1789 = vrot.lane.b32.xlu0 %v1722, 18
  %v1790 = vpop.permute.xlu0 %1789
  %1791 = vrot.lane.b32.xlu0 %v1723, 18
  %v1792 = vpop.permute.xlu0 %1791
  %1793 = vrot.lane.b32.xlu0 %v1724, 18
  %v1794 = vpop.permute.xlu0 %1793
  %1795 = vrot.lane.b32.xlu0 %v1725, 18
  %v1796 = vpop.permute.xlu0 %1795
  %1797 = vrot.lane.b32.xlu0 %v1726, 18
  %v1798 = vpop.permute.xlu0 %1797
  %1799 = vrot.lane.b32.xlu0 %v1727, 18
  %v1800 = vpop.permute.xlu0 %1799
  %1801 = vrot.lane.b32.xlu0 %v1728, 18
  %v1802 = vpop.permute.xlu0 %1801
  %1803 = vrot.lane.b32.xlu0 %v1729, 18
  %v1804 = vpop.permute.xlu0 %1803
  %1805 = vrot.lane.b32.xlu0 %v1730, 18
  %v1806 = vpop.permute.xlu0 %1805
  %1807 = vrot.lane.b32.xlu0 %v1731, 18
  %v1808 = vpop.permute.xlu0 %1807
  %1809 = vrot.lane.b32.xlu0 %v1732, 18
  %v1810 = vpop.permute.xlu0 %1809
  %1811 = vrot.lane.b32.xlu0 %v1733, 18
  %v1812 = vpop.permute.xlu0 %1811
  %1813 = vrot.lane.b32.xlu0 %v1734, 18
  %v1814 = vpop.permute.xlu0 %1813
  %1815 = vrot.lane.b32.xlu0 %v1735, 18
  %v1816 = vpop.permute.xlu0 %1815
  %1817 = vrot.lane.b32.xlu0 %v1736, 18
  %v1818 = vpop.permute.xlu0 %1817
  %1819 = vrot.lane.b32.xlu0 %v1737, 18
  %v1820 = vpop.permute.xlu0 %1819
  %1821 = vrot.lane.b32.xlu0 %v1738, 18
  %v1822 = vpop.permute.xlu0 %1821
  %1823 = vrot.lane.b32.xlu0 %v1739, 18
  %v1824 = vpop.permute.xlu0 %1823
  %1825 = vrot.lane.b32.xlu0 %v1740, 18
  %v1826 = vpop.permute.xlu0 %1825
  %1827 = vrot.lane.b32.xlu0 %v1741, 18
  %v1828 = vpop.permute.xlu0 %1827
  %1829 = vrot.lane.b32.xlu0 %v1742, 18
  %v1830 = vpop.permute.xlu0 %1829
  %1831 = vrot.lane.b32.xlu0 %v1743, 18
  %v1832 = vpop.permute.xlu0 %1831
  %1833 = vrot.lane.b32.xlu0 %v1744, 18
  %v1834 = vpop.permute.xlu0 %1833
  %1835 = vrot.lane.b32.xlu0 %v1745, 18
  %v1836 = vpop.permute.xlu0 %1835
  %1837 = vrot.lane.b32.xlu0 %v1746, 18
  %v1838 = vpop.permute.xlu0 %1837
  %1839 = vrot.lane.b32.xlu0 %v1747, 18
  %v1840 = vpop.permute.xlu0 %1839
  %1841 = vrot.lane.b32.xlu0 %v1748, 18
  %v1842 = vpop.permute.xlu0 %1841
  %1843 = vrot.lane.b32.xlu0 %v1749, 18
  %v1844 = vpop.permute.xlu0 %1843
  %1845 = vrot.lane.b32.xlu0 %v1750, 18
  %v1846 = vpop.permute.xlu0 %1845
  %vm1879 = vcmask 171152
  %1880 = vst.msk [vmem:[#allocation4] sm:$0xff] %vm1879, %v1784
  %1881 = vst.msk [vmem:[#allocation4 + $0x8] sm:$0xff] %vm1879, %v1786
  %1882 = vst.msk [vmem:[#allocation4 + $0x10] sm:$0xff] %vm1879, %v1788
  %1883 = vst.msk [vmem:[#allocation4 + $0x18] sm:$0xff] %vm1879, %v1790
  %1884 = vst.msk [vmem:[#allocation4 + $0x20] sm:$0xff] %vm1879, %v1792
  %1885 = vst.msk [vmem:[#allocation4 + $0x28] sm:$0xff] %vm1879, %v1794
  %1886 = vst.msk [vmem:[#allocation4 + $0x30] sm:$0xff] %vm1879, %v1796
  %1887 = vst.msk [vmem:[#allocation4 + $0x38] sm:$0xff] %vm1879, %v1798
  %1888 = vst.msk [vmem:[#allocation4 + $0x40] sm:$0xff] %vm1879, %v1800
  %1889 = vst.msk [vmem:[#allocation4 + $0x48] sm:$0xff] %vm1879, %v1802
  %1890 = vst.msk [vmem:[#allocation4 + $0x50] sm:$0xff] %vm1879, %v1804
  %1891 = vst.msk [vmem:[#allocation4 + $0x58] sm:$0xff] %vm1879, %v1806
  %1892 = vst.msk [vmem:[#allocation4 + $0x60] sm:$0xff] %vm1879, %v1808
  %1893 = vst.msk [vmem:[#allocation4 + $0x68] sm:$0xff] %vm1879, %v1810
  %1894 = vst.msk [vmem:[#allocation4 + $0x70] sm:$0xff] %vm1879, %v1812
  %1895 = vst.msk [vmem:[#allocation4 + $0x78] sm:$0xff] %vm1879, %v1814
  %1896 = vst.msk [vmem:[#allocation4 + $0x80] sm:$0xff] %vm1879, %v1816
  %1897 = vst.msk [vmem:[#allocation4 + $0x88] sm:$0xff] %vm1879, %v1818
  %1898 = vst.msk [vmem:[#allocation4 + $0x90] sm:$0xff] %vm1879, %v1820
  %1899 = vst.msk [vmem:[#allocation4 + $0x98] sm:$0xff] %vm1879, %v1822
  %1900 = vst.msk [vmem:[#allocation4 + $0xa0] sm:$0xff] %vm1879, %v1824
  %1901 = vst.msk [vmem:[#allocation4 + $0xa8] sm:$0xff] %vm1879, %v1826
  %1902 = vst.msk [vmem:[#allocation4 + $0xb0] sm:$0xff] %vm1879, %v1828
  %1903 = vst.msk [vmem:[#allocation4 + $0xb8] sm:$0xff] %vm1879, %v1830
  %1904 = vst.msk [vmem:[#allocation4 + $0xc0] sm:$0xff] %vm1879, %v1832
  %1905 = vst.msk [vmem:[#allocation4 + $0xc8] sm:$0xff] %vm1879, %v1834
  %1906 = vst.msk [vmem:[#allocation4 + $0xd0] sm:$0xff] %vm1879, %v1836
  %1907 = vst.msk [vmem:[#allocation4 + $0xd8] sm:$0xff] %vm1879, %v1838
  %1908 = vst.msk [vmem:[#allocation4 + $0xe0] sm:$0xff] %vm1879, %v1840
  %1909 = vst.msk [vmem:[#allocation4 + $0xe8] sm:$0xff] %vm1879, %v1842
  %1910 = vst.msk [vmem:[#allocation4 + $0xf0] sm:$0xff] %vm1879, %v1844
  %1911 = vst.msk [vmem:[#allocation4 + $0xf8] sm:$0xff] %vm1879, %v1846
  %v1912 = vld [vmem:[%s1654 + $0x8] sm:$0xff]
  %v1913 = vld [vmem:[%s1654 + $0x10] sm:$0xff]
  %v1914 = vld [vmem:[%s1654 + $0x28] sm:$0xff]
  %v1915 = vld [vmem:[%s1654 + $0x30] sm:$0xff]
  %v1916 = vld [vmem:[%s1654 + $0x48] sm:$0xff]
  %v1917 = vld [vmem:[%s1654 + $0x50] sm:$0xff]
  %v1918 = vld [vmem:[%s1654 + $0x68] sm:$0xff]
  %v1919 = vld [vmem:[%s1654 + $0x70] sm:$0xff]
  %v1920 = vld [vmem:[%s1654 + $0x88] sm:$0xff]
  %v1921 = vld [vmem:[%s1654 + $0x90] sm:$0xff]
  %v1922 = vld [vmem:[%s1654 + $0xa8] sm:$0xff]
  %v1923 = vld [vmem:[%s1654 + $0xb0] sm:$0xff]
  %v1924 = vld [vmem:[%s1654 + $0xc8] sm:$0xff]
  %v1925 = vld [vmem:[%s1654 + $0xd0] sm:$0xff]
  %v1926 = vld [vmem:[%s1654 + $0xe8] sm:$0xff]
  %v1927 = vld [vmem:[%s1654 + $0xf0] sm:$0xff]
  %v1928 = vld [vmem:[%s1654 + $0x108] sm:$0xff]
  %v1929 = vld [vmem:[%s1654 + $0x110] sm:$0xff]
  %v1930 = vld [vmem:[%s1654 + $0x128] sm:$0xff]
  %v1931 = vld [vmem:[%s1654 + $0x130] sm:$0xff]
  %v1932 = vld [vmem:[%s1654 + $0x148] sm:$0xff]
  %v1933 = vld [vmem:[%s1654 + $0x150] sm:$0xff]
  %v1934 = vld [vmem:[%s1654 + $0x168] sm:$0xff]
  %v1935 = vld [vmem:[%s1654 + $0x170] sm:$0xff]
  %v1936 = vld [vmem:[%s1654 + $0x188] sm:$0xff]
  %v1937 = vld [vmem:[%s1654 + $0x190] sm:$0xff]
  %v1938 = vld [vmem:[%s1654 + $0x1a8] sm:$0xff]
  %v1939 = vld [vmem:[%s1654 + $0x1b0] sm:$0xff]
  %v1940 = vld [vmem:[%s1654 + $0x1c8] sm:$0xff]
  %v1941 = vld [vmem:[%s1654 + $0x1d0] sm:$0xff]
  %v1942 = vld [vmem:[%s1654 + $0x1e8] sm:$0xff]
  %v1943 = vld [vmem:[%s1654 + $0x1f0] sm:$0xff]
  %v1944 = vld [vmem:[%s1654 + $0x248] sm:$0xff]
  %v1945 = vld [vmem:[%s1654 + $0x250] sm:$0xff]
  %v1946 = vld [vmem:[%s1654 + $0x268] sm:$0xff]
  %v1947 = vld [vmem:[%s1654 + $0x270] sm:$0xff]
  %v1948 = vld [vmem:[%s1654 + $0x288] sm:$0xff]
  %v1949 = vld [vmem:[%s1654 + $0x290] sm:$0xff]
  %v1950 = vld [vmem:[%s1654 + $0x2a8] sm:$0xff]
  %v1951 = vld [vmem:[%s1654 + $0x2b0] sm:$0xff]
  %v1952 = vld [vmem:[%s1654 + $0x2c8] sm:$0xff]
  %v1953 = vld [vmem:[%s1654 + $0x2d0] sm:$0xff]
  %v1954 = vld [vmem:[%s1654 + $0x2e8] sm:$0xff]
  %v1955 = vld [vmem:[%s1654 + $0x2f0] sm:$0xff]
  %v1956 = vld [vmem:[%s1654 + $0x308] sm:$0xff]
  %v1957 = vld [vmem:[%s1654 + $0x310] sm:$0xff]
  %v1958 = vld [vmem:[%s1654 + $0x328] sm:$0xff]
  %v1959 = vld [vmem:[%s1654 + $0x330] sm:$0xff]
  %v1960 = vld [vmem:[%s1654 + $0x348] sm:$0xff]
  %v1961 = vld [vmem:[%s1654 + $0x350] sm:$0xff]
  %v1962 = vld [vmem:[%s1654 + $0x368] sm:$0xff]
  %v1963 = vld [vmem:[%s1654 + $0x370] sm:$0xff]
  %v1964 = vld [vmem:[%s1654 + $0x388] sm:$0xff]
  %v1965 = vld [vmem:[%s1654 + $0x390] sm:$0xff]
  %v1966 = vld [vmem:[%s1654 + $0x3a8] sm:$0xff]
  %v1967 = vld [vmem:[%s1654 + $0x3b0] sm:$0xff]
  %v1968 = vld [vmem:[%s1654 + $0x3c8] sm:$0xff]
  %v1969 = vld [vmem:[%s1654 + $0x3d0] sm:$0xff]
  %v1970 = vld [vmem:[%s1654 + $0x3e8] sm:$0xff]
  %v1971 = vld [vmem:[%s1654 + $0x3f0] sm:$0xff]
  %v1972 = vld [vmem:[%s1654 + $0x408] sm:$0xff]
  %v1973 = vld [vmem:[%s1654 + $0x410] sm:$0xff]
  %v1974 = vld [vmem:[%s1654 + $0x428] sm:$0xff]
  %v1975 = vld [vmem:[%s1654 + $0x430] sm:$0xff]
  %v1976 = vpack.c.bf16 %v1913, %v1912
  %v1977 = vpack.c.bf16 %v1915, %v1914
  %v1978 = vpack.c.bf16 %v1917, %v1916
  %v1979 = vpack.c.bf16 %v1919, %v1918
  %v1980 = vpack.c.bf16 %v1921, %v1920
  %v1981 = vpack.c.bf16 %v1923, %v1922
  %v1982 = vpack.c.bf16 %v1925, %v1924
  %v1983 = vpack.c.bf16 %v1927, %v1926
  %v1984 = vpack.c.bf16 %v1929, %v1928
  %v1985 = vpack.c.bf16 %v1931, %v1930
  %v1986 = vpack.c.bf16 %v1933, %v1932
  %v1987 = vpack.c.bf16 %v1935, %v1934
  %v1988 = vpack.c.bf16 %v1937, %v1936
  %v1989 = vpack.c.bf16 %v1939, %v1938
  %v1990 = vpack.c.bf16 %v1941, %v1940
  %v1991 = vpack.c.bf16 %v1943, %v1942
  %v1992 = vpack.c.bf16 %v1945, %v1944
  %v1993 = vpack.c.bf16 %v1947, %v1946
  %v1994 = vpack.c.bf16 %v1949, %v1948
  %v1995 = vpack.c.bf16 %v1951, %v1950
  %v1996 = vpack.c.bf16 %v1953, %v1952
  %v1997 = vpack.c.bf16 %v1955, %v1954
  %v1998 = vpack.c.bf16 %v1957, %v1956
  %v1999 = vpack.c.bf16 %v1959, %v1958
  %v2000 = vpack.c.bf16 %v1961, %v1960
  %v2001 = vpack.c.bf16 %v1963, %v1962
  %v2002 = vpack.c.bf16 %v1965, %v1964
  %v2003 = vpack.c.bf16 %v1967, %v1966
  %v2004 = vpack.c.bf16 %v1969, %v1968
  %v2005 = vpack.c.bf16 %v1971, %v1970
  %v2006 = vpack.c.bf16 %v1973, %v1972
  %v2007 = vpack.c.bf16 %v1975, %v1974
  %2040 = vrot.lane.b32.xlu0 %v1976, 21
  %v2041 = vpop.permute.xlu0 %2040
  %2042 = vrot.lane.b32.xlu0 %v1977, 21
  %v2043 = vpop.permute.xlu0 %2042
  %2044 = vrot.lane.b32.xlu0 %v1978, 21
  %v2045 = vpop.permute.xlu0 %2044
  %2046 = vrot.lane.b32.xlu0 %v1979, 21
  %v2047 = vpop.permute.xlu0 %2046
  %2048 = vrot.lane.b32.xlu0 %v1980, 21
  %v2049 = vpop.permute.xlu0 %2048
  %2050 = vrot.lane.b32.xlu0 %v1981, 21
  %v2051 = vpop.permute.xlu0 %2050
  %2052 = vrot.lane.b32.xlu0 %v1982, 21
  %v2053 = vpop.permute.xlu0 %2052
  %2054 = vrot.lane.b32.xlu0 %v1983, 21
  %v2055 = vpop.permute.xlu0 %2054
  %2056 = vrot.lane.b32.xlu0 %v1984, 21
  %v2057 = vpop.permute.xlu0 %2056
  %2058 = vrot.lane.b32.xlu0 %v1985, 21
  %v2059 = vpop.permute.xlu0 %2058
  %2060 = vrot.lane.b32.xlu0 %v1986, 21
  %v2061 = vpop.permute.xlu0 %2060
  %2062 = vrot.lane.b32.xlu0 %v1987, 21
  %v2063 = vpop.permute.xlu0 %2062
  %2064 = vrot.lane.b32.xlu0 %v1988, 21
  %v2065 = vpop.permute.xlu0 %2064
  %2066 = vrot.lane.b32.xlu0 %v1989, 21
  %v2067 = vpop.permute.xlu0 %2066
  %2068 = vrot.lane.b32.xlu0 %v1990, 21
  %v2069 = vpop.permute.xlu0 %2068
  %2070 = vrot.lane.b32.xlu0 %v1991, 21
  %v2071 = vpop.permute.xlu0 %2070
  %2072 = vrot.lane.b32.xlu0 %v1992, 21
  %v2073 = vpop.permute.xlu0 %2072
  %2074 = vrot.lane.b32.xlu0 %v1993, 21
  %v2075 = vpop.permute.xlu0 %2074
  %2076 = vrot.lane.b32.xlu0 %v1994, 21
  %v2077 = vpop.permute.xlu0 %2076
  %2078 = vrot.lane.b32.xlu0 %v1995, 21
  %v2079 = vpop.permute.xlu0 %2078
  %2080 = vrot.lane.b32.xlu0 %v1996, 21
  %v2081 = vpop.permute.xlu0 %2080
  %2082 = vrot.lane.b32.xlu0 %v1997, 21
  %v2083 = vpop.permute.xlu0 %2082
  %2084 = vrot.lane.b32.xlu0 %v1998, 21
  %v2085 = vpop.permute.xlu0 %2084
  %2086 = vrot.lane.b32.xlu0 %v1999, 21
  %v2087 = vpop.permute.xlu0 %2086
  %2088 = vrot.lane.b32.xlu0 %v2000, 21
  %v2089 = vpop.permute.xlu0 %2088
  %2090 = vrot.lane.b32.xlu0 %v2001, 21
  %v2091 = vpop.permute.xlu0 %2090
  %2092 = vrot.lane.b32.xlu0 %v2002, 21
  %v2093 = vpop.permute.xlu0 %2092
  %2094 = vrot.lane.b32.xlu0 %v2003, 21
  %v2095 = vpop.permute.xlu0 %2094
  %2096 = vrot.lane.b32.xlu0 %v2004, 21
  %v2097 = vpop.permute.xlu0 %2096
  %2098 = vrot.lane.b32.xlu0 %v2005, 21
  %v2099 = vpop.permute.xlu0 %2098
  %2100 = vrot.lane.b32.xlu0 %v2006, 21
  %v2101 = vpop.permute.xlu0 %2100
  %2102 = vrot.lane.b32.xlu0 %v2007, 21
  %v2103 = vpop.permute.xlu0 %2102
  %vm2136 = vcmask 195752
  %2137 = vst.msk [vmem:[#allocation4] sm:$0xff] %vm2136, %v2041
  %2138 = vst.msk [vmem:[#allocation4 + $0x8] sm:$0xff] %vm2136, %v2043
  %2139 = vst.msk [vmem:[#allocation4 + $0x10] sm:$0xff] %vm2136, %v2045
  %2140 = vst.msk [vmem:[#allocation4 + $0x18] sm:$0xff] %vm2136, %v2047
  %2141 = vst.msk [vmem:[#allocation4 + $0x20] sm:$0xff] %vm2136, %v2049
  %2142 = vst.msk [vmem:[#allocation4 + $0x28] sm:$0xff] %vm2136, %v2051
  %2143 = vst.msk [vmem:[#allocation4 + $0x30] sm:$0xff] %vm2136, %v2053
  %2144 = vst.msk [vmem:[#allocation4 + $0x38] sm:$0xff] %vm2136, %v2055
  %2145 = vst.msk [vmem:[#allocation4 + $0x40] sm:$0xff] %vm2136, %v2057
  %2146 = vst.msk [vmem:[#allocation4 + $0x48] sm:$0xff] %vm2136, %v2059
  %2147 = vst.msk [vmem:[#allocation4 + $0x50] sm:$0xff] %vm2136, %v2061
  %2148 = vst.msk [vmem:[#allocation4 + $0x58] sm:$0xff] %vm2136, %v2063
  %2149 = vst.msk [vmem:[#allocation4 + $0x60] sm:$0xff] %vm2136, %v2065
  %2150 = vst.msk [vmem:[#allocation4 + $0x68] sm:$0xff] %vm2136, %v2067
  %2151 = vst.msk [vmem:[#allocation4 + $0x70] sm:$0xff] %vm2136, %v2069
  %2152 = vst.msk [vmem:[#allocation4 + $0x78] sm:$0xff] %vm2136, %v2071
  %2153 = vst.msk [vmem:[#allocation4 + $0x80] sm:$0xff] %vm2136, %v2073
  %2154 = vst.msk [vmem:[#allocation4 + $0x88] sm:$0xff] %vm2136, %v2075
  %2155 = vst.msk [vmem:[#allocation4 + $0x90] sm:$0xff] %vm2136, %v2077
  %2156 = vst.msk [vmem:[#allocation4 + $0x98] sm:$0xff] %vm2136, %v2079
  %2157 = vst.msk [vmem:[#allocation4 + $0xa0] sm:$0xff] %vm2136, %v2081
  %2158 = vst.msk [vmem:[#allocation4 + $0xa8] sm:$0xff] %vm2136, %v2083
  %2159 = vst.msk [vmem:[#allocation4 + $0xb0] sm:$0xff] %vm2136, %v2085
  %2160 = vst.msk [vmem:[#allocation4 + $0xb8] sm:$0xff] %vm2136, %v2087
  %2161 = vst.msk [vmem:[#allocation4 + $0xc0] sm:$0xff] %vm2136, %v2089
  %2162 = vst.msk [vmem:[#allocation4 + $0xc8] sm:$0xff] %vm2136, %v2091
  %2163 = vst.msk [vmem:[#allocation4 + $0xd0] sm:$0xff] %vm2136, %v2093
  %2164 = vst.msk [vmem:[#allocation4 + $0xd8] sm:$0xff] %vm2136, %v2095
  %2165 = vst.msk [vmem:[#allocation4 + $0xe0] sm:$0xff] %vm2136, %v2097
  %2166 = vst.msk [vmem:[#allocation4 + $0xe8] sm:$0xff] %vm2136, %v2099
  %2167 = vst.msk [vmem:[#allocation4 + $0xf0] sm:$0xff] %vm2136, %v2101
  %2168 = vst.msk [vmem:[#allocation4 + $0xf8] sm:$0xff] %vm2136, %v2103
  %v2169 = vld [vmem:[%s1654 + $0x9] sm:$0xff]
  %v2170 = vld [vmem:[%s1654 + $0x11] sm:$0xff]
  %v2171 = vld [vmem:[%s1654 + $0x29] sm:$0xff]
  %v2172 = vld [vmem:[%s1654 + $0x31] sm:$0xff]
  %v2173 = vld [vmem:[%s1654 + $0x49] sm:$0xff]
  %v2174 = vld [vmem:[%s1654 + $0x51] sm:$0xff]
  %v2175 = vld [vmem:[%s1654 + $0x69] sm:$0xff]
  %v2176 = vld [vmem:[%s1654 + $0x71] sm:$0xff]
  %v2177 = vld [vmem:[%s1654 + $0x89] sm:$0xff]
  %v2178 = vld [vmem:[%s1654 + $0x91] sm:$0xff]
  %v2179 = vld [vmem:[%s1654 + $0xa9] sm:$0xff]
  %v2180 = vld [vmem:[%s1654 + $0xb1] sm:$0xff]
  %v2181 = vld [vmem:[%s1654 + $0xc9] sm:$0xff]
  %v2182 = vld [vmem:[%s1654 + $0xd1] sm:$0xff]
  %v2183 = vld [vmem:[%s1654 + $0xe9] sm:$0xff]
  %v2184 = vld [vmem:[%s1654 + $0xf1] sm:$0xff]
  %v2185 = vld [vmem:[%s1654 + $0x109] sm:$0xff]
  %v2186 = vld [vmem:[%s1654 + $0x111] sm:$0xff]
  %v2187 = vld [vmem:[%s1654 + $0x129] sm:$0xff]
  %v2188 = vld [vmem:[%s1654 + $0x131] sm:$0xff]
  %v2189 = vld [vmem:[%s1654 + $0x149] sm:$0xff]
  %v2190 = vld [vmem:[%s1654 + $0x151] sm:$0xff]
  %v2191 = vld [vmem:[%s1654 + $0x169] sm:$0xff]
  %v2192 = vld [vmem:[%s1654 + $0x171] sm:$0xff]
  %v2193 = vld [vmem:[%s1654 + $0x189] sm:$0xff]
  %v2194 = vld [vmem:[%s1654 + $0x191] sm:$0xff]
  %v2195 = vld [vmem:[%s1654 + $0x1a9] sm:$0xff]
  %v2196 = vld [vmem:[%s1654 + $0x1b1] sm:$0xff]
  %v2197 = vld [vmem:[%s1654 + $0x1c9] sm:$0xff]
  %v2198 = vld [vmem:[%s1654 + $0x1d1] sm:$0xff]
  %v2199 = vld [vmem:[%s1654 + $0x1e9] sm:$0xff]
  %v2200 = vld [vmem:[%s1654 + $0x1f1] sm:$0xff]
  %v2201 = vld [vmem:[%s1654 + $0x249] sm:$0xff]
  %v2202 = vld [vmem:[%s1654 + $0x251] sm:$0xff]
  %v2203 = vld [vmem:[%s1654 + $0x269] sm:$0xff]
  %v2204 = vld [vmem:[%s1654 + $0x271] sm:$0xff]
  %v2205 = vld [vmem:[%s1654 + $0x289] sm:$0xff]
  %v2206 = vld [vmem:[%s1654 + $0x291] sm:$0xff]
  %v2207 = vld [vmem:[%s1654 + $0x2a9] sm:$0xff]
  %v2208 = vld [vmem:[%s1654 + $0x2b1] sm:$0xff]
  %v2209 = vld [vmem:[%s1654 + $0x2c9] sm:$0xff]
  %v2210 = vld [vmem:[%s1654 + $0x2d1] sm:$0xff]
  %v2211 = vld [vmem:[%s1654 + $0x2e9] sm:$0xff]
  %v2212 = vld [vmem:[%s1654 + $0x2f1] sm:$0xff]
  %v2213 = vld [vmem:[%s1654 + $0x309] sm:$0xff]
  %v2214 = vld [vmem:[%s1654 + $0x311] sm:$0xff]
  %v2215 = vld [vmem:[%s1654 + $0x329] sm:$0xff]
  %v2216 = vld [vmem:[%s1654 + $0x331] sm:$0xff]
  %v2217 = vld [vmem:[%s1654 + $0x349] sm:$0xff]
  %v2218 = vld [vmem:[%s1654 + $0x351] sm:$0xff]
  %v2219 = vld [vmem:[%s1654 + $0x369] sm:$0xff]
  %v2220 = vld [vmem:[%s1654 + $0x371] sm:$0xff]
  %v2221 = vld [vmem:[%s1654 + $0x389] sm:$0xff]
  %v2222 = vld [vmem:[%s1654 + $0x391] sm:$0xff]
  %v2223 = vld [vmem:[%s1654 + $0x3a9] sm:$0xff]
  %v2224 = vld [vmem:[%s1654 + $0x3b1] sm:$0xff]
  %v2225 = vld [vmem:[%s1654 + $0x3c9] sm:$0xff]
  %v2226 = vld [vmem:[%s1654 + $0x3d1] sm:$0xff]
  %v2227 = vld [vmem:[%s1654 + $0x3e9] sm:$0xff]
  %v2228 = vld [vmem:[%s1654 + $0x3f1] sm:$0xff]
  %v2229 = vld [vmem:[%s1654 + $0x409] sm:$0xff]
  %v2230 = vld [vmem:[%s1654 + $0x411] sm:$0xff]
  %v2231 = vld [vmem:[%s1654 + $0x429] sm:$0xff]
  %v2232 = vld [vmem:[%s1654 + $0x431] sm:$0xff]
  %v2233 = vpack.c.bf16 %v2170, %v2169
  %v2234 = vpack.c.bf16 %v2172, %v2171
  %v2235 = vpack.c.bf16 %v2174, %v2173
  %v2236 = vpack.c.bf16 %v2176, %v2175
  %v2237 = vpack.c.bf16 %v2178, %v2177
  %v2238 = vpack.c.bf16 %v2180, %v2179
  %v2239 = vpack.c.bf16 %v2182, %v2181
  %v2240 = vpack.c.bf16 %v2184, %v2183
  %v2241 = vpack.c.bf16 %v2186, %v2185
  %v2242 = vpack.c.bf16 %v2188, %v2187
  %v2243 = vpack.c.bf16 %v2190, %v2189
  %v2244 = vpack.c.bf16 %v2192, %v2191
  %v2245 = vpack.c.bf16 %v2194, %v2193
  %v2246 = vpack.c.bf16 %v2196, %v2195
  %v2247 = vpack.c.bf16 %v2198, %v2197
  %v2248 = vpack.c.bf16 %v2200, %v2199
  %v2249 = vpack.c.bf16 %v2202, %v2201
  %v2250 = vpack.c.bf16 %v2204, %v2203
  %v2251 = vpack.c.bf16 %v2206, %v2205
  %v2252 = vpack.c.bf16 %v2208, %v2207
  %v2253 = vpack.c.bf16 %v2210, %v2209
  %v2254 = vpack.c.bf16 %v2212, %v2211
  %v2255 = vpack.c.bf16 %v2214, %v2213
  %v2256 = vpack.c.bf16 %v2216, %v2215
  %v2257 = vpack.c.bf16 %v2218, %v2217
  %v2258 = vpack.c.bf16 %v2220, %v2219
  %v2259 = vpack.c.bf16 %v2222, %v2221
  %v2260 = vpack.c.bf16 %v2224, %v2223
  %v2261 = vpack.c.bf16 %v2226, %v2225
  %v2262 = vpack.c.bf16 %v2228, %v2227
  %v2263 = vpack.c.bf16 %v2230, %v2229
  %v2264 = vpack.c.bf16 %v2232, %v2231
  %2297 = vrot.lane.b32.xlu0 %v2233, 24
  %v2298 = vpop.permute.xlu0 %2297
  %2299 = vrot.lane.b32.xlu0 %v2234, 24
  %v2300 = vpop.permute.xlu0 %2299
  %2301 = vrot.lane.b32.xlu0 %v2235, 24
  %v2302 = vpop.permute.xlu0 %2301
  %2303 = vrot.lane.b32.xlu0 %v2236, 24
  %v2304 = vpop.permute.xlu0 %2303
  %2305 = vrot.lane.b32.xlu0 %v2237, 24
  %v2306 = vpop.permute.xlu0 %2305
  %2307 = vrot.lane.b32.xlu0 %v2238, 24
  %v2308 = vpop.permute.xlu0 %2307
  %2309 = vrot.lane.b32.xlu0 %v2239, 24
  %v2310 = vpop.permute.xlu0 %2309
  %2311 = vrot.lane.b32.xlu0 %v2240, 24
  %v2312 = vpop.permute.xlu0 %2311
  %2313 = vrot.lane.b32.xlu0 %v2241, 24
  %v2314 = vpop.permute.xlu0 %2313
  %2315 = vrot.lane.b32.xlu0 %v2242, 24
  %v2316 = vpop.permute.xlu0 %2315
  %2317 = vrot.lane.b32.xlu0 %v2243, 24
  %v2318 = vpop.permute.xlu0 %2317
  %2319 = vrot.lane.b32.xlu0 %v2244, 24
  %v2320 = vpop.permute.xlu0 %2319
  %2321 = vrot.lane.b32.xlu0 %v2245, 24
  %v2322 = vpop.permute.xlu0 %2321
  %2323 = vrot.lane.b32.xlu0 %v2246, 24
  %v2324 = vpop.permute.xlu0 %2323
  %2325 = vrot.lane.b32.xlu0 %v2247, 24
  %v2326 = vpop.permute.xlu0 %2325
  %2327 = vrot.lane.b32.xlu0 %v2248, 24
  %v2328 = vpop.permute.xlu0 %2327
  %2329 = vrot.lane.b32.xlu0 %v2249, 24
  %v2330 = vpop.permute.xlu0 %2329
  %2331 = vrot.lane.b32.xlu0 %v2250, 24
  %v2332 = vpop.permute.xlu0 %2331
  %2333 = vrot.lane.b32.xlu0 %v2251, 24
  %v2334 = vpop.permute.xlu0 %2333
  %2335 = vrot.lane.b32.xlu0 %v2252, 24
  %v2336 = vpop.permute.xlu0 %2335
  %2337 = vrot.lane.b32.xlu0 %v2253, 24
  %v2338 = vpop.permute.xlu0 %2337
  %2339 = vrot.lane.b32.xlu0 %v2254, 24
  %v2340 = vpop.permute.xlu0 %2339
  %2341 = vrot.lane.b32.xlu0 %v2255, 24
  %v2342 = vpop.permute.xlu0 %2341
  %2343 = vrot.lane.b32.xlu0 %v2256, 24
  %v2344 = vpop.permute.xlu0 %2343
  %2345 = vrot.lane.b32.xlu0 %v2257, 24
  %v2346 = vpop.permute.xlu0 %2345
  %2347 = vrot.lane.b32.xlu0 %v2258, 24
  %v2348 = vpop.permute.xlu0 %2347
  %2349 = vrot.lane.b32.xlu0 %v2259, 24
  %v2350 = vpop.permute.xlu0 %2349
  %2351 = vrot.lane.b32.xlu0 %v2260, 24
  %v2352 = vpop.permute.xlu0 %2351
  %2353 = vrot.lane.b32.xlu0 %v2261, 24
  %v2354 = vpop.permute.xlu0 %2353
  %2355 = vrot.lane.b32.xlu0 %v2262, 24
  %v2356 = vpop.permute.xlu0 %2355
  %2357 = vrot.lane.b32.xlu0 %v2263, 24
  %v2358 = vpop.permute.xlu0 %2357
  %2359 = vrot.lane.b32.xlu0 %v2264, 24
  %v2360 = vpop.permute.xlu0 %2359
  %vm2393 = vcmask 220352
  %2394 = vst.msk [vmem:[#allocation4] sm:$0xff] %vm2393, %v2298
  %2395 = vst.msk [vmem:[#allocation4 + $0x8] sm:$0xff] %vm2393, %v2300
  %2396 = vst.msk [vmem:[#allocation4 + $0x10] sm:$0xff] %vm2393, %v2302
  %2397 = vst.msk [vmem:[#allocation4 + $0x18] sm:$0xff] %vm2393, %v2304
  %2398 = vst.msk [vmem:[#allocation4 + $0x20] sm:$0xff] %vm2393, %v2306
  %2399 = vst.msk [vmem:[#allocation4 + $0x28] sm:$0xff] %vm2393, %v2308
  %2400 = vst.msk [vmem:[#allocation4 + $0x30] sm:$0xff] %vm2393, %v2310
  %2401 = vst.msk [vmem:[#allocation4 + $0x38] sm:$0xff] %vm2393, %v2312
  %2402 = vst.msk [vmem:[#allocation4 + $0x40] sm:$0xff] %vm2393, %v2314
  %2403 = vst.msk [vmem:[#allocation4 + $0x48] sm:$0xff] %vm2393, %v2316
  %2404 = vst.msk [vmem:[#allocation4 + $0x50] sm:$0xff] %vm2393, %v2318
  %2405 = vst.msk [vmem:[#allocation4 + $0x58] sm:$0xff] %vm2393, %v2320
  %2406 = vst.msk [vmem:[#allocation4 + $0x60] sm:$0xff] %vm2393, %v2322
  %2407 = vst.msk [vmem:[#allocation4 + $0x68] sm:$0xff] %vm2393, %v2324
  %2408 = vst.msk [vmem:[#allocation4 + $0x70] sm:$0xff] %vm2393, %v2326
  %2409 = vst.msk [vmem:[#allocation4 + $0x78] sm:$0xff] %vm2393, %v2328
  %2410 = vst.msk [vmem:[#allocation4 + $0x80] sm:$0xff] %vm2393, %v2330
  %2411 = vst.msk [vmem:[#allocation4 + $0x88] sm:$0xff] %vm2393, %v2332
  %2412 = vst.msk [vmem:[#allocation4 + $0x90] sm:$0xff] %vm2393, %v2334
  %2413 = vst.msk [vmem:[#allocation4 + $0x98] sm:$0xff] %vm2393, %v2336
  %2414 = vst.msk [vmem:[#allocation4 + $0xa0] sm:$0xff] %vm2393, %v2338
  %2415 = vst.msk [vmem:[#allocation4 + $0xa8] sm:$0xff] %vm2393, %v2340
  %2416 = vst.msk [vmem:[#allocation4 + $0xb0] sm:$0xff] %vm2393, %v2342
  %2417 = vst.msk [vmem:[#allocation4 + $0xb8] sm:$0xff] %vm2393, %v2344
  %2418 = vst.msk [vmem:[#allocation4 + $0xc0] sm:$0xff] %vm2393, %v2346
  %2419 = vst.msk [vmem:[#allocation4 + $0xc8] sm:$0xff] %vm2393, %v2348
  %2420 = vst.msk [vmem:[#allocation4 + $0xd0] sm:$0xff] %vm2393, %v2350
  %2421 = vst.msk [vmem:[#allocation4 + $0xd8] sm:$0xff] %vm2393, %v2352
  %2422 = vst.msk [vmem:[#allocation4 + $0xe0] sm:$0xff] %vm2393, %v2354
  %2423 = vst.msk [vmem:[#allocation4 + $0xe8] sm:$0xff] %vm2393, %v2356
  %2424 = vst.msk [vmem:[#allocation4 + $0xf0] sm:$0xff] %vm2393, %v2358
  %2425 = vst.msk [vmem:[#allocation4 + $0xf8] sm:$0xff] %vm2393, %v2360
  %v2426 = vld [vmem:[#allocation4] sm:$0xff]
  %v2427 = vld [vmem:[#allocation4 + $0x8] sm:$0xff]
  %v2428 = vld [vmem:[#allocation4 + $0x10] sm:$0xff]
  %v2429 = vld [vmem:[#allocation4 + $0x18] sm:$0xff]
  %v2430 = vld [vmem:[#allocation4 + $0x20] sm:$0xff]
  %v2431 = vld [vmem:[#allocation4 + $0x28] sm:$0xff]
  %v2432 = vld [vmem:[#allocation4 + $0x30] sm:$0xff]
  %v2433 = vld [vmem:[#allocation4 + $0x38] sm:$0xff]
  %v2434 = vld [vmem:[#allocation4 + $0x40] sm:$0xff]
  %v2435 = vld [vmem:[#allocation4 + $0x48] sm:$0xff]
  %v2436 = vld [vmem:[#allocation4 + $0x50] sm:$0xff]
  %v2437 = vld [vmem:[#allocation4 + $0x58] sm:$0xff]
  %v2438 = vld [vmem:[#allocation4 + $0x60] sm:$0xff]
  %v2439 = vld [vmem:[#allocation4 + $0x68] sm:$0xff]
  %v2440 = vld [vmem:[#allocation4 + $0x70] sm:$0xff]
  %v2441 = vld [vmem:[#allocation4 + $0x78] sm:$0xff]
  %v2442 = vld [vmem:[#allocation4 + $0x80] sm:$0xff]
  %v2443 = vld [vmem:[#allocation4 + $0x88] sm:$0xff]
  %v2444 = vld [vmem:[#allocation4 + $0x90] sm:$0xff]
  %v2445 = vld [vmem:[#allocation4 + $0x98] sm:$0xff]
  %v2446 = vld [vmem:[#allocation4 + $0xa0] sm:$0xff]
  %v2447 = vld [vmem:[#allocation4 + $0xa8] sm:$0xff]
  %v2448 = vld [vmem:[#allocation4 + $0xb0] sm:$0xff]
  %v2449 = vld [vmem:[#allocation4 + $0xb8] sm:$0xff]
  %v2450 = vld [vmem:[#allocation4 + $0xc0] sm:$0xff]
  %v2451 = vld [vmem:[#allocation4 + $0xc8] sm:$0xff]
  %v2452 = vld [vmem:[#allocation4 + $0xd0] sm:$0xff]
  %v2453 = vld [vmem:[#allocation4 + $0xd8] sm:$0xff]
  %v2454 = vld [vmem:[#allocation4 + $0xe0] sm:$0xff]
  %v2455 = vld [vmem:[#allocation4 + $0xe8] sm:$0xff]
  %v2456 = vld [vmem:[#allocation4 + $0xf0] sm:$0xff]
  %v2457 = vld [vmem:[#allocation4 + $0xf8] sm:$0xff]
  %v2458 = vld [vmem:[%s1] sm:$0xf]
  %v2459 = vld [vmem:[%s1 + $0x4] sm:$0xf]
  %v2460 = vld [vmem:[%s1 + $0x8] sm:$0xf]
  %v2461 = vld [vmem:[%s1 + $0xc] sm:$0x3]
  %v2462 = vld [vmem:[%s2] sm:$0x1]
  %v2464 = vlaneseq
  %v2465 = vshrl.u32 %v2464, 7
  %v2466 = vsub.s32 0, %v2465
  %v2467 = vrot.slane %v2462, %v2466
  %v2473 = vunpack.c.l.b16 %v2458
  %v2474 = vunpack.c.l.b16 %v2459
  %v2475 = vunpack.c.l.b16 %v2460
  %v2476 = vunpack.c.l.b16 %v2461
  %v2477 = vpack.c.b16 %v2474, %v2473
  %v2478 = vpack.c.b16 %v2476, %v2475
  %vm2480 = vcmask 220160
  %v2482 = vsel %vm2480, %v2426, 0
  %v2485 = vsel %vm2480, %v2427, 0
  %v2488 = vsel %vm2480, %v2428, 0
  %v2491 = vsel %vm2480, %v2429, 0
  %v2494 = vsel %vm2480, %v2430, 0
  %v2497 = vsel %vm2480, %v2431, 0
  %v2500 = vsel %vm2480, %v2432, 0
  %v2503 = vsel %vm2480, %v2433, 0
  %v2506 = vsel %vm2480, %v2434, 0
  %v2509 = vsel %vm2480, %v2435, 0
  %v2512 = vsel %vm2480, %v2436, 0
  %v2515 = vsel %vm2480, %v2437, 0
  %v2518 = vsel %vm2480, %v2438, 0
  %v2521 = vsel %vm2480, %v2439, 0
  %v2524 = vsel %vm2480, %v2440, 0
  %v2527 = vsel %vm2480, %v2441, 0
  %v2530 = vsel %vm2480, %v2442, 0
  %v2533 = vsel %vm2480, %v2443, 0
  %v2536 = vsel %vm2480, %v2444, 0
  %v2539 = vsel %vm2480, %v2445, 0
  %v2542 = vsel %vm2480, %v2446, 0
  %v2545 = vsel %vm2480, %v2447, 0
  %v2548 = vsel %vm2480, %v2448, 0
  %v2551 = vsel %vm2480, %v2449, 0
  %v2554 = vsel %vm2480, %v2450, 0
  %v2557 = vsel %vm2480, %v2451, 0
  %v2560 = vsel %vm2480, %v2452, 0
  %v2563 = vsel %vm2480, %v2453, 0
  %v2566 = vsel %vm2480, %v2454, 0
  %v2569 = vsel %vm2480, %v2455, 0
  %v2572 = vsel %vm2480, %v2456, 0
  %v2575 = vsel %vm2480, %v2457, 0
  %vm2577 = vcmask 1044480
  %vm2578 = vcmask 1045504
  %v2579 = vsel %vm2577, 4294967295, 65535
  %v2580 = vsel %vm2578, %v2579, 0
  %v2582 = vand.u32 %v2478, %v2580
  %2584 = vmatprep.subr.bf16.mxu0 0
  %2585 = vmatpush1.bf16.msra.mxu0 %v2477
  %2586 = vmatprep.subr.bf16.mxu0 0
  %2587 = vmatpush1.bf16.msra.mxu0 %v2582
  %2588 = vmatprep.subr.bf16.mxu0 0
  %2589 = vmatpush1.bf16.msra.mxu0 0
  %2590 = vmatprep.subr.bf16.mxu0 0
  %2591 = vmatpush1.bf16.msra.mxu0 0
  %2592 = vmatprep.subr.bf16.mxu0 0
  %2593 = vmatpush1.bf16.msra.mxu0 0
  %2594 = vmatprep.subr.bf16.mxu0 0
  %2595 = vmatpush1.bf16.msra.mxu0 0
  %2596 = vmatprep.subr.bf16.mxu0 0
  %2597 = vmatpush1.bf16.msra.mxu0 0
  %2598 = vmatprep.subr.bf16.mxu0 0
  %2599 = vmatpush1.bf16.msra.mxu0 0
  %2600 = vmatprep.subr.bf16.mxu0 0
  %2601 = vmatpush1.bf16.msra.mxu0 0
  %2602 = vmatprep.subr.bf16.mxu0 0
  %2603 = vmatpush1.bf16.msra.mxu0 0
  %2604 = vmatprep.subr.bf16.mxu0 0
  %2605 = vmatpush1.bf16.msra.mxu0 0
  %2606 = vmatprep.subr.bf16.mxu0 0
  %2607 = vmatpush1.bf16.msra.mxu0 0
  %2608 = vmatprep.subr.bf16.mxu0 0
  %2609 = vmatpush1.bf16.msra.mxu0 0
  %2610 = vmatprep.subr.bf16.mxu0 0
  %2611 = vmatpush1.bf16.msra.mxu0 0
  %2612 = vmatprep.subr.bf16.mxu0 0
  %2613 = vmatpush1.bf16.msra.mxu0 0
  %2614 = vmatprep.subr.bf16.mxu0 0
  %2615 = vmatpush1.bf16.msra.mxu0 0
  %2616 = vmatprep.mubr.bf16.mxu0 0
  %2617 = vmatmul.mubr.bf16.gmra.mrb[0].mxu0 %v2482
  %v2618 = vpop.f32.mrb[0].mxu0
  %v2619 = vadd.f32 %v2467, %v2618
  %v2620 = vpop.f32.mrb[0].mxu0
  %v2621 = vpop.f32.mrb[0].mxu0
  %v2622 = vadd.f32 %v2467, %v2621
  %v2623 = vpop.f32.mrb[0].mxu0
  %2624 = vmatprep.mubr.bf16.mxu0 0
  %2625 = vmatmul.mubr.bf16.gmra.mrb[0].mxu0 %v2485
  %v2626 = vpop.f32.mrb[0].mxu0
  %v2627 = vadd.f32 %v2467, %v2626
  %v2628 = vpop.f32.mrb[0].mxu0
  %v2629 = vpop.f32.mrb[0].mxu0
  %v2630 = vadd.f32 %v2467, %v2629
  %v2631 = vpop.f32.mrb[0].mxu0
  %2632 = vmatprep.mubr.bf16.mxu0 0
  %2633 = vmatmul.mubr.bf16.gmra.mrb[0].mxu0 %v2488
  %v2634 = vpop.f32.mrb[0].mxu0
  %v2635 = vadd.f32 %v2467, %v2634
  %v2636 = vpop.f32.mrb[0].mxu0
  %v2637 = vpop.f32.mrb[0].mxu0
  %v2638 = vadd.f32 %v2467, %v2637
  %v2639 = vpop.f32.mrb[0].mxu0
  %2640 = vmatprep.mubr.bf16.mxu0 0
  %2641 = vmatmul.mubr.bf16.gmra.mrb[0].mxu0 %v2491
  %v2642 = vpop.f32.mrb[0].mxu0
  %v2643 = vadd.f32 %v2467, %v2642
  %v2644 = vpop.f32.mrb[0].mxu0
  %v2645 = vpop.f32.mrb[0].mxu0
  %v2646 = vadd.f32 %v2467, %v2645
  %v2647 = vpop.f32.mrb[0].mxu0
  %2648 = vmatprep.mubr.bf16.mxu0 0
  %2649 = vmatmul.mubr.bf16.gmra.mrb[0].mxu0 %v2494
  %v2650 = vpop.f32.mrb[0].mxu0
  %v2651 = vadd.f32 %v2467, %v2650
  %v2652 = vpop.f32.mrb[0].mxu0
  %v2653 = vpop.f32.mrb[0].mxu0
  %v2654 = vadd.f32 %v2467, %v2653
  %v2655 = vpop.f32.mrb[0].mxu0
  %2656 = vmatprep.mubr.bf16.mxu0 0
  %2657 = vmatmul.mubr.bf16.gmra.mrb[0].mxu0 %v2497
  %v2658 = vpop.f32.mrb[0].mxu0
  %v2659 = vadd.f32 %v2467, %v2658
  %v2660 = vpop.f32.mrb[0].mxu0
  %v2661 = vpop.f32.mrb[0].mxu0
  %v2662 = vadd.f32 %v2467, %v2661
  %v2663 = vpop.f32.mrb[0].mxu0
  %2664 = vmatprep.mubr.bf16.mxu0 0
  %2665 = vmatmul.mubr.bf16.gmra.mrb[0].mxu0 %v2500
  %v2666 = vpop.f32.mrb[0].mxu0
  %v2667 = vadd.f32 %v2467, %v2666
  %v2668 = vpop.f32.mrb[0].mxu0
  %v2669 = vpop.f32.mrb[0].mxu0
  %v2670 = vadd.f32 %v2467, %v2669
  %v2671 = vpop.f32.mrb[0].mxu0
  %2672 = vmatprep.mubr.bf16.mxu0 0
  %2673 = vmatmul.mubr.bf16.gmra.mrb[0].mxu0 %v2503
  %v2674 = vpop.f32.mrb[0].mxu0
  %v2675 = vadd.f32 %v2467, %v2674
  %v2676 = vpop.f32.mrb[0].mxu0
  %v2677 = vpop.f32.mrb[0].mxu0
  %v2678 = vadd.f32 %v2467, %v2677
  %v2679 = vpop.f32.mrb[0].mxu0
  %2680 = vmatprep.mubr.bf16.mxu0 0
  %2681 = vmatmul.mubr.bf16.gmra.mrb[0].mxu0 %v2506
  %v2682 = vpop.f32.mrb[0].mxu0
  %v2683 = vadd.f32 %v2467, %v2682
  %v2684 = vpop.f32.mrb[0].mxu0
  %v2685 = vpop.f32.mrb[0].mxu0
  %v2686 = vadd.f32 %v2467, %v2685
  %v2687 = vpop.f32.mrb[0].mxu0
  %2688 = vmatprep.mubr.bf16.mxu0 0
  %2689 = vmatmul.mubr.bf16.gmra.mrb[0].mxu0 %v2509
  %v2690 = vpop.f32.mrb[0].mxu0
  %v2691 = vadd.f32 %v2467, %v2690
  %v2692 = vpop.f32.mrb[0].mxu0
  %v2693 = vpop.f32.mrb[0].mxu0
  %v2694 = vadd.f32 %v2467, %v2693
  %v2695 = vpop.f32.mrb[0].mxu0
  %2696 = vmatprep.mubr.bf16.mxu0 0
  %2697 = vmatmul.mubr.bf16.gmra.mrb[0].mxu0 %v2512
  %v2698 = vpop.f32.mrb[0].mxu0
  %v2699 = vadd.f32 %v2467, %v2698
  %v2700 = vpop.f32.mrb[0].mxu0
  %v2701 = vpop.f32.mrb[0].mxu0
  %v2702 = vadd.f32 %v2467, %v2701
  %v2703 = vpop.f32.mrb[0].mxu0
  %2704 = vmatprep.mubr.bf16.mxu0 0
  %2705 = vmatmul.mubr.bf16.gmra.mrb[0].mxu0 %v2515
  %v2706 = vpop.f32.mrb[0].mxu0
  %v2707 = vadd.f32 %v2467, %v2706
  %v2708 = vpop.f32.mrb[0].mxu0
  %v2709 = vpop.f32.mrb[0].mxu0
  %v2710 = vadd.f32 %v2467, %v2709
  %v2711 = vpop.f32.mrb[0].mxu0
  %2712 = vmatprep.mubr.bf16.mxu0 0
  %2713 = vmatmul.mubr.bf16.gmra.mrb[0].mxu0 %v2518
  %v2714 = vpop.f32.mrb[0].mxu0
  %v2715 = vadd.f32 %v2467, %v2714
  %v2716 = vpop.f32.mrb[0].mxu0
  %v2717 = vpop.f32.mrb[0].mxu0
  %v2718 = vadd.f32 %v2467, %v2717
  %v2719 = vpop.f32.mrb[0].mxu0
  %2720 = vmatprep.mubr.bf16.mxu0 0
  %2721 = vmatmul.mubr.bf16.gmra.mrb[0].mxu0 %v2521
  %v2722 = vpop.f32.mrb[0].mxu0
  %v2723 = vadd.f32 %v2467, %v2722
  %v2724 = vpop.f32.mrb[0].mxu0
  %v2725 = vpop.f32.mrb[0].mxu0
  %v2726 = vadd.f32 %v2467, %v2725
  %v2727 = vpop.f32.mrb[0].mxu0
  %2728 = vmatprep.mubr.bf16.mxu0 0
  %2729 = vmatmul.mubr.bf16.gmra.mrb[0].mxu0 %v2524
  %v2730 = vpop.f32.mrb[0].mxu0
  %v2731 = vadd.f32 %v2467, %v2730
  %v2732 = vpop.f32.mrb[0].mxu0
  %v2733 = vpop.f32.mrb[0].mxu0
  %v2734 = vadd.f32 %v2467, %v2733
  %v2735 = vpop.f32.mrb[0].mxu0
  %2736 = vmatprep.mubr.bf16.mxu0 0
  %2737 = vmatmul.mubr.bf16.gmra.mrb[0].mxu0 %v2527
  %v2738 = vpop.f32.mrb[0].mxu0
  %v2739 = vadd.f32 %v2467, %v2738
  %v2740 = vpop.f32.mrb[0].mxu0
  %v2741 = vpop.f32.mrb[0].mxu0
  %v2742 = vadd.f32 %v2467, %v2741
  %v2743 = vpop.f32.mrb[0].mxu0
  %2744 = vmatprep.mubr.bf16.mxu0 0
  %2745 = vmatmul.mubr.bf16.gmra.mrb[0].mxu0 %v2530
  %v2746 = vpop.f32.mrb[0].mxu0
  %v2747 = vadd.f32 %v2467, %v2746
  %v2748 = vpop.f32.mrb[0].mxu0
  %v2749 = vpop.f32.mrb[0].mxu0
  %v2750 = vadd.f32 %v2467, %v2749
  %v2751 = vpop.f32.mrb[0].mxu0
  %2752 = vmatprep.mubr.bf16.mxu0 0
  %2753 = vmatmul.mubr.bf16.gmra.mrb[0].mxu0 %v2533
  %v2754 = vpop.f32.mrb[0].mxu0
  %v2755 = vadd.f32 %v2467, %v2754
  %v2756 = vpop.f32.mrb[0].mxu0
  %v2757 = vpop.f32.mrb[0].mxu0
  %v2758 = vadd.f32 %v2467, %v2757
  %v2759 = vpop.f32.mrb[0].mxu0
  %2760 = vmatprep.mubr.bf16.mxu0 0
  %2761 = vmatmul.mubr.bf16.gmra.mrb[0].mxu0 %v2536
  %v2762 = vpop.f32.mrb[0].mxu0
  %v2763 = vadd.f32 %v2467, %v2762
  %v2764 = vpop.f32.mrb[0].mxu0
  %v2765 = vpop.f32.mrb[0].mxu0
  %v2766 = vadd.f32 %v2467, %v2765
  %v2767 = vpop.f32.mrb[0].mxu0
  %2768 = vmatprep.mubr.bf16.mxu0 0
  %2769 = vmatmul.mubr.bf16.gmra.mrb[0].mxu0 %v2539
  %v2770 = vpop.f32.mrb[0].mxu0
  %v2771 = vadd.f32 %v2467, %v2770
  %v2772 = vpop.f32.mrb[0].mxu0
  %v2773 = vpop.f32.mrb[0].mxu0
  %v2774 = vadd.f32 %v2467, %v2773
  %v2775 = vpop.f32.mrb[0].mxu0
  %2776 = vmatprep.mubr.bf16.mxu0 0
  %2777 = vmatmul.mubr.bf16.gmra.mrb[0].mxu0 %v2542
  %v2778 = vpop.f32.mrb[0].mxu0
  %v2779 = vadd.f32 %v2467, %v2778
  %v2780 = vpop.f32.mrb[0].mxu0
  %v2781 = vpop.f32.mrb[0].mxu0
  %v2782 = vadd.f32 %v2467, %v2781
  %v2783 = vpop.f32.mrb[0].mxu0
  %2784 = vmatprep.mubr.bf16.mxu0 0
  %2785 = vmatmul.mubr.bf16.gmra.mrb[0].mxu0 %v2545
  %v2786 = vpop.f32.mrb[0].mxu0
  %v2787 = vadd.f32 %v2467, %v2786
  %v2788 = vpop.f32.mrb[0].mxu0
  %v2789 = vpop.f32.mrb[0].mxu0
  %v2790 = vadd.f32 %v2467, %v2789
  %v2791 = vpop.f32.mrb[0].mxu0
  %2792 = vmatprep.mubr.bf16.mxu0 0
  %2793 = vmatmul.mubr.bf16.gmra.mrb[0].mxu0 %v2548
  %v2794 = vpop.f32.mrb[0].mxu0
  %v2795 = vadd.f32 %v2467, %v2794
  %v2796 = vpop.f32.mrb[0].mxu0
  %v2797 = vpop.f32.mrb[0].mxu0
  %v2798 = vadd.f32 %v2467, %v2797
  %v2799 = vpop.f32.mrb[0].mxu0
  %2800 = vmatprep.mubr.bf16.mxu0 0
  %2801 = vmatmul.mubr.bf16.gmra.mrb[0].mxu0 %v2551
  %v2802 = vpop.f32.mrb[0].mxu0
  %v2803 = vadd.f32 %v2467, %v2802
  %v2804 = vpop.f32.mrb[0].mxu0
  %v2805 = vpop.f32.mrb[0].mxu0
  %v2806 = vadd.f32 %v2467, %v2805
  %v2807 = vpop.f32.mrb[0].mxu0
  %2808 = vmatprep.mubr.bf16.mxu0 0
  %2809 = vmatmul.mubr.bf16.gmra.mrb[0].mxu0 %v2554
  %v2810 = vpop.f32.mrb[0].mxu0
  %v2811 = vadd.f32 %v2467, %v2810
  %v2812 = vpop.f32.mrb[0].mxu0
  %v2813 = vpop.f32.mrb[0].mxu0
  %v2814 = vadd.f32 %v2467, %v2813
  %v2815 = vpop.f32.mrb[0].mxu0
  %2816 = vmatprep.mubr.bf16.mxu0 0
  %2817 = vmatmul.mubr.bf16.gmra.mrb[0].mxu0 %v2557
  %v2818 = vpop.f32.mrb[0].mxu0
  %v2819 = vadd.f32 %v2467, %v2818
  %v2820 = vpop.f32.mrb[0].mxu0
  %v2821 = vpop.f32.mrb[0].mxu0
  %v2822 = vadd.f32 %v2467, %v2821
  %v2823 = vpop.f32.mrb[0].mxu0
  %2824 = vmatprep.mubr.bf16.mxu0 0
  %2825 = vmatmul.mubr.bf16.gmra.mrb[0].mxu0 %v2560
  %v2826 = vpop.f32.mrb[0].mxu0
  %v2827 = vadd.f32 %v2467, %v2826
  %v2828 = vpop.f32.mrb[0].mxu0
  %v2829 = vpop.f32.mrb[0].mxu0
  %v2830 = vadd.f32 %v2467, %v2829
  %v2831 = vpop.f32.mrb[0].mxu0
  %2832 = vmatprep.mubr.bf16.mxu0 0
  %2833 = vmatmul.mubr.bf16.gmra.mrb[0].mxu0 %v2563
  %v2834 = vpop.f32.mrb[0].mxu0
  %v2835 = vadd.f32 %v2467, %v2834
  %v2836 = vpop.f32.mrb[0].mxu0
  %v2837 = vpop.f32.mrb[0].mxu0
  %v2838 = vadd.f32 %v2467, %v2837
  %v2839 = vpop.f32.mrb[0].mxu0
  %2840 = vmatprep.mubr.bf16.mxu0 0
  %2841 = vmatmul.mubr.bf16.gmra.mrb[0].mxu0 %v2566
  %v2842 = vpop.f32.mrb[0].mxu0
  %v2843 = vadd.f32 %v2467, %v2842
  %v2844 = vpop.f32.mrb[0].mxu0
  %v2845 = vpop.f32.mrb[0].mxu0
  %v2846 = vadd.f32 %v2467, %v2845
  %v2847 = vpop.f32.mrb[0].mxu0
  %2848 = vmatprep.mubr.bf16.mxu0 0
  %2849 = vmatmul.mubr.bf16.gmra.mrb[0].mxu0 %v2569
  %v2850 = vpop.f32.mrb[0].mxu0
  %v2851 = vadd.f32 %v2467, %v2850
  %v2852 = vpop.f32.mrb[0].mxu0
  %v2853 = vpop.f32.mrb[0].mxu0
  %v2854 = vadd.f32 %v2467, %v2853
  %v2855 = vpop.f32.mrb[0].mxu0
  %2856 = vmatprep.mubr.bf16.mxu0 0
  %2857 = vmatmul.mubr.bf16.gmra.mrb[0].mxu0 %v2572
  %v2858 = vpop.f32.mrb[0].mxu0
  %v2859 = vadd.f32 %v2467, %v2858
  %v2860 = vpop.f32.mrb[0].mxu0
  %v2861 = vpop.f32.mrb[0].mxu0
  %v2862 = vadd.f32 %v2467, %v2861
  %v2863 = vpop.f32.mrb[0].mxu0
  %2864 = vmatprep.mubr.bf16.mxu0 0
  %2865 = vmatmul.mubr.bf16.gmra.mrb[0].mxu0 %v2575
  %v2866 = vpop.f32.mrb[0].mxu0
  %v2867 = vadd.f32 %v2467, %v2866
  %v2868 = vpop.f32.mrb[0].mxu0
  %v2869 = vpop.f32.mrb[0].mxu0
  %v2870 = vadd.f32 %v2467, %v2869
  %v2871 = vpop.f32.mrb[0].mxu0
  %2872 = vdwg.mxu0
  %v2873 = vmax.f32 %v2619, 0.0
  %v2874 = vmax.f32 %v2622, 0.0
  %v2875 = vmax.f32 %v2627, 0.0
  %v2876 = vmax.f32 %v2630, 0.0
  %v2877 = vmax.f32 %v2635, 0.0
  %v2878 = vmax.f32 %v2638, 0.0
  %v2879 = vmax.f32 %v2643, 0.0
  %v2880 = vmax.f32 %v2646, 0.0
  %v2881 = vmax.f32 %v2651, 0.0
  %v2882 = vmax.f32 %v2654, 0.0
  %v2883 = vmax.f32 %v2659, 0.0
  %v2884 = vmax.f32 %v2662, 0.0
  %v2885 = vmax.f32 %v2667, 0.0
  %v2886 = vmax.f32 %v2670, 0.0
  %v2887 = vmax.f32 %v2675, 0.0
  %v2888 = vmax.f32 %v2678, 0.0
  %v2889 = vmax.f32 %v2683, 0.0
  %v2890 = vmax.f32 %v2686, 0.0
  %v2891 = vmax.f32 %v2691, 0.0
  %v2892 = vmax.f32 %v2694, 0.0
  %v2893 = vmax.f32 %v2699, 0.0
  %v2894 = vmax.f32 %v2702, 0.0
  %v2895 = vmax.f32 %v2707, 0.0
  %v2896 = vmax.f32 %v2710, 0.0
  %v2897 = vmax.f32 %v2715, 0.0
  %v2898 = vmax.f32 %v2718, 0.0
  %v2899 = vmax.f32 %v2723, 0.0
  %v2900 = vmax.f32 %v2726, 0.0
  %v2901 = vmax.f32 %v2731, 0.0
  %v2902 = vmax.f32 %v2734, 0.0
  %v2903 = vmax.f32 %v2739, 0.0
  %v2904 = vmax.f32 %v2742, 0.0
  %v2905 = vmax.f32 %v2747, 0.0
  %v2906 = vmax.f32 %v2750, 0.0
  %v2907 = vmax.f32 %v2755, 0.0
  %v2908 = vmax.f32 %v2758, 0.0
  %v2909 = vmax.f32 %v2763, 0.0
  %v2910 = vmax.f32 %v2766, 0.0
  %v2911 = vmax.f32 %v2771, 0.0
  %v2912 = vmax.f32 %v2774, 0.0
  %v2913 = vmax.f32 %v2779, 0.0
  %v2914 = vmax.f32 %v2782, 0.0
  %v2915 = vmax.f32 %v2787, 0.0
  %v2916 = vmax.f32 %v2790, 0.0
  %v2917 = vmax.f32 %v2795, 0.0
  %v2918 = vmax.f32 %v2798, 0.0
  %v2919 = vmax.f32 %v2803, 0.0
  %v2920 = vmax.f32 %v2806, 0.0
  %v2921 = vmax.f32 %v2811, 0.0
  %v2922 = vmax.f32 %v2814, 0.0
  %v2923 = vmax.f32 %v2819, 0.0
  %v2924 = vmax.f32 %v2822, 0.0
  %v2925 = vmax.f32 %v2827, 0.0
  %v2926 = vmax.f32 %v2830, 0.0
  %v2927 = vmax.f32 %v2835, 0.0
  %v2928 = vmax.f32 %v2838, 0.0
  %v2929 = vmax.f32 %v2843, 0.0
  %v2930 = vmax.f32 %v2846, 0.0
  %v2931 = vmax.f32 %v2851, 0.0
  %v2932 = vmax.f32 %v2854, 0.0
  %v2933 = vmax.f32 %v2859, 0.0
  %v2934 = vmax.f32 %v2862, 0.0
  %v2935 = vmax.f32 %v2867, 0.0
  %v2936 = vmax.f32 %v2870, 0.0
  %v2937 = vmax.f32 %v2873, %v2875
  %v2938 = vmax.f32 %v2874, %v2876
  %v2939 = vmax.f32 %v2877, %v2879
  %v2940 = vmax.f32 %v2878, %v2880
  %v2941 = vmax.f32 %v2881, %v2883
  %v2942 = vmax.f32 %v2882, %v2884
  %v2943 = vmax.f32 %v2885, %v2887
  %v2944 = vmax.f32 %v2886, %v2888
  %v2945 = vmax.f32 %v2889, %v2891
  %v2946 = vmax.f32 %v2890, %v2892
  %v2947 = vmax.f32 %v2893, %v2895
  %v2948 = vmax.f32 %v2894, %v2896
  %v2949 = vmax.f32 %v2897, %v2899
  %v2950 = vmax.f32 %v2898, %v2900
  %v2951 = vmax.f32 %v2901, %v2903
  %v2952 = vmax.f32 %v2902, %v2904
  %v2953 = vmax.f32 %v2905, %v2907
  %v2954 = vmax.f32 %v2906, %v2908
  %v2955 = vmax.f32 %v2909, %v2911
  %v2956 = vmax.f32 %v2910, %v2912
  %v2957 = vmax.f32 %v2913, %v2915
  %v2958 = vmax.f32 %v2914, %v2916
  %v2959 = vmax.f32 %v2917, %v2919
  %v2960 = vmax.f32 %v2918, %v2920
  %v2961 = vmax.f32 %v2921, %v2923
  %v2962 = vmax.f32 %v2922, %v2924
  %v2963 = vmax.f32 %v2925, %v2927
  %v2964 = vmax.f32 %v2926, %v2928
  %v2965 = vmax.f32 %v2929, %v2931
  %v2966 = vmax.f32 %v2930, %v2932
  %v2967 = vmax.f32 %v2933, %v2935
  %v2968 = vmax.f32 %v2934, %v2936
  %v2969 = vlaneseq
  %v2970 = vshrl.u32 %v2969, 7
  %v2971 = vadd.s32 %v2970, 8
  %v2972 = vadd.s32 %v2970, 16
  %v2973 = vadd.s32 %v2970, 24
  %v2974 = vadd.s32 %v2970, 32
  %v2975 = vadd.s32 %v2970, 40
  %v2976 = vadd.s32 %v2970, 48
  %v2977 = vadd.s32 %v2970, 56
  %v2978 = vadd.s32 %v2970, 64
  %v2979 = vadd.s32 %v2970, 72
  %v2980 = vadd.s32 %v2970, 80
  %v2981 = vadd.s32 %v2970, 88
  %v2982 = vadd.s32 %v2970, 96
  %v2983 = vadd.s32 %v2970, 104
  %v2984 = vadd.s32 %v2970, 112
  %v2985 = vadd.s32 %v2970, 120
  %v2986 = vlaneseq
  %v2987 = vand.u32 %v2986, 127
  %v2988 = vadd.s32 %v2987, 128
  %v2989 = vmul.u32 %v2970, 2
  %v2990 = vmul.u32 %v2971, 2
  %v2991 = vmul.u32 %v2972, 2
  %v2992 = vmul.u32 %v2973, 2
  %v2993 = vmul.u32 %v2974, 2
  %v2994 = vmul.u32 %v2975, 2
  %v2995 = vmul.u32 %v2976, 2
  %v2996 = vmul.u32 %v2977, 2
  %v2997 = vmul.u32 %v2978, 2
  %v2998 = vmul.u32 %v2979, 2
  %v2999 = vmul.u32 %v2980, 2
  %v3000 = vmul.u32 %v2981, 2
  %v3001 = vmul.u32 %v2982, 2
  %v3002 = vmul.u32 %v2983, 2
  %v3003 = vmul.u32 %v2984, 2
  %v3004 = vmul.u32 %v2985, 2
  %vm3005 = vcmp.eq.s32.totalorder %v2987, %v2989
  %vm3006 = vcmp.eq.s32.totalorder %v2988, %v2989
  %vm3007 = vcmp.eq.s32.totalorder %v2987, %v2990
  %vm3008 = vcmp.eq.s32.totalorder %v2988, %v2990
  %vm3009 = vcmp.eq.s32.totalorder %v2987, %v2991
  %vm3010 = vcmp.eq.s32.totalorder %v2988, %v2991
  %vm3011 = vcmp.eq.s32.totalorder %v2987, %v2992
  %vm3012 = vcmp.eq.s32.totalorder %v2988, %v2992
  %vm3013 = vcmp.eq.s32.totalorder %v2987, %v2993
  %vm3014 = vcmp.eq.s32.totalorder %v2988, %v2993
  %vm3015 = vcmp.eq.s32.totalorder %v2987, %v2994
  %vm3016 = vcmp.eq.s32.totalorder %v2988, %v2994
  %vm3017 = vcmp.eq.s32.totalorder %v2987, %v2995
  %vm3018 = vcmp.eq.s32.totalorder %v2988, %v2995
  %vm3019 = vcmp.eq.s32.totalorder %v2987, %v2996
  %vm3020 = vcmp.eq.s32.totalorder %v2988, %v2996
  %vm3021 = vcmp.eq.s32.totalorder %v2987, %v2997
  %vm3022 = vcmp.eq.s32.totalorder %v2988, %v2997
  %vm3023 = vcmp.eq.s32.totalorder %v2987, %v2998
  %vm3024 = vcmp.eq.s32.totalorder %v2988, %v2998
  %vm3025 = vcmp.eq.s32.totalorder %v2987, %v2999
  %vm3026 = vcmp.eq.s32.totalorder %v2988, %v2999
  %vm3027 = vcmp.eq.s32.totalorder %v2987, %v3000
  %vm3028 = vcmp.eq.s32.totalorder %v2988, %v3000
  %vm3029 = vcmp.eq.s32.totalorder %v2987, %v3001
  %vm3030 = vcmp.eq.s32.totalorder %v2988, %v3001
  %vm3031 = vcmp.eq.s32.totalorder %v2987, %v3002
  %vm3032 = vcmp.eq.s32.totalorder %v2988, %v3002
  %vm3033 = vcmp.eq.s32.totalorder %v2987, %v3003
  %vm3034 = vcmp.eq.s32.totalorder %v2988, %v3003
  %vm3035 = vcmp.eq.s32.totalorder %v2987, %v3004
  %vm3036 = vcmp.eq.s32.totalorder %v2988, %v3004
  %v3037 = vsel %vm3005, 1.0, 0.0
  %v3038 = vsel %vm3006, 1.0, 0.0
  %v3039 = vsel %vm3007, 1.0, 0.0
  %v3040 = vsel %vm3008, 1.0, 0.0
  %v3041 = vsel %vm3009, 1.0, 0.0
  %v3042 = vsel %vm3010, 1.0, 0.0
  %v3043 = vsel %vm3011, 1.0, 0.0
  %v3044 = vsel %vm3012, 1.0, 0.0
  %v3045 = vsel %vm3013, 1.0, 0.0
  %v3046 = vsel %vm3014, 1.0, 0.0
  %v3047 = vsel %vm3015, 1.0, 0.0
  %v3048 = vsel %vm3016, 1.0, 0.0
  %v3049 = vsel %vm3017, 1.0, 0.0
  %v3050 = vsel %vm3018, 1.0, 0.0
  %v3051 = vsel %vm3019, 1.0, 0.0
  %v3052 = vsel %vm3020, 1.0, 0.0
  %v3053 = vsel %vm3021, 1.0, 0.0
  %v3054 = vsel %vm3022, 1.0, 0.0
  %v3055 = vsel %vm3023, 1.0, 0.0
  %v3056 = vsel %vm3024, 1.0, 0.0
  %v3057 = vsel %vm3025, 1.0, 0.0
  %v3058 = vsel %vm3026, 1.0, 0.0
  %v3059 = vsel %vm3027, 1.0, 0.0
  %v3060 = vsel %vm3028, 1.0, 0.0
  %v3061 = vsel %vm3029, 1.0, 0.0
  %v3062 = vsel %vm3030, 1.0, 0.0
  %v3063 = vsel %vm3031, 1.0, 0.0
  %v3064 = vsel %vm3032, 1.0, 0.0
  %v3065 = vsel %vm3033, 1.0, 0.0
  %v3066 = vsel %vm3034, 1.0, 0.0
  %v3067 = vsel %vm3035, 1.0, 0.0
  %v3068 = vsel %vm3036, 1.0, 0.0
  %v3069 = vadd.s32 %v2989, 1
  %v3070 = vadd.s32 %v2990, 1
  %v3071 = vadd.s32 %v2991, 1
  %v3072 = vadd.s32 %v2992, 1
  %v3073 = vadd.s32 %v2993, 1
  %v3074 = vadd.s32 %v2994, 1
  %v3075 = vadd.s32 %v2995, 1
  %v3076 = vadd.s32 %v2996, 1
  %v3077 = vadd.s32 %v2997, 1
  %v3078 = vadd.s32 %v2998, 1
  %v3079 = vadd.s32 %v2999, 1
  %v3080 = vadd.s32 %v3000, 1
  %v3081 = vadd.s32 %v3001, 1
  %v3082 = vadd.s32 %v3002, 1
  %v3083 = vadd.s32 %v3003, 1
  %v3084 = vadd.s32 %v3004, 1
  %vm3085 = vcmp.eq.s32.totalorder %v2987, %v3069
  %vm3086 = vcmp.eq.s32.totalorder %v2988, %v3069
  %vm3087 = vcmp.eq.s32.totalorder %v2987, %v3070
  %vm3088 = vcmp.eq.s32.totalorder %v2988, %v3070
  %vm3089 = vcmp.eq.s32.totalorder %v2987, %v3071
  %vm3090 = vcmp.eq.s32.totalorder %v2988, %v3071
  %vm3091 = vcmp.eq.s32.totalorder %v2987, %v3072
  %vm3092 = vcmp.eq.s32.totalorder %v2988, %v3072
  %vm3093 = vcmp.eq.s32.totalorder %v2987, %v3073
  %vm3094 = vcmp.eq.s32.totalorder %v2988, %v3073
  %vm3095 = vcmp.eq.s32.totalorder %v2987, %v3074
  %vm3096 = vcmp.eq.s32.totalorder %v2988, %v3074
  %vm3097 = vcmp.eq.s32.totalorder %v2987, %v3075
  %vm3098 = vcmp.eq.s32.totalorder %v2988, %v3075
  %vm3099 = vcmp.eq.s32.totalorder %v2987, %v3076
  %vm3100 = vcmp.eq.s32.totalorder %v2988, %v3076
  %vm3101 = vcmp.eq.s32.totalorder %v2987, %v3077
  %vm3102 = vcmp.eq.s32.totalorder %v2988, %v3077
  %vm3103 = vcmp.eq.s32.totalorder %v2987, %v3078
  %vm3104 = vcmp.eq.s32.totalorder %v2988, %v3078
  %vm3105 = vcmp.eq.s32.totalorder %v2987, %v3079
  %vm3106 = vcmp.eq.s32.totalorder %v2988, %v3079
  %vm3107 = vcmp.eq.s32.totalorder %v2987, %v3080
  %vm3108 = vcmp.eq.s32.totalorder %v2988, %v3080
  %vm3109 = vcmp.eq.s32.totalorder %v2987, %v3081
  %vm3110 = vcmp.eq.s32.totalorder %v2988, %v3081
  %vm3111 = vcmp.eq.s32.totalorder %v2987, %v3082
  %vm3112 = vcmp.eq.s32.totalorder %v2988, %v3082
  %vm3113 = vcmp.eq.s32.totalorder %v2987, %v3083
  %vm3114 = vcmp.eq.s32.totalorder %v2988, %v3083
  %vm3115 = vcmp.eq.s32.totalorder %v2987, %v3084
  %vm3116 = vcmp.eq.s32.totalorder %v2988, %v3084
  %v3117 = vsel %vm3085, 1.0, 0.0
  %v3118 = vsel %vm3086, 1.0, 0.0
  %v3119 = vsel %vm3087, 1.0, 0.0
  %v3120 = vsel %vm3088, 1.0, 0.0
  %v3121 = vsel %vm3089, 1.0, 0.0
  %v3122 = vsel %vm3090, 1.0, 0.0
  %v3123 = vsel %vm3091, 1.0, 0.0
  %v3124 = vsel %vm3092, 1.0, 0.0
  %v3125 = vsel %vm3093, 1.0, 0.0
  %v3126 = vsel %vm3094, 1.0, 0.0
  %v3127 = vsel %vm3095, 1.0, 0.0
  %v3128 = vsel %vm3096, 1.0, 0.0
  %v3129 = vsel %vm3097, 1.0, 0.0
  %v3130 = vsel %vm3098, 1.0, 0.0
  %v3131 = vsel %vm3099, 1.0, 0.0
  %v3132 = vsel %vm3100, 1.0, 0.0
  %v3133 = vsel %vm3101, 1.0, 0.0
  %v3134 = vsel %vm3102, 1.0, 0.0
  %v3135 = vsel %vm3103, 1.0, 0.0
  %v3136 = vsel %vm3104, 1.0, 0.0
  %v3137 = vsel %vm3105, 1.0, 0.0
  %v3138 = vsel %vm3106, 1.0, 0.0
  %v3139 = vsel %vm3107, 1.0, 0.0
  %v3140 = vsel %vm3108, 1.0, 0.0
  %v3141 = vsel %vm3109, 1.0, 0.0
  %v3142 = vsel %vm3110, 1.0, 0.0
  %v3143 = vsel %vm3111, 1.0, 0.0
  %v3144 = vsel %vm3112, 1.0, 0.0
  %v3145 = vsel %vm3113, 1.0, 0.0
  %v3146 = vsel %vm3114, 1.0, 0.0
  %v3147 = vsel %vm3115, 1.0, 0.0
  %v3148 = vsel %vm3116, 1.0, 0.0
  %3149 = vmatprep.subr.mxu0 0.0
  %3150 = vmatpush1.msra.mxu0 %v2937
  %3151 = vmatprep.subr.mxu0 0.0
  %3152 = vmatpush1.msra.mxu0 %v2938
  %3153 = vmatprep.subr.mxu0 0.0
  %3154 = vmatpush1.msra.mxu0 %v2939
  %3155 = vmatprep.subr.mxu0 0.0
  %3156 = vmatpush1.msra.mxu0 %v2940
  %3157 = vmatprep.subr.mxu0 0.0
  %3158 = vmatpush1.msra.mxu0 %v2941
  %3159 = vmatprep.subr.mxu0 0.0
  %3160 = vmatpush1.msra.mxu0 %v2942
  %3161 = vmatprep.subr.mxu0 0.0
  %3162 = vmatpush1.msra.mxu0 %v2943
  %3163 = vmatprep.subr.mxu0 0.0
  %3164 = vmatpush1.msra.mxu0 %v2944
  %3165 = vmatprep.subr.mxu0 0.0
  %3166 = vmatpush1.msra.mxu0 %v2945
  %3167 = vmatprep.subr.mxu0 0.0
  %3168 = vmatpush1.msra.mxu0 %v2946
  %3169 = vmatprep.subr.mxu0 0.0
  %3170 = vmatpush1.msra.mxu0 %v2947
  %3171 = vmatprep.subr.mxu0 0.0
  %3172 = vmatpush1.msra.mxu0 %v2948
  %3173 = vmatprep.subr.mxu0 0.0
  %3174 = vmatpush1.msra.mxu0 %v2949
  %3175 = vmatprep.subr.mxu0 0.0
  %3176 = vmatpush1.msra.mxu0 %v2950
  %3177 = vmatprep.subr.mxu0 0.0
  %3178 = vmatpush1.msra.mxu0 %v2951
  %3179 = vmatprep.subr.mxu0 0.0
  %3180 = vmatpush1.msra.mxu0 %v2952
  %3181 = vmatprep.subr.mxu0 0.0
  %3182 = vmatpush1.msra.mxu0 %v2953
  %3183 = vmatprep.subr.mxu0 0.0
  %3184 = vmatpush1.msra.mxu0 %v2954
  %3185 = vmatprep.subr.mxu0 0.0
  %3186 = vmatpush1.msra.mxu0 %v2955
  %3187 = vmatprep.subr.mxu0 0.0
  %3188 = vmatpush1.msra.mxu0 %v2956
  %3189 = vmatprep.subr.mxu0 0.0
  %3190 = vmatpush1.msra.mxu0 %v2957
  %3191 = vmatprep.subr.mxu0 0.0
  %3192 = vmatpush1.msra.mxu0 %v2958
  %3193 = vmatprep.subr.mxu0 0.0
  %3194 = vmatpush1.msra.mxu0 %v2959
  %3195 = vmatprep.subr.mxu0 0.0
  %3196 = vmatpush1.msra.mxu0 %v2960
  %3197 = vmatprep.subr.mxu0 0.0
  %3198 = vmatpush1.msra.mxu0 %v2961
  %3199 = vmatprep.subr.mxu0 0.0
  %3200 = vmatpush1.msra.mxu0 %v2962
  %3201 = vmatprep.subr.mxu0 0.0
  %3202 = vmatpush1.msra.mxu0 %v2963
  %3203 = vmatprep.subr.mxu0 0.0
  %3204 = vmatpush1.msra.mxu0 %v2964
  %3205 = vmatprep.subr.mxu0 0.0
  %3206 = vmatpush1.msra.mxu0 %v2965
  %3207 = vmatprep.subr.mxu0 0.0
  %3208 = vmatpush1.msra.mxu0 %v2966
  %3209 = vmatprep.subr.mxu0 0.0
  %3210 = vmatpush1.msra.mxu0 %v2967
  %3211 = vmatprep.subr.mxu0 0.0
  %3212 = vmatpush1.msra.mxu0 %v2968
  %3213 = vmatprep.mubr.f32.mxu0 %v3038
  %3214 = vmatmul.mubr.f32.gmra.mrb[0].mxu0 %v3037
  %v3215 = vpop.f32.mrb[0].mxu0
  %v3216 = vadd.f32 0.0, %v3215
  %v3217 = vpop.f32.mrb[0].mxu0
  %3218 = vmatprep.mubr.f32.mxu0 %v3040
  %3219 = vmatmul.mubr.f32.gmra.mrb[0].mxu0 %v3039
  %v3220 = vpop.f32.mrb[0].mxu0
  %v3221 = vadd.f32 0.0, %v3220
  %v3222 = vpop.f32.mrb[0].mxu0
  %3223 = vmatprep.mubr.f32.mxu0 %v3042
  %3224 = vmatmul.mubr.f32.gmra.mrb[0].mxu0 %v3041
  %v3225 = vpop.f32.mrb[0].mxu0
  %v3226 = vadd.f32 0.0, %v3225
  %v3227 = vpop.f32.mrb[0].mxu0
  %3228 = vmatprep.mubr.f32.mxu0 %v3044
  %3229 = vmatmul.mubr.f32.gmra.mrb[0].mxu0 %v3043
  %v3230 = vpop.f32.mrb[0].mxu0
  %v3231 = vadd.f32 0.0, %v3230
  %v3232 = vpop.f32.mrb[0].mxu0
  %3233 = vmatprep.mubr.f32.mxu0 %v3046
  %3234 = vmatmul.mubr.f32.gmra.mrb[0].mxu0 %v3045
  %v3235 = vpop.f32.mrb[0].mxu0
  %v3236 = vadd.f32 0.0, %v3235
  %v3237 = vpop.f32.mrb[0].mxu0
  %3238 = vmatprep.mubr.f32.mxu0 %v3048
  %3239 = vmatmul.mubr.f32.gmra.mrb[0].mxu0 %v3047
  %v3240 = vpop.f32.mrb[0].mxu0
  %v3241 = vadd.f32 0.0, %v3240
  %v3242 = vpop.f32.mrb[0].mxu0
  %3243 = vmatprep.mubr.f32.mxu0 %v3050
  %3244 = vmatmul.mubr.f32.gmra.mrb[0].mxu0 %v3049
  %v3245 = vpop.f32.mrb[0].mxu0
  %v3246 = vadd.f32 0.0, %v3245
  %v3247 = vpop.f32.mrb[0].mxu0
  %3248 = vmatprep.mubr.f32.mxu0 %v3052
  %3249 = vmatmul.mubr.f32.gmra.mrb[0].mxu0 %v3051
  %v3250 = vpop.f32.mrb[0].mxu0
  %v3251 = vadd.f32 0.0, %v3250
  %v3252 = vpop.f32.mrb[0].mxu0
  %3253 = vmatprep.mubr.f32.mxu0 %v3054
  %3254 = vmatmul.mubr.f32.gmra.mrb[0].mxu0 %v3053
  %v3255 = vpop.f32.mrb[0].mxu0
  %v3256 = vadd.f32 0.0, %v3255
  %v3257 = vpop.f32.mrb[0].mxu0
  %3258 = vmatprep.mubr.f32.mxu0 %v3056
  %3259 = vmatmul.mubr.f32.gmra.mrb[0].mxu0 %v3055
  %v3260 = vpop.f32.mrb[0].mxu0
  %v3261 = vadd.f32 0.0, %v3260
  %v3262 = vpop.f32.mrb[0].mxu0
  %3263 = vmatprep.mubr.f32.mxu0 %v3058
  %3264 = vmatmul.mubr.f32.gmra.mrb[0].mxu0 %v3057
  %v3265 = vpop.f32.mrb[0].mxu0
  %v3266 = vadd.f32 0.0, %v3265
  %v3267 = vpop.f32.mrb[0].mxu0
  %3268 = vmatprep.mubr.f32.mxu0 %v3060
  %3269 = vmatmul.mubr.f32.gmra.mrb[0].mxu0 %v3059
  %v3270 = vpop.f32.mrb[0].mxu0
  %v3271 = vadd.f32 0.0, %v3270
  %v3272 = vpop.f32.mrb[0].mxu0
  %3273 = vmatprep.mubr.f32.mxu0 %v3062
  %3274 = vmatmul.mubr.f32.gmra.mrb[0].mxu0 %v3061
  %v3275 = vpop.f32.mrb[0].mxu0
  %v3276 = vadd.f32 0.0, %v3275
  %v3277 = vpop.f32.mrb[0].mxu0
  %3278 = vmatprep.mubr.f32.mxu0 %v3064
  %3279 = vmatmul.mubr.f32.gmra.mrb[0].mxu0 %v3063
  %v3280 = vpop.f32.mrb[0].mxu0
  %v3281 = vadd.f32 0.0, %v3280
  %v3282 = vpop.f32.mrb[0].mxu0
  %3283 = vmatprep.mubr.f32.mxu0 %v3066
  %3284 = vmatmul.mubr.f32.gmra.mrb[0].mxu0 %v3065
  %v3285 = vpop.f32.mrb[0].mxu0
  %v3286 = vadd.f32 0.0, %v3285
  %v3287 = vpop.f32.mrb[0].mxu0
  %3288 = vmatprep.mubr.f32.mxu0 %v3068
  %3289 = vmatmul.mubr.f32.gmra.mrb[0].mxu0 %v3067
  %v3290 = vpop.f32.mrb[0].mxu0
  %v3291 = vadd.f32 0.0, %v3290
  %v3292 = vpop.f32.mrb[0].mxu0
  %3293 = vdwg.mxu0
  %3294 = vmatprep.subr.mxu0 0.0
  %3295 = vmatpush1.msra.mxu0 %v2937
  %3296 = vmatprep.subr.mxu0 0.0
  %3297 = vmatpush1.msra.mxu0 %v2938
  %3298 = vmatprep.subr.mxu0 0.0
  %3299 = vmatpush1.msra.mxu0 %v2939
  %3300 = vmatprep.subr.mxu0 0.0
  %3301 = vmatpush1.msra.mxu0 %v2940
  %3302 = vmatprep.subr.mxu0 0.0
  %3303 = vmatpush1.msra.mxu0 %v2941
  %3304 = vmatprep.subr.mxu0 0.0
  %3305 = vmatpush1.msra.mxu0 %v2942
  %3306 = vmatprep.subr.mxu0 0.0
  %3307 = vmatpush1.msra.mxu0 %v2943
  %3308 = vmatprep.subr.mxu0 0.0
  %3309 = vmatpush1.msra.mxu0 %v2944
  %3310 = vmatprep.subr.mxu0 0.0
  %3311 = vmatpush1.msra.mxu0 %v2945
  %3312 = vmatprep.subr.mxu0 0.0
  %3313 = vmatpush1.msra.mxu0 %v2946
  %3314 = vmatprep.subr.mxu0 0.0
  %3315 = vmatpush1.msra.mxu0 %v2947
  %3316 = vmatprep.subr.mxu0 0.0
  %3317 = vmatpush1.msra.mxu0 %v2948
  %3318 = vmatprep.subr.mxu0 0.0
  %3319 = vmatpush1.msra.mxu0 %v2949
  %3320 = vmatprep.subr.mxu0 0.0
  %3321 = vmatpush1.msra.mxu0 %v2950
  %3322 = vmatprep.subr.mxu0 0.0
  %3323 = vmatpush1.msra.mxu0 %v2951
  %3324 = vmatprep.subr.mxu0 0.0
  %3325 = vmatpush1.msra.mxu0 %v2952
  %3326 = vmatprep.subr.mxu0 0.0
  %3327 = vmatpush1.msra.mxu0 %v2953
  %3328 = vmatprep.subr.mxu0 0.0
  %3329 = vmatpush1.msra.mxu0 %v2954
  %3330 = vmatprep.subr.mxu0 0.0
  %3331 = vmatpush1.msra.mxu0 %v2955
  %3332 = vmatprep.subr.mxu0 0.0
  %3333 = vmatpush1.msra.mxu0 %v2956
  %3334 = vmatprep.subr.mxu0 0.0
  %3335 = vmatpush1.msra.mxu0 %v2957
  %3336 = vmatprep.subr.mxu0 0.0
  %3337 = vmatpush1.msra.mxu0 %v2958
  %3338 = vmatprep.subr.mxu0 0.0
  %3339 = vmatpush1.msra.mxu0 %v2959
  %3340 = vmatprep.subr.mxu0 0.0
  %3341 = vmatpush1.msra.mxu0 %v2960
  %3342 = vmatprep.subr.mxu0 0.0
  %3343 = vmatpush1.msra.mxu0 %v2961
  %3344 = vmatprep.subr.mxu0 0.0
  %3345 = vmatpush1.msra.mxu0 %v2962
  %3346 = vmatprep.subr.mxu0 0.0
  %3347 = vmatpush1.msra.mxu0 %v2963
  %3348 = vmatprep.subr.mxu0 0.0
  %3349 = vmatpush1.msra.mxu0 %v2964
  %3350 = vmatprep.subr.mxu0 0.0
  %3351 = vmatpush1.msra.mxu0 %v2965
  %3352 = vmatprep.subr.mxu0 0.0
  %3353 = vmatpush1.msra.mxu0 %v2966
  %3354 = vmatprep.subr.mxu0 0.0
  %3355 = vmatpush1.msra.mxu0 %v2967
  %3356 = vmatprep.subr.mxu0 0.0
  %3357 = vmatpush1.msra.mxu0 %v2968
  %3358 = vmatprep.mubr.f32.mxu0 %v3118
  %3359 = vmatmul.mubr.f32.gmra.mrb[0].mxu0 %v3117
  %v3360 = vpop.f32.mrb[0].mxu0
  %v3361 = vadd.f32 0.0, %v3360
  %v3362 = vpop.f32.mrb[0].mxu0
  %3363 = vmatprep.mubr.f32.mxu0 %v3120
  %3364 = vmatmul.mubr.f32.gmra.mrb[0].mxu0 %v3119
  %v3365 = vpop.f32.mrb[0].mxu0
  %v3366 = vadd.f32 0.0, %v3365
  %v3367 = vpop.f32.mrb[0].mxu0
  %3368 = vmatprep.mubr.f32.mxu0 %v3122
  %3369 = vmatmul.mubr.f32.gmra.mrb[0].mxu0 %v3121
  %v3370 = vpop.f32.mrb[0].mxu0
  %v3371 = vadd.f32 0.0, %v3370
  %v3372 = vpop.f32.mrb[0].mxu0
  %3373 = vmatprep.mubr.f32.mxu0 %v3124
  %3374 = vmatmul.mubr.f32.gmra.mrb[0].mxu0 %v3123
  %v3375 = vpop.f32.mrb[0].mxu0
  %v3376 = vadd.f32 0.0, %v3375
  %v3377 = vpop.f32.mrb[0].mxu0
  %3378 = vmatprep.mubr.f32.mxu0 %v3126
  %3379 = vmatmul.mubr.f32.gmra.mrb[0].mxu0 %v3125
  %v3380 = vpop.f32.mrb[0].mxu0
  %v3381 = vadd.f32 0.0, %v3380
  %v3382 = vpop.f32.mrb[0].mxu0
  %3383 = vmatprep.mubr.f32.mxu0 %v3128
  %3384 = vmatmul.mubr.f32.gmra.mrb[0].mxu0 %v3127
  %v3385 = vpop.f32.mrb[0].mxu0
  %v3386 = vadd.f32 0.0, %v3385
  %v3387 = vpop.f32.mrb[0].mxu0
  %3388 = vmatprep.mubr.f32.mxu0 %v3130
  %3389 = vmatmul.mubr.f32.gmra.mrb[0].mxu0 %v3129
  %v3390 = vpop.f32.mrb[0].mxu0
  %v3391 = vadd.f32 0.0, %v3390
  %v3392 = vpop.f32.mrb[0].mxu0
  %3393 = vmatprep.mubr.f32.mxu0 %v3132
  %3394 = vmatmul.mubr.f32.gmra.mrb[0].mxu0 %v3131
  %v3395 = vpop.f32.mrb[0].mxu0
  %v3396 = vadd.f32 0.0, %v3395
  %v3397 = vpop.f32.mrb[0].mxu0
  %3398 = vmatprep.mubr.f32.mxu0 %v3134
  %3399 = vmatmul.mubr.f32.gmra.mrb[0].mxu0 %v3133
  %v3400 = vpop.f32.mrb[0].mxu0
  %v3401 = vadd.f32 0.0, %v3400
  %v3402 = vpop.f32.mrb[0].mxu0
  %3403 = vmatprep.mubr.f32.mxu0 %v3136
  %3404 = vmatmul.mubr.f32.gmra.mrb[0].mxu0 %v3135
  %v3405 = vpop.f32.mrb[0].mxu0
  %v3406 = vadd.f32 0.0, %v3405
  %v3407 = vpop.f32.mrb[0].mxu0
  %3408 = vmatprep.mubr.f32.mxu0 %v3138
  %3409 = vmatmul.mubr.f32.gmra.mrb[0].mxu0 %v3137
  %v3410 = vpop.f32.mrb[0].mxu0
  %v3411 = vadd.f32 0.0, %v3410
  %v3412 = vpop.f32.mrb[0].mxu0
  %3413 = vmatprep.mubr.f32.mxu0 %v3140
  %3414 = vmatmul.mubr.f32.gmra.mrb[0].mxu0 %v3139
  %v3415 = vpop.f32.mrb[0].mxu0
  %v3416 = vadd.f32 0.0, %v3415
  %v3417 = vpop.f32.mrb[0].mxu0
  %3418 = vmatprep.mubr.f32.mxu0 %v3142
  %3419 = vmatmul.mubr.f32.gmra.mrb[0].mxu0 %v3141
  %v3420 = vpop.f32.mrb[0].mxu0
  %v3421 = vadd.f32 0.0, %v3420
  %v3422 = vpop.f32.mrb[0].mxu0
  %3423 = vmatprep.mubr.f32.mxu0 %v3144
  %3424 = vmatmul.mubr.f32.gmra.mrb[0].mxu0 %v3143
  %v3425 = vpop.f32.mrb[0].mxu0
  %v3426 = vadd.f32 0.0, %v3425
  %v3427 = vpop.f32.mrb[0].mxu0
  %3428 = vmatprep.mubr.f32.mxu0 %v3146
  %3429 = vmatmul.mubr.f32.gmra.mrb[0].mxu0 %v3145
  %v3430 = vpop.f32.mrb[0].mxu0
  %v3431 = vadd.f32 0.0, %v3430
  %v3432 = vpop.f32.mrb[0].mxu0
  %3433 = vmatprep.mubr.f32.mxu0 %v3148
  %3434 = vmatmul.mubr.f32.gmra.mrb[0].mxu0 %v3147
  %v3435 = vpop.f32.mrb[0].mxu0
  %v3436 = vadd.f32 0.0, %v3435
  %v3437 = vpop.f32.mrb[0].mxu0
  %3438 = vdwg.mxu0
  %v3439 = vmax.f32 %v3216, %v3361
  %v3440 = vmax.f32 %v3221, %v3366
  %v3441 = vmax.f32 %v3226, %v3371
  %v3442 = vmax.f32 %v3231, %v3376
  %v3443 = vmax.f32 %v3236, %v3381
  %v3444 = vmax.f32 %v3241, %v3386
  %v3445 = vmax.f32 %v3246, %v3391
  %v3446 = vmax.f32 %v3251, %v3396
  %v3447 = vmax.f32 %v3256, %v3401
  %v3448 = vmax.f32 %v3261, %v3406
  %v3449 = vmax.f32 %v3266, %v3411
  %v3450 = vmax.f32 %v3271, %v3416
  %v3451 = vmax.f32 %v3276, %v3421
  %v3452 = vmax.f32 %v3281, %v3426
  %v3453 = vmax.f32 %v3286, %v3431
  %v3454 = vmax.f32 %v3291, %v3436
  %vm3455 = vcmask 64512
  %3456 = vst.msk [vmem:[#allocation3] sm:$0xff] %vm3455, 0.0
  %3457 = vst.msk [vmem:[#allocation3 + $0x8] sm:$0xff] %vm3455, 0.0
  %3458 = vst.msk [vmem:[#allocation3 + $0x10] sm:$0xff] %vm3455, 0.0
  %3459 = vst.msk [vmem:[#allocation3 + $0xf0] sm:$0xff] %vm3455, 0.0
  %3460 = vst.msk [vmem:[#allocation3 + $0xf8] sm:$0xff] %vm3455, 0.0
  %3461 = vst.msk [vmem:[#allocation3 + $0x100] sm:$0xff] %vm3455, 0.0
  %s3462 = scalar_lea.vmem [#allocation3], 216
  %3463 = vst.msk [vmem:[%s3462] sm:$0xff] %vm3455, 0.0
  %3464 = vst.msk [vmem:[%s3462 + $0x8] sm:$0xff] %vm3455, 0.0
  %3465 = vst.msk [vmem:[%s3462 + $0x10] sm:$0xff] %vm3455, 0.0
  %3466 = vst.msk [vmem:[%s3462 + $0xf0] sm:$0xff] %vm3455, 0.0
  %3467 = vst.msk [vmem:[%s3462 + $0xf8] sm:$0xff] %vm3455, 0.0
  %3468 = vst.msk [vmem:[%s3462 + $0x100] sm:$0xff] %vm3455, 0.0
  %s3469 = scalar_lea.vmem [#allocation3], 24
  %3470 = vst.msk [vmem:[%s3469] sm:$0xff] %vm3455, 0.0
  %3471 = vst.msk [vmem:[%s3469 + $0x18] sm:$0xff] %vm3455, 0.0
  %3472 = vst.msk [vmem:[%s3469 + $0x30] sm:$0xff] %vm3455, 0.0
  %3473 = vst.msk [vmem:[%s3469 + $0x48] sm:$0xff] %vm3455, 0.0
  %3474 = vst.msk [vmem:[%s3469 + $0x60] sm:$0xff] %vm3455, 0.0
  %3475 = vst.msk [vmem:[%s3469 + $0x78] sm:$0xff] %vm3455, 0.0
  %3476 = vst.msk [vmem:[%s3469 + $0x90] sm:$0xff] %vm3455, 0.0
  %3477 = vst.msk [vmem:[%s3469 + $0xa8] sm:$0xff] %vm3455, 0.0
  %3478 = vst.msk [vmem:[%s3469 + $0xf0] sm:$0xff] %vm3455, 0.0
  %3479 = vst.msk [vmem:[%s3469 + $0x108] sm:$0xff] %vm3455, 0.0
  %3480 = vst.msk [vmem:[%s3469 + $0x120] sm:$0xff] %vm3455, 0.0
  %3481 = vst.msk [vmem:[%s3469 + $0x138] sm:$0xff] %vm3455, 0.0
  %3482 = vst.msk [vmem:[%s3469 + $0x150] sm:$0xff] %vm3455, 0.0
  %3483 = vst.msk [vmem:[%s3469 + $0x168] sm:$0xff] %vm3455, 0.0
  %3484 = vst.msk [vmem:[%s3469 + $0x180] sm:$0xff] %vm3455, 0.0
  %3485 = vst.msk [vmem:[%s3469 + $0x198] sm:$0xff] %vm3455, 0.0
  %3486 = vst.msk [vmem:[%s3469 + $0x10] sm:$0xff] %vm3455, 0.0
  %3487 = vst.msk [vmem:[%s3469 + $0x28] sm:$0xff] %vm3455, 0.0
  %3488 = vst.msk [vmem:[%s3469 + $0x40] sm:$0xff] %vm3455, 0.0
  %3489 = vst.msk [vmem:[%s3469 + $0x58] sm:$0xff] %vm3455, 0.0
  %3490 = vst.msk [vmem:[%s3469 + $0x70] sm:$0xff] %vm3455, 0.0
  %3491 = vst.msk [vmem:[%s3469 + $0x88] sm:$0xff] %vm3455, 0.0
  %3492 = vst.msk [vmem:[%s3469 + $0xa0] sm:$0xff] %vm3455, 0.0
  %3493 = vst.msk [vmem:[%s3469 + $0xb8] sm:$0xff] %vm3455, 0.0
  %3494 = vst.msk [vmem:[%s3469 + $0x100] sm:$0xff] %vm3455, 0.0
  %3495 = vst.msk [vmem:[%s3469 + $0x118] sm:$0xff] %vm3455, 0.0
  %3496 = vst.msk [vmem:[%s3469 + $0x130] sm:$0xff] %vm3455, 0.0
  %3497 = vst.msk [vmem:[%s3469 + $0x148] sm:$0xff] %vm3455, 0.0
  %3498 = vst.msk [vmem:[%s3469 + $0x160] sm:$0xff] %vm3455, 0.0
  %3499 = vst.msk [vmem:[%s3469 + $0x178] sm:$0xff] %vm3455, 0.0
  %3500 = vst.msk [vmem:[%s3469 + $0x190] sm:$0xff] %vm3455, 0.0
  %3501 = vst.msk [vmem:[%s3469 + $0x1a8] sm:$0xff] %vm3455, 0.0
  %3502 = vst.msk [vmem:[%s3469 + $0x8] sm:$0xff] %vm3455, %v3439
  %3503 = vst.msk [vmem:[%s3469 + $0x20] sm:$0xff] %vm3455, %v3440
  %3504 = vst.msk [vmem:[%s3469 + $0x38] sm:$0xff] %vm3455, %v3441
  %3505 = vst.msk [vmem:[%s3469 + $0x50] sm:$0xff] %vm3455, %v3442
  %3506 = vst.msk [vmem:[%s3469 + $0x68] sm:$0xff] %vm3455, %v3443
  %3507 = vst.msk [vmem:[%s3469 + $0x80] sm:$0xff] %vm3455, %v3444
  %3508 = vst.msk [vmem:[%s3469 + $0x98] sm:$0xff] %vm3455, %v3445
  %3509 = vst.msk [vmem:[%s3469 + $0xb0] sm:$0xff] %vm3455, %v3446
  %3510 = vst.msk [vmem:[%s3469 + $0xf8] sm:$0xff] %vm3455, %v3447
  %3511 = vst.msk [vmem:[%s3469 + $0x110] sm:$0xff] %vm3455, %v3448
  %3512 = vst.msk [vmem:[%s3469 + $0x128] sm:$0xff] %vm3455, %v3449
  %3513 = vst.msk [vmem:[%s3469 + $0x140] sm:$0xff] %vm3455, %v3450
  %3514 = vst.msk [vmem:[%s3469 + $0x158] sm:$0xff] %vm3455, %v3451
  %3515 = vst.msk [vmem:[%s3469 + $0x170] sm:$0xff] %vm3455, %v3452
  %3516 = vst.msk [vmem:[%s3469 + $0x188] sm:$0xff] %vm3455, %v3453
  %3517 = vst.msk [vmem:[%s3469 + $0x1a0] sm:$0xff] %vm3455, %v3454
  %v3518 = vld [vmem:[#allocation3 + $0x7] sm:$0xff]
  %v3519 = vld [vmem:[#allocation3 + $0x1f] sm:$0xff]
  %v3520 = vld [vmem:[#allocation3 + $0x37] sm:$0xff]
  %v3521 = vld [vmem:[#allocation3 + $0x4f] sm:$0xff]
  %v3522 = vld [vmem:[#allocation3 + $0x67] sm:$0xff]
  %v3523 = vld [vmem:[#allocation3 + $0x7f] sm:$0xff]
  %v3524 = vld [vmem:[#allocation3 + $0x97] sm:$0xff]
  %v3525 = vld [vmem:[#allocation3 + $0xaf] sm:$0xff]
  %v3526 = vld [vmem:[#allocation3 + $0xf7] sm:$0xff]
  %v3527 = vld [vmem:[#allocation3 + $0x10f] sm:$0xff]
  %v3528 = vld [vmem:[#allocation3 + $0x127] sm:$0xff]
  %v3529 = vld [vmem:[#allocation3 + $0x13f] sm:$0xff]
  %v3530 = vld [vmem:[#allocation3 + $0x157] sm:$0xff]
  %v3531 = vld [vmem:[#allocation3 + $0x16f] sm:$0xff]
  %v3532 = vld [vmem:[#allocation3 + $0x187] sm:$0xff]
  %v3533 = vld [vmem:[#allocation3 + $0x19f] sm:$0xff]
  %v3534 = vpack.c.bf16 %v3519, %v3518
  %v3535 = vpack.c.bf16 %v3521, %v3520
  %v3536 = vpack.c.bf16 %v3523, %v3522
  %v3537 = vpack.c.bf16 %v3525, %v3524
  %v3538 = vpack.c.bf16 %v3527, %v3526
  %v3539 = vpack.c.bf16 %v3529, %v3528
  %v3540 = vpack.c.bf16 %v3531, %v3530
  %v3541 = vpack.c.bf16 %v3533, %v3532
  %3542 = vst.msk [vmem:[#allocation5] sm:$0xff] %vm3455, %v3534
  %3543 = vst.msk [vmem:[#allocation5 + $0x8] sm:$0xff] %vm3455, %v3535
  %3544 = vst.msk [vmem:[#allocation5 + $0x10] sm:$0xff] %vm3455, %v3536
  %3545 = vst.msk [vmem:[#allocation5 + $0x18] sm:$0xff] %vm3455, %v3537
  %3546 = vst.msk [vmem:[#allocation5 + $0x20] sm:$0xff] %vm3455, %v3538
  %3547 = vst.msk [vmem:[#allocation5 + $0x28] sm:$0xff] %vm3455, %v3539
  %3548 = vst.msk [vmem:[#allocation5 + $0x30] sm:$0xff] %vm3455, %v3540
  %3549 = vst.msk [vmem:[#allocation5 + $0x38] sm:$0xff] %vm3455, %v3541
  %v3550 = vld [vmem:[#allocation3 + $0x8] sm:$0xff]
  %v3551 = vld [vmem:[#allocation3 + $0x20] sm:$0xff]
  %v3552 = vld [vmem:[#allocation3 + $0x38] sm:$0xff]
  %v3553 = vld [vmem:[#allocation3 + $0x50] sm:$0xff]
  %v3554 = vld [vmem:[#allocation3 + $0x68] sm:$0xff]
  %v3555 = vld [vmem:[#allocation3 + $0x80] sm:$0xff]
  %v3556 = vld [vmem:[#allocation3 + $0x98] sm:$0xff]
  %v3557 = vld [vmem:[#allocation3 + $0xb0] sm:$0xff]
  %v3558 = vld [vmem:[#allocation3 + $0xf8] sm:$0xff]
  %v3559 = vld [vmem:[#allocation3 + $0x110] sm:$0xff]
  %v3560 = vld [vmem:[#allocation3 + $0x128] sm:$0xff]
  %v3561 = vld [vmem:[#allocation3 + $0x140] sm:$0xff]
  %v3562 = vld [vmem:[#allocation3 + $0x158] sm:$0xff]
  %v3563 = vld [vmem:[#allocation3 + $0x170] sm:$0xff]
  %v3564 = vld [vmem:[#allocation3 + $0x188] sm:$0xff]
  %v3565 = vld [vmem:[#allocation3 + $0x1a0] sm:$0xff]
  %v3566 = vpack.c.bf16 %v3551, %v3550
  %v3567 = vpack.c.bf16 %v3553, %v3552
  %v3568 = vpack.c.bf16 %v3555, %v3554
  %v3569 = vpack.c.bf16 %v3557, %v3556
  %v3570 = vpack.c.bf16 %v3559, %v3558
  %v3571 = vpack.c.bf16 %v3561, %v3560
  %v3572 = vpack.c.bf16 %v3563, %v3562
  %v3573 = vpack.c.bf16 %v3565, %v3564
  %3582 = vrot.lane.b32.xlu0 %v3566, 8
  %v3583 = vpop.permute.xlu0 %3582
  %3584 = vrot.lane.b32.xlu0 %v3567, 8
  %v3585 = vpop.permute.xlu0 %3584
  %3586 = vrot.lane.b32.xlu0 %v3568, 8
  %v3587 = vpop.permute.xlu0 %3586
  %3588 = vrot.lane.b32.xlu0 %v3569, 8
  %v3589 = vpop.permute.xlu0 %3588
  %3590 = vrot.lane.b32.xlu0 %v3570, 8
  %v3591 = vpop.permute.xlu0 %3590
  %3592 = vrot.lane.b32.xlu0 %v3571, 8
  %v3593 = vpop.permute.xlu0 %3592
  %3594 = vrot.lane.b32.xlu0 %v3572, 8
  %v3595 = vpop.permute.xlu0 %3594
  %3596 = vrot.lane.b32.xlu0 %v3573, 8
  %v3597 = vpop.permute.xlu0 %3596
  %vm3606 = vcmask 130112
  %3607 = vst.msk [vmem:[#allocation5] sm:$0xff] %vm3606, %v3583
  %3608 = vst.msk [vmem:[#allocation5 + $0x8] sm:$0xff] %vm3606, %v3585
  %3609 = vst.msk [vmem:[#allocation5 + $0x10] sm:$0xff] %vm3606, %v3587
  %3610 = vst.msk [vmem:[#allocation5 + $0x18] sm:$0xff] %vm3606, %v3589
  %3611 = vst.msk [vmem:[#allocation5 + $0x20] sm:$0xff] %vm3606, %v3591
  %3612 = vst.msk [vmem:[#allocation5 + $0x28] sm:$0xff] %vm3606, %v3593
  %3613 = vst.msk [vmem:[#allocation5 + $0x30] sm:$0xff] %vm3606, %v3595
  %3614 = vst.msk [vmem:[#allocation5 + $0x38] sm:$0xff] %vm3606, %v3597
  %v3615 = vld [vmem:[#allocation3 + $0x9] sm:$0xff]
  %v3616 = vld [vmem:[#allocation3 + $0x21] sm:$0xff]
  %v3617 = vld [vmem:[#allocation3 + $0x39] sm:$0xff]
  %v3618 = vld [vmem:[#allocation3 + $0x51] sm:$0xff]
  %v3619 = vld [vmem:[#allocation3 + $0x69] sm:$0xff]
  %v3620 = vld [vmem:[#allocation3 + $0x81] sm:$0xff]
  %v3621 = vld [vmem:[#allocation3 + $0x99] sm:$0xff]
  %v3622 = vld [vmem:[#allocation3 + $0xb1] sm:$0xff]
  %v3623 = vld [vmem:[#allocation3 + $0xf9] sm:$0xff]
  %v3624 = vld [vmem:[#allocation3 + $0x111] sm:$0xff]
  %v3625 = vld [vmem:[#allocation3 + $0x129] sm:$0xff]
  %v3626 = vld [vmem:[#allocation3 + $0x141] sm:$0xff]
  %v3627 = vld [vmem:[#allocation3 + $0x159] sm:$0xff]
  %v3628 = vld [vmem:[#allocation3 + $0x171] sm:$0xff]
  %v3629 = vld [vmem:[#allocation3 + $0x189] sm:$0xff]
  %v3630 = vld [vmem:[#allocation3 + $0x1a1] sm:$0xff]
  %v3631 = vpack.c.bf16 %v3616, %v3615
  %v3632 = vpack.c.bf16 %v3618, %v3617
  %v3633 = vpack.c.bf16 %v3620, %v3619
  %v3634 = vpack.c.bf16 %v3622, %v3621
  %v3635 = vpack.c.bf16 %v3624, %v3623
  %v3636 = vpack.c.bf16 %v3626, %v3625
  %v3637 = vpack.c.bf16 %v3628, %v3627
  %v3638 = vpack.c.bf16 %v3630, %v3629
  %3647 = vrot.lane.b32.xlu0 %v3631, 16
  %v3648 = vpop.permute.xlu0 %3647
  %3649 = vrot.lane.b32.xlu0 %v3632, 16
  %v3650 = vpop.permute.xlu0 %3649
  %3651 = vrot.lane.b32.xlu0 %v3633, 16
  %v3652 = vpop.permute.xlu0 %3651
  %3653 = vrot.lane.b32.xlu0 %v3634, 16
  %v3654 = vpop.permute.xlu0 %3653
  %3655 = vrot.lane.b32.xlu0 %v3635, 16
  %v3656 = vpop.permute.xlu0 %3655
  %3657 = vrot.lane.b32.xlu0 %v3636, 16
  %v3658 = vpop.permute.xlu0 %3657
  %3659 = vrot.lane.b32.xlu0 %v3637, 16
  %v3660 = vpop.permute.xlu0 %3659
  %3661 = vrot.lane.b32.xlu0 %v3638, 16
  %v3662 = vpop.permute.xlu0 %3661
  %vm3671 = vcmask 195712
  %3672 = vst.msk [vmem:[#allocation5] sm:$0xff] %vm3671, %v3648
  %3673 = vst.msk [vmem:[#allocation5 + $0x8] sm:$0xff] %vm3671, %v3650
  %3674 = vst.msk [vmem:[#allocation5 + $0x10] sm:$0xff] %vm3671, %v3652
  %3675 = vst.msk [vmem:[#allocation5 + $0x18] sm:$0xff] %vm3671, %v3654
  %3676 = vst.msk [vmem:[#allocation5 + $0x20] sm:$0xff] %vm3671, %v3656
  %3677 = vst.msk [vmem:[#allocation5 + $0x28] sm:$0xff] %vm3671, %v3658
  %3678 = vst.msk [vmem:[#allocation5 + $0x30] sm:$0xff] %vm3671, %v3660
  %3679 = vst.msk [vmem:[#allocation5 + $0x38] sm:$0xff] %vm3671, %v3662
  %v3680 = vld [vmem:[%s3469 + $0x7] sm:$0xff]
  %v3681 = vld [vmem:[%s3469 + $0x1f] sm:$0xff]
  %v3682 = vld [vmem:[%s3469 + $0x37] sm:$0xff]
  %v3683 = vld [vmem:[%s3469 + $0x4f] sm:$0xff]
  %v3684 = vld [vmem:[%s3469 + $0x67] sm:$0xff]
  %v3685 = vld [vmem:[%s3469 + $0x7f] sm:$0xff]
  %v3686 = vld [vmem:[%s3469 + $0x97] sm:$0xff]
  %v3687 = vld [vmem:[%s3469 + $0xaf] sm:$0xff]
  %v3688 = vld [vmem:[%s3469 + $0xf7] sm:$0xff]
  %v3689 = vld [vmem:[%s3469 + $0x10f] sm:$0xff]
  %v3690 = vld [vmem:[%s3469 + $0x127] sm:$0xff]
  %v3691 = vld [vmem:[%s3469 + $0x13f] sm:$0xff]
  %v3692 = vld [vmem:[%s3469 + $0x157] sm:$0xff]
  %v3693 = vld [vmem:[%s3469 + $0x16f] sm:$0xff]
  %v3694 = vld [vmem:[%s3469 + $0x187] sm:$0xff]
  %v3695 = vld [vmem:[%s3469 + $0x19f] sm:$0xff]
  %v3696 = vpack.c.bf16 %v3681, %v3680
  %v3697 = vpack.c.bf16 %v3683, %v3682
  %v3698 = vpack.c.bf16 %v3685, %v3684
  %v3699 = vpack.c.bf16 %v3687, %v3686
  %v3700 = vpack.c.bf16 %v3689, %v3688
  %v3701 = vpack.c.bf16 %v3691, %v3690
  %v3702 = vpack.c.bf16 %v3693, %v3692
  %v3703 = vpack.c.bf16 %v3695, %v3694
  %3712 = vrot.lane.b32.xlu0 %v3696, 24
  %v3713 = vpop.permute.xlu0 %3712
  %3714 = vrot.lane.b32.xlu0 %v3697, 24
  %v3715 = vpop.permute.xlu0 %3714
  %3716 = vrot.lane.b32.xlu0 %v3698, 24
  %v3717 = vpop.permute.xlu0 %3716
  %3718 = vrot.lane.b32.xlu0 %v3699, 24
  %v3719 = vpop.permute.xlu0 %3718
  %3720 = vrot.lane.b32.xlu0 %v3700, 24
  %v3721 = vpop.permute.xlu0 %3720
  %3722 = vrot.lane.b32.xlu0 %v3701, 24
  %v3723 = vpop.permute.xlu0 %3722
  %3724 = vrot.lane.b32.xlu0 %v3702, 24
  %v3725 = vpop.permute.xlu0 %3724
  %3726 = vrot.lane.b32.xlu0 %v3703, 24
  %v3727 = vpop.permute.xlu0 %3726
  %vm3736 = vcmask 261312
  %3737 = vst.msk [vmem:[#allocation5] sm:$0xff] %vm3736, %v3713
  %3738 = vst.msk [vmem:[#allocation5 + $0x8] sm:$0xff] %vm3736, %v3715
  %3739 = vst.msk [vmem:[#allocation5 + $0x10] sm:$0xff] %vm3736, %v3717
  %3740 = vst.msk [vmem:[#allocation5 + $0x18] sm:$0xff] %vm3736, %v3719
  %3741 = vst.msk [vmem:[#allocation5 + $0x20] sm:$0xff] %vm3736, %v3721
  %3742 = vst.msk [vmem:[#allocation5 + $0x28] sm:$0xff] %vm3736, %v3723
  %3743 = vst.msk [vmem:[#allocation5 + $0x30] sm:$0xff] %vm3736, %v3725
  %3744 = vst.msk [vmem:[#allocation5 + $0x38] sm:$0xff] %vm3736, %v3727
  %v3745 = vld [vmem:[%s3469 + $0x8] sm:$0xff]
  %v3746 = vld [vmem:[%s3469 + $0x20] sm:$0xff]
  %v3747 = vld [vmem:[%s3469 + $0x38] sm:$0xff]
  %v3748 = vld [vmem:[%s3469 + $0x50] sm:$0xff]
  %v3749 = vld [vmem:[%s3469 + $0x68] sm:$0xff]
  %v3750 = vld [vmem:[%s3469 + $0x80] sm:$0xff]
  %v3751 = vld [vmem:[%s3469 + $0x98] sm:$0xff]
  %v3752 = vld [vmem:[%s3469 + $0xb0] sm:$0xff]
  %v3753 = vld [vmem:[%s3469 + $0xf8] sm:$0xff]
  %v3754 = vld [vmem:[%s3469 + $0x110] sm:$0xff]
  %v3755 = vld [vmem:[%s3469 + $0x128] sm:$0xff]
  %v3756 = vld [vmem:[%s3469 + $0x140] sm:$0xff]
  %v3757 = vld [vmem:[%s3469 + $0x158] sm:$0xff]
  %v3758 = vld [vmem:[%s3469 + $0x170] sm:$0xff]
  %v3759 = vld [vmem:[%s3469 + $0x188] sm:$0xff]
  %v3760 = vld [vmem:[%s3469 + $0x1a0] sm:$0xff]
  %v3761 = vpack.c.bf16 %v3746, %v3745
  %v3762 = vpack.c.bf16 %v3748, %v3747
  %v3763 = vpack.c.bf16 %v3750, %v3749
  %v3764 = vpack.c.bf16 %v3752, %v3751
  %v3765 = vpack.c.bf16 %v3754, %v3753
  %v3766 = vpack.c.bf16 %v3756, %v3755
  %v3767 = vpack.c.bf16 %v3758, %v3757
  %v3768 = vpack.c.bf16 %v3760, %v3759
  %3777 = vrot.lane.b32.xlu0 %v3761, 32
  %v3778 = vpop.permute.xlu0 %3777
  %3779 = vrot.lane.b32.xlu0 %v3762, 32
  %v3780 = vpop.permute.xlu0 %3779
  %3781 = vrot.lane.b32.xlu0 %v3763, 32
  %v3782 = vpop.permute.xlu0 %3781
  %3783 = vrot.lane.b32.xlu0 %v3764, 32
  %v3784 = vpop.permute.xlu0 %3783
  %3785 = vrot.lane.b32.xlu0 %v3765, 32
  %v3786 = vpop.permute.xlu0 %3785
  %3787 = vrot.lane.b32.xlu0 %v3766, 32
  %v3788 = vpop.permute.xlu0 %3787
  %3789 = vrot.lane.b32.xlu0 %v3767, 32
  %v3790 = vpop.permute.xlu0 %3789
  %3791 = vrot.lane.b32.xlu0 %v3768, 32
  %v3792 = vpop.permute.xlu0 %3791
  %vm3801 = vcmask 326912
  %3802 = vst.msk [vmem:[#allocation5] sm:$0xff] %vm3801, %v3778
  %3803 = vst.msk [vmem:[#allocation5 + $0x8] sm:$0xff] %vm3801, %v3780
  %3804 = vst.msk [vmem:[#allocation5 + $0x10] sm:$0xff] %vm3801, %v3782
  %3805 = vst.msk [vmem:[#allocation5 + $0x18] sm:$0xff] %vm3801, %v3784
  %3806 = vst.msk [vmem:[#allocation5 + $0x20] sm:$0xff] %vm3801, %v3786
  %3807 = vst.msk [vmem:[#allocation5 + $0x28] sm:$0xff] %vm3801, %v3788
  %3808 = vst.msk [vmem:[#allocation5 + $0x30] sm:$0xff] %vm3801, %v3790
  %3809 = vst.msk [vmem:[#allocation5 + $0x38] sm:$0xff] %vm3801, %v3792
  %v3810 = vld [vmem:[%s3469 + $0x9] sm:$0xff]
  %v3811 = vld [vmem:[%s3469 + $0x21] sm:$0xff]
  %v3812 = vld [vmem:[%s3469 + $0x39] sm:$0xff]
  %v3813 = vld [vmem:[%s3469 + $0x51] sm:$0xff]
  %v3814 = vld [vmem:[%s3469 + $0x69] sm:$0xff]
  %v3815 = vld [vmem:[%s3469 + $0x81] sm:$0xff]
  %v3816 = vld [vmem:[%s3469 + $0x99] sm:$0xff]
  %v3817 = vld [vmem:[%s3469 + $0xb1] sm:$0xff]
  %v3818 = vld [vmem:[%s3469 + $0xf9] sm:$0xff]
  %v3819 = vld [vmem:[%s3469 + $0x111] sm:$0xff]
  %v3820 = vld [vmem:[%s3469 + $0x129] sm:$0xff]
  %v3821 = vld [vmem:[%s3469 + $0x141] sm:$0xff]
  %v3822 = vld [vmem:[%s3469 + $0x159] sm:$0xff]
  %v3823 = vld [vmem:[%s3469 + $0x171] sm:$0xff]
  %v3824 = vld [vmem:[%s3469 + $0x189] sm:$0xff]
  %v3825 = vld [vmem:[%s3469 + $0x1a1] sm:$0xff]
  %v3826 = vpack.c.bf16 %v3811, %v3810
  %v3827 = vpack.c.bf16 %v3813, %v3812
  %v3828 = vpack.c.bf16 %v3815, %v3814
  %v3829 = vpack.c.bf16 %v3817, %v3816
  %v3830 = vpack.c.bf16 %v3819, %v3818
  %v3831 = vpack.c.bf16 %v3821, %v3820
  %v3832 = vpack.c.bf16 %v3823, %v3822
  %v3833 = vpack.c.bf16 %v3825, %v3824
  %3842 = vrot.lane.b32.xlu0 %v3826, 40
  %v3843 = vpop.permute.xlu0 %3842
  %3844 = vrot.lane.b32.xlu0 %v3827, 40
  %v3845 = vpop.permute.xlu0 %3844
  %3846 = vrot.lane.b32.xlu0 %v3828, 40
  %v3847 = vpop.permute.xlu0 %3846
  %3848 = vrot.lane.b32.xlu0 %v3829, 40
  %v3849 = vpop.permute.xlu0 %3848
  %3850 = vrot.lane.b32.xlu0 %v3830, 40
  %v3851 = vpop.permute.xlu0 %3850
  %3852 = vrot.lane.b32.xlu0 %v3831, 40
  %v3853 = vpop.permute.xlu0 %3852
  %3854 = vrot.lane.b32.xlu0 %v3832, 40
  %v3855 = vpop.permute.xlu0 %3854
  %3856 = vrot.lane.b32.xlu0 %v3833, 40
  %v3857 = vpop.permute.xlu0 %3856
  %vm3866 = vcmask 392512
  %3867 = vst.msk [vmem:[#allocation5] sm:$0xff] %vm3866, %v3843
  %3868 = vst.msk [vmem:[#allocation5 + $0x8] sm:$0xff] %vm3866, %v3845
  %3869 = vst.msk [vmem:[#allocation5 + $0x10] sm:$0xff] %vm3866, %v3847
  %3870 = vst.msk [vmem:[#allocation5 + $0x18] sm:$0xff] %vm3866, %v3849
  %3871 = vst.msk [vmem:[#allocation5 + $0x20] sm:$0xff] %vm3866, %v3851
  %3872 = vst.msk [vmem:[#allocation5 + $0x28] sm:$0xff] %vm3866, %v3853
  %3873 = vst.msk [vmem:[#allocation5 + $0x30] sm:$0xff] %vm3866, %v3855
  %3874 = vst.msk [vmem:[#allocation5 + $0x38] sm:$0xff] %vm3866, %v3857
  %s3875 = scalar_lea.vmem [#allocation3], 48
  %v3876 = vld [vmem:[%s3875 + $0x7] sm:$0xff]
  %v3877 = vld [vmem:[%s3875 + $0x1f] sm:$0xff]
  %v3878 = vld [vmem:[%s3875 + $0x37] sm:$0xff]
  %v3879 = vld [vmem:[%s3875 + $0x4f] sm:$0xff]
  %v3880 = vld [vmem:[%s3875 + $0x67] sm:$0xff]
  %v3881 = vld [vmem:[%s3875 + $0x7f] sm:$0xff]
  %v3882 = vld [vmem:[%s3875 + $0x97] sm:$0xff]
  %v3883 = vld [vmem:[%s3875 + $0xaf] sm:$0xff]
  %v3884 = vld [vmem:[%s3875 + $0xf7] sm:$0xff]
  %v3885 = vld [vmem:[%s3875 + $0x10f] sm:$0xff]
  %v3886 = vld [vmem:[%s3875 + $0x127] sm:$0xff]
  %v3887 = vld [vmem:[%s3875 + $0x13f] sm:$0xff]
  %v3888 = vld [vmem:[%s3875 + $0x157] sm:$0xff]
  %v3889 = vld [vmem:[%s3875 + $0x16f] sm:$0xff]
  %v3890 = vld [vmem:[%s3875 + $0x187] sm:$0xff]
  %v3891 = vld [vmem:[%s3875 + $0x19f] sm:$0xff]
  %v3892 = vpack.c.bf16 %v3877, %v3876
  %v3893 = vpack.c.bf16 %v3879, %v3878
  %v3894 = vpack.c.bf16 %v3881, %v3880
  %v3895 = vpack.c.bf16 %v3883, %v3882
  %v3896 = vpack.c.bf16 %v3885, %v3884
  %v3897 = vpack.c.bf16 %v3887, %v3886
  %v3898 = vpack.c.bf16 %v3889, %v3888
  %v3899 = vpack.c.bf16 %v3891, %v3890
  %3908 = vrot.lane.b32.xlu0 %v3892, 48
  %v3909 = vpop.permute.xlu0 %3908
  %3910 = vrot.lane.b32.xlu0 %v3893, 48
  %v3911 = vpop.permute.xlu0 %3910
  %3912 = vrot.lane.b32.xlu0 %v3894, 48
  %v3913 = vpop.permute.xlu0 %3912
  %3914 = vrot.lane.b32.xlu0 %v3895, 48
  %v3915 = vpop.permute.xlu0 %3914
  %3916 = vrot.lane.b32.xlu0 %v3896, 48
  %v3917 = vpop.permute.xlu0 %3916
  %3918 = vrot.lane.b32.xlu0 %v3897, 48
  %v3919 = vpop.permute.xlu0 %3918
  %3920 = vrot.lane.b32.xlu0 %v3898, 48
  %v3921 = vpop.permute.xlu0 %3920
  %3922 = vrot.lane.b32.xlu0 %v3899, 48
  %v3923 = vpop.permute.xlu0 %3922
  %vm3932 = vcmask 458112
  %3933 = vst.msk [vmem:[#allocation5] sm:$0xff] %vm3932, %v3909
  %3934 = vst.msk [vmem:[#allocation5 + $0x8] sm:$0xff] %vm3932, %v3911
  %3935 = vst.msk [vmem:[#allocation5 + $0x10] sm:$0xff] %vm3932, %v3913
  %3936 = vst.msk [vmem:[#allocation5 + $0x18] sm:$0xff] %vm3932, %v3915
  %3937 = vst.msk [vmem:[#allocation5 + $0x20] sm:$0xff] %vm3932, %v3917
  %3938 = vst.msk [vmem:[#allocation5 + $0x28] sm:$0xff] %vm3932, %v3919
  %3939 = vst.msk [vmem:[#allocation5 + $0x30] sm:$0xff] %vm3932, %v3921
  %3940 = vst.msk [vmem:[#allocation5 + $0x38] sm:$0xff] %vm3932, %v3923
  %v3941 = vld [vmem:[%s3875 + $0x8] sm:$0xff]
  %v3942 = vld [vmem:[%s3875 + $0x20] sm:$0xff]
  %v3943 = vld [vmem:[%s3875 + $0x38] sm:$0xff]
  %v3944 = vld [vmem:[%s3875 + $0x50] sm:$0xff]
  %v3945 = vld [vmem:[%s3875 + $0x68] sm:$0xff]
  %v3946 = vld [vmem:[%s3875 + $0x80] sm:$0xff]
  %v3947 = vld [vmem:[%s3875 + $0x98] sm:$0xff]
  %v3948 = vld [vmem:[%s3875 + $0xb0] sm:$0xff]
  %v3949 = vld [vmem:[%s3875 + $0xf8] sm:$0xff]
  %v3950 = vld [vmem:[%s3875 + $0x110] sm:$0xff]
  %v3951 = vld [vmem:[%s3875 + $0x128] sm:$0xff]
  %v3952 = vld [vmem:[%s3875 + $0x140] sm:$0xff]
  %v3953 = vld [vmem:[%s3875 + $0x158] sm:$0xff]
  %v3954 = vld [vmem:[%s3875 + $0x170] sm:$0xff]
  %v3955 = vld [vmem:[%s3875 + $0x188] sm:$0xff]
  %v3956 = vld [vmem:[%s3875 + $0x1a0] sm:$0xff]
  %v3957 = vpack.c.bf16 %v3942, %v3941
  %v3958 = vpack.c.bf16 %v3944, %v3943
  %v3959 = vpack.c.bf16 %v3946, %v3945
  %v3960 = vpack.c.bf16 %v3948, %v3947
  %v3961 = vpack.c.bf16 %v3950, %v3949
  %v3962 = vpack.c.bf16 %v3952, %v3951
  %v3963 = vpack.c.bf16 %v3954, %v3953
  %v3964 = vpack.c.bf16 %v3956, %v3955
  %3973 = vrot.lane.b32.xlu0 %v3957, 56
  %v3974 = vpop.permute.xlu0 %3973
  %3975 = vrot.lane.b32.xlu0 %v3958, 56
  %v3976 = vpop.permute.xlu0 %3975
  %3977 = vrot.lane.b32.xlu0 %v3959, 56
  %v3978 = vpop.permute.xlu0 %3977
  %3979 = vrot.lane.b32.xlu0 %v3960, 56
  %v3980 = vpop.permute.xlu0 %3979
  %3981 = vrot.lane.b32.xlu0 %v3961, 56
  %v3982 = vpop.permute.xlu0 %3981
  %3983 = vrot.lane.b32.xlu0 %v3962, 56
  %v3984 = vpop.permute.xlu0 %3983
  %3985 = vrot.lane.b32.xlu0 %v3963, 56
  %v3986 = vpop.permute.xlu0 %3985
  %3987 = vrot.lane.b32.xlu0 %v3964, 56
  %v3988 = vpop.permute.xlu0 %3987
  %vm3997 = vcmask 523712
  %3998 = vst.msk [vmem:[#allocation5] sm:$0xff] %vm3997, %v3974
  %3999 = vst.msk [vmem:[#allocation5 + $0x8] sm:$0xff] %vm3997, %v3976
  %4000 = vst.msk [vmem:[#allocation5 + $0x10] sm:$0xff] %vm3997, %v3978
  %4001 = vst.msk [vmem:[#allocation5 + $0x18] sm:$0xff] %vm3997, %v3980
  %4002 = vst.msk [vmem:[#allocation5 + $0x20] sm:$0xff] %vm3997, %v3982
  %4003 = vst.msk [vmem:[#allocation5 + $0x28] sm:$0xff] %vm3997, %v3984
  %4004 = vst.msk [vmem:[#allocation5 + $0x30] sm:$0xff] %vm3997, %v3986
  %4005 = vst.msk [vmem:[#allocation5 + $0x38] sm:$0xff] %vm3997, %v3988
  %v4006 = vld [vmem:[%s3875 + $0x9] sm:$0xff]
  %v4007 = vld [vmem:[%s3875 + $0x21] sm:$0xff]
  %v4008 = vld [vmem:[%s3875 + $0x39] sm:$0xff]
  %v4009 = vld [vmem:[%s3875 + $0x51] sm:$0xff]
  %v4010 = vld [vmem:[%s3875 + $0x69] sm:$0xff]
  %v4011 = vld [vmem:[%s3875 + $0x81] sm:$0xff]
  %v4012 = vld [vmem:[%s3875 + $0x99] sm:$0xff]
  %v4013 = vld [vmem:[%s3875 + $0xb1] sm:$0xff]
  %v4014 = vld [vmem:[%s3875 + $0xf9] sm:$0xff]
  %v4015 = vld [vmem:[%s3875 + $0x111] sm:$0xff]
  %v4016 = vld [vmem:[%s3875 + $0x129] sm:$0xff]
  %v4017 = vld [vmem:[%s3875 + $0x141] sm:$0xff]
  %v4018 = vld [vmem:[%s3875 + $0x159] sm:$0xff]
  %v4019 = vld [vmem:[%s3875 + $0x171] sm:$0xff]
  %v4020 = vld [vmem:[%s3875 + $0x189] sm:$0xff]
  %v4021 = vld [vmem:[%s3875 + $0x1a1] sm:$0xff]
  %v4022 = vpack.c.bf16 %v4007, %v4006
  %v4023 = vpack.c.bf16 %v4009, %v4008
  %v4024 = vpack.c.bf16 %v4011, %v4010
  %v4025 = vpack.c.bf16 %v4013, %v4012
  %v4026 = vpack.c.bf16 %v4015, %v4014
  %v4027 = vpack.c.bf16 %v4017, %v4016
  %v4028 = vpack.c.bf16 %v4019, %v4018
  %v4029 = vpack.c.bf16 %v4021, %v4020
  %4038 = vrot.lane.b32.xlu0 %v4022, 64
  %v4039 = vpop.permute.xlu0 %4038
  %4040 = vrot.lane.b32.xlu0 %v4023, 64
  %v4041 = vpop.permute.xlu0 %4040
  %4042 = vrot.lane.b32.xlu0 %v4024, 64
  %v4043 = vpop.permute.xlu0 %4042
  %4044 = vrot.lane.b32.xlu0 %v4025, 64
  %v4045 = vpop.permute.xlu0 %4044
  %4046 = vrot.lane.b32.xlu0 %v4026, 64
  %v4047 = vpop.permute.xlu0 %4046
  %4048 = vrot.lane.b32.xlu0 %v4027, 64
  %v4049 = vpop.permute.xlu0 %4048
  %4050 = vrot.lane.b32.xlu0 %v4028, 64
  %v4051 = vpop.permute.xlu0 %4050
  %4052 = vrot.lane.b32.xlu0 %v4029, 64
  %v4053 = vpop.permute.xlu0 %4052
  %vm4062 = vcmask 589312
  %4063 = vst.msk [vmem:[#allocation5] sm:$0xff] %vm4062, %v4039
  %4064 = vst.msk [vmem:[#allocation5 + $0x8] sm:$0xff] %vm4062, %v4041
  %4065 = vst.msk [vmem:[#allocation5 + $0x10] sm:$0xff] %vm4062, %v4043
  %4066 = vst.msk [vmem:[#allocation5 + $0x18] sm:$0xff] %vm4062, %v4045
  %4067 = vst.msk [vmem:[#allocation5 + $0x20] sm:$0xff] %vm4062, %v4047
  %4068 = vst.msk [vmem:[#allocation5 + $0x28] sm:$0xff] %vm4062, %v4049
  %4069 = vst.msk [vmem:[#allocation5 + $0x30] sm:$0xff] %vm4062, %v4051
  %4070 = vst.msk [vmem:[#allocation5 + $0x38] sm:$0xff] %vm4062, %v4053
  %v4071 = vld [vmem:[#allocation5] sm:$0xff]
  %v4072 = vld [vmem:[#allocation5 + $0x8] sm:$0xff]
  %v4073 = vld [vmem:[#allocation5 + $0x10] sm:$0xff]
  %v4074 = vld [vmem:[#allocation5 + $0x18] sm:$0xff]
  %v4075 = vld [vmem:[#allocation5 + $0x20] sm:$0xff]
  %v4076 = vld [vmem:[#allocation5 + $0x28] sm:$0xff]
  %v4077 = vld [vmem:[#allocation5 + $0x30] sm:$0xff]
  %v4078 = vld [vmem:[#allocation5 + $0x38] sm:$0xff]
  %v4079 = vld [vmem:[%s3] sm:$0xf]
  %v4080 = vld [vmem:[%s3 + $0x4] sm:$0xf]
  %v4081 = vld [vmem:[%s3 + $0x8] sm:$0xf]
  %v4082 = vld [vmem:[%s3 + $0xc] sm:$0xf]
  %v4083 = vld [vmem:[%s3 + $0x10] sm:$0xf]
  %v4084 = vld [vmem:[%s3 + $0x14] sm:$0xf]
  %v4085 = vld [vmem:[%s3 + $0x18] sm:$0xf]
  %v4086 = vld [vmem:[%s3 + $0x1c] sm:$0xf]
  %v4087 = vld [vmem:[%s3 + $0x20] sm:$0xf]
  %v4088 = vld [vmem:[%s4] sm:$0x1]
  %v4090 = vlaneseq
  %v4091 = vshrl.u32 %v4090, 7
  %v4092 = vsub.s32 0, %v4091
  %v4093 = vrot.slane %v4088, %v4092
  %v4104 = vunpack.c.l.b16 %v4079
  %v4105 = vunpack.c.l.b16 %v4080
  %v4106 = vunpack.c.l.b16 %v4081
  %v4107 = vunpack.c.l.b16 %v4082
  %v4108 = vunpack.c.l.b16 %v4083
  %v4109 = vunpack.c.l.b16 %v4084
  %v4110 = vunpack.c.l.b16 %v4085
  %v4111 = vunpack.c.l.b16 %v4086
  %v4112 = vunpack.c.l.b16 %v4087
  %v4113 = vpack.c.b16 %v4105, %v4104
  %v4114 = vpack.c.b16 %v4107, %v4106
  %v4115 = vpack.c.b16 %v4109, %v4108
  %v4116 = vpack.c.b16 %v4111, %v4110
  %v4117 = vpack.c.b16 %v4112, %v4112
  %vm4122 = vcmask 588800
  %v4124 = vsel %vm4122, %v4071, 0
  %v4127 = vsel %vm4122, %v4072, 0
  %v4130 = vsel %vm4122, %v4073, 0
  %v4133 = vsel %vm4122, %v4074, 0
  %v4136 = vsel %vm4122, %v4075, 0
  %v4139 = vsel %vm4122, %v4076, 0
  %v4142 = vsel %vm4122, %v4077, 0
  %v4145 = vsel %vm4122, %v4078, 0
  %vm4147 = vcmask 1043456
  %v4149 = vsel %vm4147, %v4117, 0
  %4151 = vmatprep.subr.bf16.mxu0 0
  %4152 = vmatpush1.bf16.msra.mxu0 %v4113
  %4153 = vmatprep.subr.bf16.mxu0 0
  %4154 = vmatpush1.bf16.msra.mxu0 %v4114
  %4155 = vmatprep.subr.bf16.mxu0 0
  %4156 = vmatpush1.bf16.msra.mxu0 %v4115
  %4157 = vmatprep.subr.bf16.mxu0 0
  %4158 = vmatpush1.bf16.msra.mxu0 %v4116
  %4159 = vmatprep.subr.bf16.mxu0 0
  %4160 = vmatpush1.bf16.msra.mxu0 %v4149
  %4161 = vmatprep.subr.bf16.mxu0 0
  %4162 = vmatpush1.bf16.msra.mxu0 0
  %4163 = vmatprep.subr.bf16.mxu0 0
  %4164 = vmatpush1.bf16.msra.mxu0 0
  %4165 = vmatprep.subr.bf16.mxu0 0
  %4166 = vmatpush1.bf16.msra.mxu0 0
  %4167 = vmatprep.subr.bf16.mxu0 0
  %4168 = vmatpush1.bf16.msra.mxu0 0
  %4169 = vmatprep.subr.bf16.mxu0 0
  %4170 = vmatpush1.bf16.msra.mxu0 0
  %4171 = vmatprep.subr.bf16.mxu0 0
  %4172 = vmatpush1.bf16.msra.mxu0 0
  %4173 = vmatprep.subr.bf16.mxu0 0
  %4174 = vmatpush1.bf16.msra.mxu0 0
  %4175 = vmatprep.subr.bf16.mxu0 0
  %4176 = vmatpush1.bf16.msra.mxu0 0
  %4177 = vmatprep.subr.bf16.mxu0 0
  %4178 = vmatpush1.bf16.msra.mxu0 0
  %4179 = vmatprep.subr.bf16.mxu0 0
  %4180 = vmatpush1.bf16.msra.mxu0 0
  %4181 = vmatprep.subr.bf16.mxu0 0
  %4182 = vmatpush1.bf16.msra.mxu0 0
  %4183 = vmatprep.mubr.bf16.mxu0 0
  %4184 = vmatmul.mubr.bf16.gmra.mrb[0].mxu0 %v4124
  %v4185 = vpop.f32.mrb[0].mxu0
  %v4186 = vadd.f32 %v4093, %v4185
  %v4187 = vpop.f32.mrb[0].mxu0
  %v4188 = vpop.f32.mrb[0].mxu0
  %v4189 = vadd.f32 %v4093, %v4188
  %v4190 = vpop.f32.mrb[0].mxu0
  %4191 = vmatprep.mubr.bf16.mxu0 0
  %4192 = vmatmul.mubr.bf16.gmra.mrb[0].mxu0 %v4127
  %v4193 = vpop.f32.mrb[0].mxu0
  %v4194 = vadd.f32 %v4093, %v4193
  %v4195 = vpop.f32.mrb[0].mxu0
  %v4196 = vpop.f32.mrb[0].mxu0
  %v4197 = vadd.f32 %v4093, %v4196
  %v4198 = vpop.f32.mrb[0].mxu0
  %4199 = vmatprep.mubr.bf16.mxu0 0
  %4200 = vmatmul.mubr.bf16.gmra.mrb[0].mxu0 %v4130
  %v4201 = vpop.f32.mrb[0].mxu0
  %v4202 = vadd.f32 %v4093, %v4201
  %v4203 = vpop.f32.mrb[0].mxu0
  %v4204 = vpop.f32.mrb[0].mxu0
  %v4205 = vadd.f32 %v4093, %v4204
  %v4206 = vpop.f32.mrb[0].mxu0
  %4207 = vmatprep.mubr.bf16.mxu0 0
  %4208 = vmatmul.mubr.bf16.gmra.mrb[0].mxu0 %v4133
  %v4209 = vpop.f32.mrb[0].mxu0
  %v4210 = vadd.f32 %v4093, %v4209
  %v4211 = vpop.f32.mrb[0].mxu0
  %v4212 = vpop.f32.mrb[0].mxu0
  %v4213 = vadd.f32 %v4093, %v4212
  %v4214 = vpop.f32.mrb[0].mxu0
  %4215 = vmatprep.mubr.bf16.mxu0 0
  %4216 = vmatmul.mubr.bf16.gmra.mrb[0].mxu0 %v4136
  %v4217 = vpop.f32.mrb[0].mxu0
  %v4218 = vadd.f32 %v4093, %v4217
  %v4219 = vpop.f32.mrb[0].mxu0
  %v4220 = vpop.f32.mrb[0].mxu0
  %v4221 = vadd.f32 %v4093, %v4220
  %v4222 = vpop.f32.mrb[0].mxu0
  %4223 = vmatprep.mubr.bf16.mxu0 0
  %4224 = vmatmul.mubr.bf16.gmra.mrb[0].mxu0 %v4139
  %v4225 = vpop.f32.mrb[0].mxu0
  %v4226 = vadd.f32 %v4093, %v4225
  %v4227 = vpop.f32.mrb[0].mxu0
  %v4228 = vpop.f32.mrb[0].mxu0
  %v4229 = vadd.f32 %v4093, %v4228
  %v4230 = vpop.f32.mrb[0].mxu0
  %4231 = vmatprep.mubr.bf16.mxu0 0
  %4232 = vmatmul.mubr.bf16.gmra.mrb[0].mxu0 %v4142
  %v4233 = vpop.f32.mrb[0].mxu0
  %v4234 = vadd.f32 %v4093, %v4233
  %v4235 = vpop.f32.mrb[0].mxu0
  %v4236 = vpop.f32.mrb[0].mxu0
  %v4237 = vadd.f32 %v4093, %v4236
  %v4238 = vpop.f32.mrb[0].mxu0
  %4239 = vmatprep.mubr.bf16.mxu0 0
  %4240 = vmatmul.mubr.bf16.gmra.mrb[0].mxu0 %v4145
  %v4241 = vpop.f32.mrb[0].mxu0
  %v4242 = vadd.f32 %v4093, %v4241
  %v4243 = vpop.f32.mrb[0].mxu0
  %v4244 = vpop.f32.mrb[0].mxu0
  %v4245 = vadd.f32 %v4093, %v4244
  %v4246 = vpop.f32.mrb[0].mxu0
  %4247 = vdwg.mxu0
  %v4248 = vmax.f32 %v4186, 0.0
  %v4249 = vmax.f32 %v4189, 0.0
  %v4250 = vmax.f32 %v4194, 0.0
  %v4251 = vmax.f32 %v4197, 0.0
  %v4252 = vmax.f32 %v4202, 0.0
  %v4253 = vmax.f32 %v4205, 0.0
  %v4254 = vmax.f32 %v4210, 0.0
  %v4255 = vmax.f32 %v4213, 0.0
  %v4256 = vmax.f32 %v4218, 0.0
  %v4257 = vmax.f32 %v4221, 0.0
  %v4258 = vmax.f32 %v4226, 0.0
  %v4259 = vmax.f32 %v4229, 0.0
  %v4260 = vmax.f32 %v4234, 0.0
  %v4261 = vmax.f32 %v4237, 0.0
  %v4262 = vmax.f32 %v4242, 0.0
  %v4263 = vmax.f32 %v4245, 0.0
  %vm4264 = vcmask 130048
  %v4265 = vsel %vm4264, %v4248, 0.0
  %v4266 = vsel %vm4264, %v4249, 0.0
  %v4267 = vadd.f32 %v4265, %v4266
  %v4268 = vsel %vm4264, %v4250, 0.0
  %v4269 = vadd.f32 %v4267, %v4268
  %v4270 = vsel %vm4264, %v4251, 0.0
  %v4271 = vadd.f32 %v4269, %v4270
  %v4272 = vsel %vm4264, %v4252, 0.0
  %v4273 = vadd.f32 %v4271, %v4272
  %v4274 = vsel %vm4264, %v4253, 0.0
  %v4275 = vadd.f32 %v4273, %v4274
  %v4276 = vsel %vm4264, %v4254, 0.0
  %v4277 = vadd.f32 %v4275, %v4276
  %v4278 = vsel %vm4264, %v4255, 0.0
  %v4279 = vadd.f32 %v4277, %v4278
  %v4280 = vrot.slane %v4279, 4
  %v4281 = vadd.f32 %v4279, %v4280
  %v4282 = vrot.slane %v4281, 2
  %v4283 = vadd.f32 %v4281, %v4282
  %v4284 = vrot.slane %v4283, 1
  %v4285 = vadd.f32 %v4283, %v4284
  %v4286 = vsel %vm4264, %v4256, 0.0
  %v4287 = vsel %vm4264, %v4257, 0.0
  %v4288 = vadd.f32 %v4286, %v4287
  %v4289 = vsel %vm4264, %v4258, 0.0
  %v4290 = vadd.f32 %v4288, %v4289
  %v4291 = vsel %vm4264, %v4259, 0.0
  %v4292 = vadd.f32 %v4290, %v4291
  %v4293 = vsel %vm4264, %v4260, 0.0
  %v4294 = vadd.f32 %v4292, %v4293
  %v4295 = vsel %vm4264, %v4261, 0.0
  %v4296 = vadd.f32 %v4294, %v4295
  %v4297 = vsel %vm4264, %v4262, 0.0
  %v4298 = vadd.f32 %v4296, %v4297
  %v4299 = vsel %vm4264, %v4263, 0.0
  %v4300 = vadd.f32 %v4298, %v4299
  %v4301 = vrot.slane %v4300, 4
  %v4302 = vadd.f32 %v4300, %v4301
  %v4303 = vrot.slane %v4302, 2
  %v4304 = vadd.f32 %v4302, %v4303
  %v4305 = vrot.slane %v4304, 1
  %v4306 = vadd.f32 %v4304, %v4305
  %v4307 = vmul.f32 %v4285, 0.015625
  %v4308 = vmul.f32 %v4306, 0.015625
  %v4309 = vld [vmem:[%s5] sm:$0xff]
  %v4310 = vld [vmem:[%s5 + $0x8] sm:$0xff]
  %v4311 = vld [vmem:[%s6] sm:$0x1]
  %v4313 = vlaneseq
  %v4314 = vshrl.u32 %v4313, 7
  %v4315 = vsub.s32 0, %v4314
  %v4316 = vrot.slane %v4311, %v4315
  %vm4320 = vcmask 1041409
  %v4321 = vsel %vm4320, %v4308, %v4307
  %v4322 = vsel %vm4264, %v4321, 0
  %4324 = vmatprep.subr.mxu0 0.0
  %4325 = vmatpush1.msra.mxu0 %v4309
  %4326 = vmatprep.subr.mxu0 0.0
  %4327 = vmatpush1.msra.mxu0 %v4310
  %4328 = vmatprep.subr.mxu0 0.0
  %4329 = vmatpush1.msra.mxu0 0.0
  %4330 = vmatprep.subr.mxu0 0.0
  %4331 = vmatpush1.msra.mxu0 0.0
  %4332 = vmatprep.subr.mxu0 0.0
  %4333 = vmatpush1.msra.mxu0 0.0
  %4334 = vmatprep.subr.mxu0 0.0
  %4335 = vmatpush1.msra.mxu0 0.0
  %4336 = vmatprep.subr.mxu0 0.0
  %4337 = vmatpush1.msra.mxu0 0.0
  %4338 = vmatprep.subr.mxu0 0.0
  %4339 = vmatpush1.msra.mxu0 0.0
  %4340 = vmatprep.subr.mxu0 0.0
  %4341 = vmatpush1.msra.mxu0 0.0
  %4342 = vmatprep.subr.mxu0 0.0
  %4343 = vmatpush1.msra.mxu0 0.0
  %4344 = vmatprep.subr.mxu0 0.0
  %4345 = vmatpush1.msra.mxu0 0.0
  %4346 = vmatprep.subr.mxu0 0.0
  %4347 = vmatpush1.msra.mxu0 0.0
  %4348 = vmatprep.subr.mxu0 0.0
  %4349 = vmatpush1.msra.mxu0 0.0
  %4350 = vmatprep.subr.mxu0 0.0
  %4351 = vmatpush1.msra.mxu0 0.0
  %4352 = vmatprep.subr.mxu0 0.0
  %4353 = vmatpush1.msra.mxu0 0.0
  %4354 = vmatprep.subr.mxu0 0.0
  %4355 = vmatpush1.msra.mxu0 0.0
  %4356 = vmatprep.subr.mxu0 0.0
  %4357 = vmatpush1.msra.mxu0 0.0
  %4358 = vmatprep.subr.mxu0 0.0
  %4359 = vmatpush1.msra.mxu0 0.0
  %4360 = vmatprep.subr.mxu0 0.0
  %4361 = vmatpush1.msra.mxu0 0.0
  %4362 = vmatprep.subr.mxu0 0.0
  %4363 = vmatpush1.msra.mxu0 0.0
  %4364 = vmatprep.subr.mxu0 0.0
  %4365 = vmatpush1.msra.mxu0 0.0
  %4366 = vmatprep.subr.mxu0 0.0
  %4367 = vmatpush1.msra.mxu0 0.0
  %4368 = vmatprep.subr.mxu0 0.0
  %4369 = vmatpush1.msra.mxu0 0.0
  %4370 = vmatprep.subr.mxu0 0.0
  %4371 = vmatpush1.msra.mxu0 0.0
  %4372 = vmatprep.subr.mxu0 0.0
  %4373 = vmatpush1.msra.mxu0 0.0
  %4374 = vmatprep.subr.mxu0 0.0
  %4375 = vmatpush1.msra.mxu0 0.0
  %4376 = vmatprep.subr.mxu0 0.0
  %4377 = vmatpush1.msra.mxu0 0.0
  %4378 = vmatprep.subr.mxu0 0.0
  %4379 = vmatpush1.msra.mxu0 0.0
  %4380 = vmatprep.subr.mxu0 0.0
  %4381 = vmatpush1.msra.mxu0 0.0
  %4382 = vmatprep.subr.mxu0 0.0
  %4383 = vmatpush1.msra.mxu0 0.0
  %4384 = vmatprep.subr.mxu0 0.0
  %4385 = vmatpush1.msra.mxu0 0.0
  %4386 = vmatprep.subr.mxu0 0.0
  %4387 = vmatpush1.msra.mxu0 0.0
  %4388 = vmatprep.mubr.f32.mxu0 0.0
  %4389 = vmatmul.mubr.f32.gmra.mrb[0].mxu0 %v4322
  %v4390 = vpop.f32.mrb[0].mxu0
  %v4391 = vadd.f32 %v4316, %v4390
  %v4392 = vpop.f32.mrb[0].mxu0
  %4393 = vdwg.mxu0
  %vm4394 = vcmask 74752
  %v4395 = vsel %vm4394, %v4391, -inf
  %4396 = vmax.xlane.f32.xlu0 %v4395
  %v4397 = vpop.xlane.xlu0 %4396
  %v4398 = vsub.f32 %v4391, %v4397
  %v4399 = vmul.f32 %v4398, 1.442695
  %v4400 = vpow.pop %v4399
  %v4401 = vsel %vm4394, %v4400, 0.0
  %4402 = vadd.xlane.f32.xlu0 %v4401
  %v4403 = vpop.xlane.xlu0 %4402
  %v4404 = vlog2.pop %v4403
  %v4405 = vmul.f32 %v4404, 0.6931472
  %v4406 = vadd.f32 %v4405, %v4397
  %v4407 = vld [vmem:[%s7] sm:$0x3]
  %v4408 = vmul.f32 %v4391, %v4407
  %v4409 = vsel %vm4394, %v4408, 0.0
  %4410 = vadd.xlane.f32.xlu0 %v4409
  %v4411 = vpop.xlane.xlu0 %4410
  %v4412 = vsub.f32 %v4406, %v4411
  %vm4413 = vcmp.eq.s32.totalorder %v2987, 10
  %v4414 = vsel %vm4413, %v4412, 0.0
  %v4415 = vadd.f32 %v4391, %v4414
  %4416 = vst [vmem:[%s8] sm:$0x3] %v4415
  // Predicated region
  $region34: #{conv_forward.1} parent=0 // pred_check
    _
  $region35: #{conv_forward.1} parent=0 // pred_check_branch
    %4418 = sbr.rel (0) target = $region37
  $region36: #{conv_forward.1} parent=0 // pred_region
    _
  $region37: #{conv_forward.1} parent=0 // pred_fallthru
    _
  // Predicated region
  $region38: #{conv_forward.1} parent=0 // pred_check
    _
  $region39: #{conv_forward.1} parent=0 // pred_check_branch
    %4420 = sbr.rel (0) target = $region41
  $region40: #{conv_forward.1} parent=0 // pred_region
    _
  $region41: #{conv_forward.1} parent=0 // pred_fallthru
    _

</llo_original>
